<compile_context>
chip_gen: v7x
topology: tpu7x:2x2x1
jax: 0.10.0
libtpu: 0.0.40
codegen_flags: <defaults>
</compile_context>

<pallas_src>
import jax
import jax.numpy as jnp
from jax.experimental import pallas as pl
from jax.experimental.pallas import tpu as pltpu

# ---- scaled-down model dims (real model: H=768, I=3072, 12 layers, 12 heads) ----
B = 2              # batch
T = 8              # text tokens
L = 8              # image regions
S = T + L          # joint sequence length
H = 128            # hidden size
NH = 4             # attention heads
HD = H // NH       # head dim
I = 256            # FFN intermediate
IMG_DIM = 2048     # image feature dim (UC2: img_dim=2048)
POS_DIM = 7        # spatial (box) feature dim
POS_PAD = 8        # padded spatial dim (avoid K=7 MXU op)
VOCAB = 512
MAX_POS = 32
NUM_LABELS = 2
NUM_LAYERS = 2
LOGIT_PAD = 128    # lane-dense padded logits width
EPS = 1e-12
SCALE = 1.0 / (HD ** 0.5)
NEG_INF = -1e9

assert H == LOGIT_PAD  # head_misc packs pool_b and padded cls_b in one [2, 128] tensor


def _ln(x, g, b):
    mu = jnp.mean(x, axis=-1, keepdims=True)
    var = jnp.mean((x - mu) ** 2, axis=-1, keepdims=True)
    return (x - mu) * jax.lax.rsqrt(var + EPS) * g + b


# -------------------------- Pallas kernel --------------------------

def encoder_kernel(txt_ref, valid_ref, feat_ref, posf_ref,
                   img_w_ref, pos_w_ref, img_misc_ref,
                   wqkv_ref, bqkv_ref, wo_ref, ln_ref,
                   wi_ref, bi_ref, wo2_ref,
                   pool_w_ref, cls_w_ref, head_misc_ref,
                   pooled_ref, logits_ref,
                   x_sc):
    layer = pl.program_id(1)

    # --- layer-0 prologue: build this batch's joint embedding directly in the resident scratch ---
    # img_misc rows: 0 img_ln_g, 1 img_ln_b, 2 pos_ln_g, 3 pos_ln_b,
    #                4 type_emb_img, 5 iemb_ln_g, 6 iemb_ln_b, 7 img_b, 8 pos_b
    @pl.when(layer == 0)
    def _():
        x_sc[0:T, :] = txt_ref[...]                                            # text rows (JAX glue)
        tf = jnp.dot(feat_ref[...], img_w_ref[...],
                     preferred_element_type=jnp.float32) + img_misc_ref[7:8, :]
        tf = _ln(tf, img_misc_ref[0:1, :], img_misc_ref[1:2, :])
        tp = jnp.dot(posf_ref[...], pos_w_ref[...],
                     preferred_element_type=jnp.float32) + img_misc_ref[8:9, :]
        tp = _ln(tp, img_misc_ref[2:3, :], img_misc_ref[3:4, :])
        emb = tf + tp + img_misc_ref[4:5, :]
        x_sc[T:S, :] = _ln(emb, img_misc_ref[5:6, :], img_misc_ref[6:7, :])

    x = x_sc[...]                                  # [S, H] f32 (resident across layers)
    x_bf = x.astype(jnp.bfloat16)

    # additive mask built in-kernel from the [1, S] key-valid row (0 where valid, -1e9 where padded)
    addmask = (1.0 - valid_ref[0]) * NEG_INF       # [1, S] f32, broadcast over query rows

    # --- fused QKV projection: one MXU pass with 3H full output lanes + one lane-dense bias ---
    qkv = jnp.dot(x_bf, wqkv_ref[0], preferred_element_type=jnp.float32) + bqkv_ref[0]   # [S, 3H]
    qkv_bf = qkv.astype(jnp.bfloat16)

    # per-head attention; NH<=4 so the fully-unrolled static loop == fori_loop(unroll=True).
    # TODO(synk): at production NH=12 use a non-unrolled lax.fori_loop to bound live ranges.
    ctx_parts = []
    for h in range(NH):
        qh = qkv_bf[:, h * HD:(h + 1) * HD]
        kh = qkv_bf[:, H + h * HD:H + (h + 1) * HD]
        vh = qkv_bf[:, 2 * H + h * HD:2 * H + (h + 1) * HD]
        sc = jnp.einsum('qd,kd->qk', qh, kh, preferred_element_type=jnp.float32) * SCALE  # [S, S]
        sc = sc + addmask
        sc = sc - jnp.max(sc, axis=-1, keepdims=True)
        pexp = jnp.exp(sc)
        denom = jnp.sum(pexp, axis=-1, keepdims=True)
        prob = pexp * pl.reciprocal(denom, approx=True)                                   # EUP slot
        ctx_parts.append(jnp.dot(prob.astype(jnp.bfloat16), vh,
                                 preferred_element_type=jnp.float32))                     # [S, HD]
    # single lane placement (XLU) -> one fused output projection with K=H (full MXU rows)
    ctx = jnp.concatenate(ctx_parts, axis=-1)                                             # [S, H]
    attn = jnp.dot(ctx.astype(jnp.bfloat16), wo_ref[0],
                   preferred_element_type=jnp.float32) + ln_ref[0, 0:1, :]                # + bo
    h1 = _ln(attn + x, ln_ref[0, 1:2, :], ln_ref[0, 2:3, :])

    # --- FFN ---
    ff = jnp.dot(h1.astype(jnp.bfloat16), wi_ref[0],
                 preferred_element_type=jnp.float32) + bi_ref[0]
    ff = jax.nn.gelu(ff, approximate=True)
    ff = jnp.dot(ff.astype(jnp.bfloat16), wo2_ref[0],
                 preferred_element_type=jnp.float32) + ln_ref[0, 3:4, :]                  # + bo2
    xn = _ln(ff + h1, ln_ref[0, 4:5, :], ln_ref[0, 5:6, :])
    x_sc[...] = xn

    # --- pooler + classifier head, only at the last layer ---
    @pl.when(layer == pl.num_programs(1) - 1)
    def _():
        cls = xn[0:1, :]                           # CLS row of this batch block
        pooled = jnp.tanh(jnp.dot(cls.astype(jnp.bfloat16), pool_w_ref[...],
                                  preferred_element_type=jnp.float32) + head_misc_ref[0:1, :])
        logits = jnp.dot(pooled.astype(jnp.bfloat16), cls_w_ref[...],
                         preferred_element_type=jnp.float32) + head_misc_ref[1:2, :]      # [1, 128]
        pooled_ref[0] = pooled
        logits_ref[0] = logits


# -------------------------- pallas_call wrapper --------------------------

def run_model(pk, te_flat, key_valid, img_feat_flat, img_pos_flat):
    pooled, logits_pad = pl.pallas_call(
        encoder_kernel,
        out_shape=(jax.ShapeDtypeStruct((B, 1, H), jnp.float32),
                   jax.ShapeDtypeStruct((B, 1, LOGIT_PAD), jnp.float32)),
        grid=(B, NUM_LAYERS),                      # batch parallel (megacore), layers sequential
        in_specs=[
            pl.BlockSpec((T, H), lambda b, l: (b, 0)),                # text embedding rows
            pl.BlockSpec((1, 1, S), lambda b, l: (b, 0, 0)),          # key-valid vector
            pl.BlockSpec((L, IMG_DIM), lambda b, l: (b, 0)),          # image features (bf16)
            pl.BlockSpec((L, POS_PAD), lambda b, l: (b, 0)),          # spatial features (padded to 8)
            pl.BlockSpec((IMG_DIM, H), lambda b, l: (0, 0)),          # img proj weight (bf16)
            pl.BlockSpec((POS_PAD, H), lambda b, l: (0, 0)),          # pos proj weight (padded)
            pl.BlockSpec((9, H), lambda b, l: (0, 0)),                # img-embed misc params
            pl.BlockSpec((1, H, 3 * H), lambda b, l: (l, 0, 0)),      # fused wqkv (bf16)
            pl.BlockSpec((1, 1, 3 * H), lambda b, l: (l, 0, 0)),      # fused bqkv (lane-dense)
            pl.BlockSpec((1, H, H), lambda b, l: (l, 0, 0)),          # wo (bf16)
            pl.BlockSpec((1, 6, H), lambda b, l: (l, 0, 0)),          # [bo, ln1_g, ln1_b, bo2, ln2_g, ln2_b]
            pl.BlockSpec((1, H, I), lambda b, l: (l, 0, 0)),          # wi (bf16)
            pl.BlockSpec((1, 1, I), lambda b, l: (l, 0, 0)),          # bi
            pl.BlockSpec((1, I, H), lambda b, l: (l, 0, 0)),          # wo2 (bf16)
            pl.BlockSpec((H, H), lambda b, l: (0, 0)),                # pool_w (bf16)
            pl.BlockSpec((H, LOGIT_PAD), lambda b, l: (0, 0)),        # cls_w padded (bf16)
            pl.BlockSpec((2, LOGIT_PAD), lambda b, l: (0, 0)),        # [pool_b; cls_b padded]
        ],
        out_specs=(pl.BlockSpec((1, 1, H), lambda b, l: (b, 0, 0)),
                   pl.BlockSpec((1, 1, LOGIT_PAD), lambda b, l: (b, 0, 0))),
        scratch_shapes=[pltpu.VMEM((S, H), jnp.float32)],             # per-batch resident activation
        # NOTE: at production dims (H=768, I=3072) set vmem_limit_bytes explicitly and/or tile wi/wo2
        # along I so double-buffered layer weights fit v7x's 64 MiB / v5e's 16 MiB default scoped VMEM.
        compiler_params=pltpu.CompilerParams(
            dimension_semantics=("parallel", "arbitrary")),
    )(te_flat, key_valid, img_feat_flat, img_pos_flat,
      pk['img_w'], pk['pos_w_pad'], pk['img_misc'],
      pk['wqkv'], pk['bqkv'], pk['wo'], pk['ln'],
      pk['wi'], pk['bi'], pk['wo2'],
      pk['pool_w'], pk['cls_w_pad'], pk['head_misc'])
    return pooled.reshape(B, H), logits_pad.reshape(B, LOGIT_PAD)[:, :NUM_LABELS]


# -------------------------- parameter packing --------------------------

def pack_params(p):
    def stack(name):
        return jnp.stack([lp[name] for lp in p['layers']], axis=0)

    wqkv = jnp.concatenate([stack('wq'), stack('wk'), stack('wv')], axis=-1)      # [nl, H, 3H]
    bqkv = jnp.concatenate([stack('bq'), stack('bk'), stack('bv')], axis=-1)      # [nl, 1, 3H]
    ln = jnp.concatenate([stack('bo'), stack('ln1_g'), stack('ln1_b'),
                          stack('bo2'), stack('ln2_g'), stack('ln2_b')], axis=1)  # [nl, 6, H]

    cls_w_pad = jnp.zeros((H, LOGIT_PAD), jnp.float32).at[:, :NUM_LABELS].set(p['cls_w'])
    cls_b_pad = jnp.zeros((1, LOGIT_PAD), jnp.float32).at[:, :NUM_LABELS].set(p['cls_b'])
    head_misc = jnp.concatenate([p['pool_b'], cls_b_pad], axis=0)                 # [2, 128]

    img_misc = jnp.concatenate([p['img_ln_g'], p['img_ln_b'], p['pos_ln_g'], p['pos_ln_b'],
                                p['type_emb_img'], p['iemb_ln_g'], p['iemb_ln_b'],
                                p['img_b'], p['posb']], axis=0)                   # [9, H]

    pos_w_pad = jnp.zeros((POS_PAD, H), jnp.float32).at[:POS_DIM, :].set(p['posw'])

    return {
        # text-embedding glue (plain JAX gathers)
        'word_emb': p['word_emb'], 'pos_emb': p['pos_emb'], 'type_emb_txt': p['type_emb_txt'],
        'emb_ln_g': p['emb_ln_g'], 'emb_ln_b': p['emb_ln_b'],
        # image embedding (layer-0 prologue)
        'img_w': p['img_w'].astype(jnp.bfloat16), 'pos_w_pad': pos_w_pad, 'img_misc': img_misc,
        # encoder + head
        'wqkv': wqkv.astype(jnp.bfloat16), 'bqkv': bqkv,
        'wo': stack('wo').astype(jnp.bfloat16), 'ln': ln,
        'wi': stack('wi').astype(jnp.bfloat16), 'bi': stack('bi'),
        'wo2': stack('wo2').astype(jnp.bfloat16),
        'pool_w': p['pool_w'].astype(jnp.bfloat16),
        'cls_w_pad': cls_w_pad.astype(jnp.bfloat16), 'head_misc': head_misc,
    }


# -------------------------- forward (kernel path) --------------------------

def forward(pk, features):
    input_ids = features['input_ids']
    position_ids = features['position_ids']
    img_feat = features['img_feat']
    img_pos_feat = features['img_pos_feat']
    attn_mask = features['attn_masks']

    # text embedding (gather-based glue, stays in JAX)
    te = pk['word_emb'][input_ids] + pk['pos_emb'][position_ids] + pk['type_emb_txt']
    te = _ln(te, pk['emb_ln_g'], pk['emb_ln_b']).reshape(B * T, H)

    feat = img_feat.reshape(B * L, IMG_DIM).astype(jnp.bfloat16)
    posf = jnp.zeros((B * L, POS_PAD), jnp.float32).at[:, :POS_DIM].set(
        img_pos_feat.reshape(B * L, POS_DIM))

    key_valid = attn_mask.astype(jnp.float32).reshape(B, 1, S)   # O(B*S) instead of dense [BS,BS]

    cls_tokens, logits = run_model(pk, te, key_valid, feat, posf)

    out = dict(features)
    out.update({'logits': logits, 'cls_token_embeddings': cls_tokens})
    return out


# -------------------------- pure-JAX reference --------------------------

def ref_forward(p, features):
    input_ids = features['input_ids']
    position_ids = features['position_ids']
    img_feat = features['img_feat']
    img_pos_feat = features['img_pos_feat']
    attn_mask = features['attn_masks']

    te = p['word_emb'][input_ids] + p['pos_emb'][position_ids] + p['type_emb_txt']
    te = _ln(te, p['emb_ln_g'], p['emb_ln_b'])

    tf = _ln(img_feat @ p['img_w'] + p['img_b'], p['img_ln_g'], p['img_ln_b'])
    tp = _ln(img_pos_feat @ p['posw'] + p['posb'], p['pos_ln_g'], p['pos_ln_b'])
    ie = _ln(tf + tp + p['type_emb_img'], p['iemb_ln_g'], p['iemb_ln_b'])

    x = jnp.concatenate([te, ie], axis=1)
    m = (1.0 - attn_mask.astype(jnp.float32))[:, None, :] * NEG_INF       # [B,1,S]

    for lp in p['layers']:
        q = (x @ lp['wq'] + lp['bq']).reshape(B, S, NH, HD)
        k = (x @ lp['wk'] + lp['bk']).reshape(B, S, NH, HD)
        v = (x @ lp['wv'] + lp['bv']).reshape(B, S, NH, HD)
        sc = jnp.einsum('bqhd,bkhd->bhqk', q, k) * SCALE
        sc = sc + m[:, None, :, :]
        pmat = jax.nn.softmax(sc, axis=-1)
        ctx = jnp.einsum('bhqk,bkhd->bqhd', pmat, v).reshape(B, S, H)
        attn = ctx @ lp['wo'] + lp['bo']
        h1 = _ln(attn + x, lp['ln1_g'], lp['ln1_b'])
        ff = jax.nn.gelu(h1 @ lp['wi'] + lp['bi'], approximate=True)
        ff = ff @ lp['wo2'] + lp['bo2']
        x = _ln(ff + h1, lp['ln2_g'], lp['ln2_b'])

    cls = x[:, 0, :]
    pooled = jnp.tanh(cls @ p['pool_w'] + p['pool_b'])
    logits = pooled @ p['cls_w'] + p['cls_b']
    return pooled, logits


# -------------------------- deterministic params --------------------------

def init_params(key):
    ks = iter(jax.random.split(key, 64))

    def nrm(shape):
        return 0.02 * jax.random.normal(next(ks), shape, jnp.float32)

    def layer_params():
        return {
            'wq': nrm((H, H)), 'bq': nrm((1, H)),
            'wk': nrm((H, H)), 'bk': nrm((1, H)),
            'wv': nrm((H, H)), 'bv': nrm((1, H)),
            'wo': nrm((H, H)), 'bo': nrm((1, H)),
            'ln1_g': jnp.ones((1, H), jnp.float32), 'ln1_b': jnp.zeros((1, H), jnp.float32),
            'wi': nrm((H, I)), 'bi': nrm((1, I)),
            'wo2': nrm((I, H)), 'bo2': nrm((1, H)),
            'ln2_g': jnp.ones((1, H), jnp.float32), 'ln2_b': jnp.zeros((1, H), jnp.float32),
        }

    p = {
        'word_emb': nrm((VOCAB, H)),
        'pos_emb': nrm((MAX_POS, H)),
        'type_emb_txt': nrm((1, H)),
        'emb_ln_g': jnp.ones((1, H), jnp.float32), 'emb_ln_b': jnp.zeros((1, H), jnp.float32),
        'img_w': nrm((IMG_DIM, H)), 'img_b': nrm((1, H)),
        'img_ln_g': jnp.ones((1, H), jnp.float32), 'img_ln_b': jnp.zeros((1, H), jnp.float32),
        'posw': nrm((POS_DIM, H)), 'posb': nrm((1, H)),
        'pos_ln_g': jnp.ones((1, H), jnp.float32), 'pos_ln_b': jnp.zeros((1, H), jnp.float32),
        'type_emb_img': nrm((1, H)),
        'iemb_ln_g': jnp.ones((1, H), jnp.float32), 'iemb_ln_b': jnp.zeros((1, H), jnp.float32),
        'pool_w': nrm((H, H)), 'pool_b': nrm((1, H)),
        'cls_w': nrm((H, NUM_LABELS)), 'cls_b': nrm((1, NUM_LABELS)),
        'layers': [layer_params() for _ in range(NUM_LAYERS)],
    }
    return p


if __name__ == "__main__":
    key = jax.random.PRNGKey(0)
    kp, kids, kfeat, kpos = jax.random.split(key, 4)
    params = init_params(kp)
    packed = pack_params(params)

    input_ids = jax.random.randint(kids, (B, T), 0, VOCAB)
    position_ids = jnp.broadcast_to(jnp.arange(T, dtype=jnp.int32), (B, T))
    img_feat = jax.random.normal(kfeat, (B, L, IMG_DIM), jnp.float32)
    img_pos_feat = jax.random.uniform(kpos, (B, L, POS_DIM), jnp.float32)
    attn_mask = jnp.ones((B, S), jnp.int32).at[1, -2:].set(0)  # mask 2 pad regions in batch 1

    features = {
        'input_ids': input_ids,
        'position_ids': position_ids,
        'img_feat': img_feat,
        'img_pos_feat': img_pos_feat,
        'attn_masks': attn_mask,
    }

    out = forward(packed, features)
    logits = jax.block_until_ready(out['logits'])
    cls_tok = jax.block_until_ready(out['cls_token_embeddings'])

    ref_pooled, ref_logits = ref_forward(params, features)

    assert logits.shape == (B, NUM_LABELS)
    assert cls_tok.shape == (B, H)
    # kernel path uses bf16 matmul inputs (f32 accumulation) -> slightly looser tolerance vs f32 ref
    assert bool(jnp.allclose(logits, ref_logits, atol=2e-2, rtol=2e-2))
    assert bool(jnp.allclose(cls_tok, ref_pooled, atol=2e-2, rtol=2e-2))

    print("KERNEL_OK")
</pallas_src>

<mosaic_0001>
module attributes {stable_mosaic.version = 11 : i64} {
  func.func @encoder_kernel(%arg0: i32, %arg1: i32, %arg2: memref<8x128xf32, #tpu.memory_space<vmem>>, %arg3: memref<1x1x16xf32, #tpu.memory_space<vmem>>, %arg4: memref<8x2048xbf16, #tpu.memory_space<vmem>>, %arg5: memref<8x8xf32, #tpu.memory_space<vmem>>, %arg6: memref<2048x128xbf16, #tpu.memory_space<vmem>>, %arg7: memref<8x128xf32, #tpu.memory_space<vmem>>, %arg8: memref<9x128xf32, #tpu.memory_space<vmem>>, %arg9: memref<1x128x384xbf16, #tpu.memory_space<vmem>>, %arg10: memref<1x1x384xf32, #tpu.memory_space<vmem>>, %arg11: memref<1x128x128xbf16, #tpu.memory_space<vmem>>, %arg12: memref<1x6x128xf32, #tpu.memory_space<vmem>>, %arg13: memref<1x128x256xbf16, #tpu.memory_space<vmem>>, %arg14: memref<1x1x256xf32, #tpu.memory_space<vmem>>, %arg15: memref<1x256x128xbf16, #tpu.memory_space<vmem>>, %arg16: memref<128x128xbf16, #tpu.memory_space<vmem>>, %arg17: memref<128x128xbf16, #tpu.memory_space<vmem>>, %arg18: memref<2x128xf32, #tpu.memory_space<vmem>>, %arg19: memref<1x1x128xf32, #tpu.memory_space<vmem>>, %arg20: memref<1x1x128xf32, #tpu.memory_space<vmem>>, %arg21: memref<16x128xf32, #tpu.memory_space<vmem>>) attributes {dimension_semantics = [#tpu.dimension_semantics<parallel>, #tpu.dimension_semantics<arbitrary>], iteration_bounds = array<i64: 2, 2>, scalar_prefetch = 0 : i64, scratch_operands = 1 : i64, tpu.core_type = #tpu.core_type<tc>, window_params = [{transform_indices = @transform_0, window_bounds = array<i64: 8, 128>}, {transform_indices = @transform_1, window_bounds = array<i64: 1, 1, 16>}, {transform_indices = @transform_2, window_bounds = array<i64: 8, 2048>}, {transform_indices = @transform_3, window_bounds = array<i64: 8, 8>}, {pipeline_mode = #tpu.pipeline_mode<synchronous>, transform_indices = @transform_4, window_bounds = array<i64: 2048, 128>}, {pipeline_mode = #tpu.pipeline_mode<synchronous>, transform_indices = @transform_5, window_bounds = array<i64: 8, 128>}, {pipeline_mode = #tpu.pipeline_mode<synchronous>, transform_indices = @transform_6, window_bounds = array<i64: 9, 128>}, {transform_indices = @transform_7, window_bounds = array<i64: 1, 128, 384>}, {transform_indices = @transform_8, window_bounds = array<i64: 1, 1, 384>}, {transform_indices = @transform_9, window_bounds = array<i64: 1, 128, 128>}, {transform_indices = @transform_10, window_bounds = array<i64: 1, 6, 128>}, {transform_indices = @transform_11, window_bounds = array<i64: 1, 128, 256>}, {transform_indices = @transform_12, window_bounds = array<i64: 1, 1, 256>}, {transform_indices = @transform_13, window_bounds = array<i64: 1, 256, 128>}, {pipeline_mode = #tpu.pipeline_mode<synchronous>, transform_indices = @transform_14, window_bounds = array<i64: 128, 128>}, {pipeline_mode = #tpu.pipeline_mode<synchronous>, transform_indices = @transform_15, window_bounds = array<i64: 128, 128>}, {pipeline_mode = #tpu.pipeline_mode<synchronous>, transform_indices = @transform_16, window_bounds = array<i64: 2, 128>}, {transform_indices = @transform_17, window_bounds = array<i64: 1, 1, 128>}, {transform_indices = @transform_18, window_bounds = array<i64: 1, 1, 128>}]} {
    %c0_i32 = arith.constant 0 : i32
    %0 = arith.cmpi eq, %arg1, %c0_i32 : i32
    %1 = arith.extui %0 : i1 to i32
    %c0_i32_0 = arith.constant 0 : i32
    %2 = arith.cmpi ne, %1, %c0_i32_0 : i32
    scf.if %2 {
      %c0_78 = arith.constant 0 : index
      %c0_79 = arith.constant 0 : index
      %195 = vector.load %arg2[%c0_78, %c0_79] : memref<8x128xf32, #tpu.memory_space<vmem>>, vector<8x128xf32>
      %c0_80 = arith.constant 0 : index
      %c0_81 = arith.constant 0 : index
      %196 = vector.load %arg21[%c0_80, %c0_81] : memref<16x128xf32, #tpu.memory_space<vmem>>, vector<8x128xf32>
      tpu.vector_store %arg21[%c0_80, %c0_81], %195 {strides = array<i32>} : memref<16x128xf32, #tpu.memory_space<vmem>>, vector<8x128xf32>,
      %c0_82 = arith.constant 0 : index
      %c0_83 = arith.constant 0 : index
      %197 = vector.load %arg4[%c0_82, %c0_83] : memref<8x2048xbf16, #tpu.memory_space<vmem>>, vector<8x2048xbf16>
      %c0_84 = arith.constant 0 : index
      %c0_85 = arith.constant 0 : index
      %198 = vector.load %arg6[%c0_84, %c0_85] : memref<2048x128xbf16, #tpu.memory_space<vmem>>, vector<2048x128xbf16>
      %cst_86 = arith.constant dense<0.000000e+00> : vector<8x128xf32>
      %199 = tpu.matmul %197, %198, %cst_86 {dimension_numbers = #tpu.dot_dimension_numbers<[1], [0], [0], [1], [0, 0, 1, 1], [], []>} : vector<8x2048xbf16>, vector<2048x128xbf16>, vector<8x128xf32> -> vector<8x128xf32>
      %c7 = arith.constant 7 : index
      %c0_87 = arith.constant 0 : index
      %200 = vector.load %arg8[%c7, %c0_87] : memref<9x128xf32, #tpu.memory_space<vmem>>, vector<1x128xf32>
      %201 = vector.broadcast %200 : vector<1x128xf32> to vector<8x128xf32>
      %202 = arith.addf %199, %201 : vector<8x128xf32>
      %c0_88 = arith.constant 0 : index
      %c0_89 = arith.constant 0 : index
      %203 = vector.load %arg8[%c0_88, %c0_89] : memref<9x128xf32, #tpu.memory_space<vmem>>, vector<1x128xf32>
      %c1_90 = arith.constant 1 : index
      %c0_91 = arith.constant 0 : index
      %204 = vector.load %arg8[%c1_90, %c0_91] : memref<9x128xf32, #tpu.memory_space<vmem>>, vector<1x128xf32>
      %cst_92 = arith.constant dense<0.000000e+00> : vector<8xf32>
      %205 = vector.multi_reduction <add>, %202, %cst_92 [1] : vector<8x128xf32> to vector<8xf32>
      %206 = vector.shape_cast %205 : vector<8xf32> to vector<8x1xf32>
      %cst_93 = arith.constant 1.280000e+02 : f32
      %207 = vector.broadcast %cst_93 : f32 to vector<8x1xf32>
      %208 = arith.divf %206, %207 : vector<8x1xf32>
      %209 = vector.broadcast %208 : vector<8x1xf32> to vector<8x128xf32>
      %210 = arith.subf %202, %209 : vector<8x128xf32>
      %211 = arith.mulf %210, %210 : vector<8x128xf32>
      %cst_94 = arith.constant dense<0.000000e+00> : vector<8xf32>
      %212 = vector.multi_reduction <add>, %211, %cst_94 [1] : vector<8x128xf32> to vector<8xf32>
      %213 = vector.shape_cast %212 : vector<8xf32> to vector<8x1xf32>
      %cst_95 = arith.constant 1.280000e+02 : f32
      %214 = vector.broadcast %cst_95 : f32 to vector<8x1xf32>
      %215 = arith.divf %213, %214 : vector<8x1xf32>
      %216 = vector.broadcast %208 : vector<8x1xf32> to vector<8x128xf32>
      %217 = arith.subf %202, %216 : vector<8x128xf32>
      %cst_96 = arith.constant 9.99999996E-13 : f32
      %218 = vector.broadcast %cst_96 : f32 to vector<8x1xf32>
      %219 = arith.addf %215, %218 : vector<8x1xf32>
      %220 = math.rsqrt %219 : vector<8x1xf32>
      %221 = vector.broadcast %220 : vector<8x1xf32> to vector<8x128xf32>
      %222 = arith.mulf %217, %221 : vector<8x128xf32>
      %223 = vector.broadcast %203 : vector<1x128xf32> to vector<8x128xf32>
      %224 = arith.mulf %222, %223 : vector<8x128xf32>
      %225 = vector.broadcast %204 : vector<1x128xf32> to vector<8x128xf32>
      %226 = arith.addf %224, %225 : vector<8x128xf32>
      %c0_97 = arith.constant 0 : index
      %c0_98 = arith.constant 0 : index
      %227 = vector.load %arg5[%c0_97, %c0_98] : memref<8x8xf32, #tpu.memory_space<vmem>>, vector<8x8xf32>
      %c0_99 = arith.constant 0 : index
      %c0_100 = arith.constant 0 : index
      %228 = vector.load %arg7[%c0_99, %c0_100] : memref<8x128xf32, #tpu.memory_space<vmem>>, vector<8x128xf32>
      %cst_101 = arith.constant dense<0.000000e+00> : vector<8x128xf32>
      %229 = tpu.matmul %227, %228, %cst_101 {dimension_numbers = #tpu.dot_dimension_numbers<[1], [0], [0], [1], [0, 0, 1, 1], [], []>} : vector<8x8xf32>, vector<8x128xf32>, vector<8x128xf32> -> vector<8x128xf32>
      %c8 = arith.constant 8 : index
      %c0_102 = arith.constant 0 : index
      %230 = vector.load %arg8[%c8, %c0_102] : memref<9x128xf32, #tpu.memory_space<vmem>>, vector<1x128xf32>
      %231 = vector.broadcast %230 : vector<1x128xf32> to vector<8x128xf32>
      %232 = arith.addf %229, %231 : vector<8x128xf32>
      %c2_103 = arith.constant 2 : index
      %c0_104 = arith.constant 0 : index
      %233 = vector.load %arg8[%c2_103, %c0_104] : memref<9x128xf32, #tpu.memory_space<vmem>>, vector<1x128xf32>
      %c3_105 = arith.constant 3 : index
      %c0_106 = arith.constant 0 : index
      %234 = vector.load %arg8[%c3_105, %c0_106] : memref<9x128xf32, #tpu.memory_space<vmem>>, vector<1x128xf32>
      %cst_107 = arith.constant dense<0.000000e+00> : vector<8xf32>
      %235 = vector.multi_reduction <add>, %232, %cst_107 [1] : vector<8x128xf32> to vector<8xf32>
      %236 = vector.shape_cast %235 : vector<8xf32> to vector<8x1xf32>
      %cst_108 = arith.constant 1.280000e+02 : f32
      %237 = vector.broadcast %cst_108 : f32 to vector<8x1xf32>
      %238 = arith.divf %236, %237 : vector<8x1xf32>
      %239 = vector.broadcast %238 : vector<8x1xf32> to vector<8x128xf32>
      %240 = arith.subf %232, %239 : vector<8x128xf32>
      %241 = arith.mulf %240, %240 : vector<8x128xf32>
      %cst_109 = arith.constant dense<0.000000e+00> : vector<8xf32>
      %242 = vector.multi_reduction <add>, %241, %cst_109 [1] : vector<8x128xf32> to vector<8xf32>
      %243 = vector.shape_cast %242 : vector<8xf32> to vector<8x1xf32>
      %cst_110 = arith.constant 1.280000e+02 : f32
      %244 = vector.broadcast %cst_110 : f32 to vector<8x1xf32>
      %245 = arith.divf %243, %244 : vector<8x1xf32>
      %246 = vector.broadcast %238 : vector<8x1xf32> to vector<8x128xf32>
      %247 = arith.subf %232, %246 : vector<8x128xf32>
      %cst_111 = arith.constant 9.99999996E-13 : f32
      %248 = vector.broadcast %cst_111 : f32 to vector<8x1xf32>
      %249 = arith.addf %245, %248 : vector<8x1xf32>
      %250 = math.rsqrt %249 : vector<8x1xf32>
      %251 = vector.broadcast %250 : vector<8x1xf32> to vector<8x128xf32>
      %252 = arith.mulf %247, %251 : vector<8x128xf32>
      %253 = vector.broadcast %233 : vector<1x128xf32> to vector<8x128xf32>
      %254 = arith.mulf %252, %253 : vector<8x128xf32>
      %255 = vector.broadcast %234 : vector<1x128xf32> to vector<8x128xf32>
      %256 = arith.addf %254, %255 : vector<8x128xf32>
      %257 = arith.addf %226, %256 : vector<8x128xf32>
      %c4_112 = arith.constant 4 : index
      %c0_113 = arith.constant 0 : index
      %258 = vector.load %arg8[%c4_112, %c0_113] : memref<9x128xf32, #tpu.memory_space<vmem>>, vector<1x128xf32>
      %259 = vector.broadcast %258 : vector<1x128xf32> to vector<8x128xf32>
      %260 = arith.addf %257, %259 : vector<8x128xf32>
      %c5_114 = arith.constant 5 : index
      %c0_115 = arith.constant 0 : index
      %261 = vector.load %arg8[%c5_114, %c0_115] : memref<9x128xf32, #tpu.memory_space<vmem>>, vector<1x128xf32>
      %c6 = arith.constant 6 : index
      %c0_116 = arith.constant 0 : index
      %262 = vector.load %arg8[%c6, %c0_116] : memref<9x128xf32, #tpu.memory_space<vmem>>, vector<1x128xf32>
      %cst_117 = arith.constant dense<0.000000e+00> : vector<8xf32>
      %263 = vector.multi_reduction <add>, %260, %cst_117 [1] : vector<8x128xf32> to vector<8xf32>
      %264 = vector.shape_cast %263 : vector<8xf32> to vector<8x1xf32>
      %cst_118 = arith.constant 1.280000e+02 : f32
      %265 = vector.broadcast %cst_118 : f32 to vector<8x1xf32>
      %266 = arith.divf %264, %265 : vector<8x1xf32>
      %267 = vector.broadcast %266 : vector<8x1xf32> to vector<8x128xf32>
      %268 = arith.subf %260, %267 : vector<8x128xf32>
      %269 = arith.mulf %268, %268 : vector<8x128xf32>
      %cst_119 = arith.constant dense<0.000000e+00> : vector<8xf32>
      %270 = vector.multi_reduction <add>, %269, %cst_119 [1] : vector<8x128xf32> to vector<8xf32>
      %271 = vector.shape_cast %270 : vector<8xf32> to vector<8x1xf32>
      %cst_120 = arith.constant 1.280000e+02 : f32
      %272 = vector.broadcast %cst_120 : f32 to vector<8x1xf32>
      %273 = arith.divf %271, %272 : vector<8x1xf32>
      %274 = vector.broadcast %266 : vector<8x1xf32> to vector<8x128xf32>
      %275 = arith.subf %260, %274 : vector<8x128xf32>
      %cst_121 = arith.constant 9.99999996E-13 : f32
      %276 = vector.broadcast %cst_121 : f32 to vector<8x1xf32>
      %277 = arith.addf %273, %276 : vector<8x1xf32>
      %278 = math.rsqrt %277 : vector<8x1xf32>
      %279 = vector.broadcast %278 : vector<8x1xf32> to vector<8x128xf32>
      %280 = arith.mulf %275, %279 : vector<8x128xf32>
      %281 = vector.broadcast %261 : vector<1x128xf32> to vector<8x128xf32>
      %282 = arith.mulf %280, %281 : vector<8x128xf32>
      %283 = vector.broadcast %262 : vector<1x128xf32> to vector<8x128xf32>
      %284 = arith.addf %282, %283 : vector<8x128xf32>
      %c8_122 = arith.constant 8 : index
      %c0_123 = arith.constant 0 : index
      %285 = vector.load %arg21[%c8_122, %c0_123] : memref<16x128xf32, #tpu.memory_space<vmem>>, vector<8x128xf32>
      tpu.vector_store %arg21[%c8_122, %c0_123], %284 {strides = array<i32>} : memref<16x128xf32, #tpu.memory_space<vmem>>, vector<8x128xf32>,
    } else {
    }
    %c0 = arith.constant 0 : index
    %c0_1 = arith.constant 0 : index
    %3 = vector.load %arg21[%c0, %c0_1] : memref<16x128xf32, #tpu.memory_space<vmem>>, vector<16x128xf32>
    %4 = arith.truncf %3 : vector<16x128xf32> to vector<16x128xbf16>
    %c0_2 = arith.constant 0 : index
    %c0_3 = arith.constant 0 : index
    %c0_4 = arith.constant 0 : index
    %5 = vector.load %arg3[%c0_2, %c0_3, %c0_4] : memref<1x1x16xf32, #tpu.memory_space<vmem>>, vector<1x1x16xf32>
    %6 = vector.shape_cast %5 : vector<1x1x16xf32> to vector<1x16xf32>
    %cst = arith.constant 1.000000e+00 : f32
    %7 = vector.broadcast %cst : f32 to vector<1x16xf32>
    %8 = arith.subf %7, %6 : vector<1x16xf32>
    %cst_5 = arith.constant -1.000000e+09 : f32
    %9 = vector.broadcast %cst_5 : f32 to vector<1x16xf32>
    %10 = arith.mulf %8, %9 : vector<1x16xf32>
    %c0_6 = arith.constant 0 : index
    %c0_7 = arith.constant 0 : index
    %c0_8 = arith.constant 0 : index
    %11 = vector.load %arg9[%c0_6, %c0_7, %c0_8] : memref<1x128x384xbf16, #tpu.memory_space<vmem>>, vector<1x128x384xbf16>
    %12 = vector.shape_cast %11 : vector<1x128x384xbf16> to vector<128x384xbf16>
    %cst_9 = arith.constant dense<0.000000e+00> : vector<16x384xf32>
    %13 = tpu.matmul %4, %12, %cst_9 {dimension_numbers = #tpu.dot_dimension_numbers<[1], [0], [0], [1], [0, 0, 1, 1], [], []>} : vector<16x128xbf16>, vector<128x384xbf16>, vector<16x384xf32> -> vector<16x384xf32>
    %c0_10 = arith.constant 0 : index
    %c0_11 = arith.constant 0 : index
    %c0_12 = arith.constant 0 : index
    %14 = vector.load %arg10[%c0_10, %c0_11, %c0_12] : memref<1x1x384xf32, #tpu.memory_space<vmem>>, vector<1x1x384xf32>
    %15 = vector.shape_cast %14 : vector<1x1x384xf32> to vector<1x384xf32>
    %16 = vector.broadcast %15 : vector<1x384xf32> to vector<16x384xf32>
    %17 = arith.addf %13, %16 : vector<16x384xf32>
    %18 = arith.truncf %17 : vector<16x384xf32> to vector<16x384xbf16>
    %19 = vector.extract_strided_slice %18 {offsets = [0, 0], sizes = [16, 32], strides = [1, 1]} : vector<16x384xbf16> to vector<16x32xbf16>
    %20 = vector.extract_strided_slice %18 {offsets = [0, 128], sizes = [16, 32], strides = [1, 1]} : vector<16x384xbf16> to vector<16x32xbf16>
    %21 = vector.extract_strided_slice %18 {offsets = [0, 256], sizes = [16, 32], strides = [1, 1]} : vector<16x384xbf16> to vector<16x32xbf16>
    "tpu.trace_start"() <{level = 10 : i32, message = "qd,kd->qk"}> : () -> ()
    %cst_13 = arith.constant dense<0.000000e+00> : vector<16x16xf32>
    %22 = tpu.matmul %19, %20, %cst_13 {dimension_numbers = #tpu.dot_dimension_numbers<[1], [1], [0], [0], [0, 0, 1, 0], [], []>} : vector<16x32xbf16>, vector<16x32xbf16>, vector<16x16xf32> -> vector<16x16xf32>
    "tpu.trace_stop"() : () -> ()
    %cst_14 = arith.constant 0.176776692 : f32
    %23 = vector.broadcast %cst_14 : f32 to vector<16x16xf32>
    %24 = arith.mulf %22, %23 : vector<16x16xf32>
    %25 = vector.broadcast %10 : vector<1x16xf32> to vector<16x16xf32>
    %26 = arith.addf %24, %25 : vector<16x16xf32>
    %cst_15 = arith.constant dense<0xFF800000> : vector<16xf32>
    %27 = vector.multi_reduction <maximumf>, %26, %cst_15 [1] : vector<16x16xf32> to vector<16xf32>
    %28 = vector.shape_cast %27 : vector<16xf32> to vector<16x1xf32>
    %29 = vector.broadcast %28 : vector<16x1xf32> to vector<16x16xf32>
    %30 = arith.subf %26, %29 : vector<16x16xf32>
    %31 = math.exp %30 : vector<16x16xf32>
    %cst_16 = arith.constant dense<0.000000e+00> : vector<16xf32>
    %32 = vector.multi_reduction <add>, %31, %cst_16 [1] : vector<16x16xf32> to vector<16xf32>
    %33 = vector.shape_cast %32 : vector<16xf32> to vector<16x1xf32>
    %34 = tpu.reciprocal %33 {approx = true} : vector<16x1xf32> -> vector<16x1xf32>
    %35 = vector.broadcast %34 : vector<16x1xf32> to vector<16x16xf32>
    %36 = arith.mulf %31, %35 : vector<16x16xf32>
    %37 = arith.truncf %36 : vector<16x16xf32> to vector<16x16xbf16>
    %cst_17 = arith.constant dense<0.000000e+00> : vector<16x32xf32>
    %38 = tpu.matmul %37, %21, %cst_17 {dimension_numbers = #tpu.dot_dimension_numbers<[1], [0], [0], [1], [0, 0, 1, 1], [], []>} : vector<16x16xbf16>, vector<16x32xbf16>, vector<16x32xf32> -> vector<16x32xf32>
    %39 = vector.extract_strided_slice %18 {offsets = [0, 32], sizes = [16, 32], strides = [1, 1]} : vector<16x384xbf16> to vector<16x32xbf16>
    %40 = vector.extract_strided_slice %18 {offsets = [0, 160], sizes = [16, 32], strides = [1, 1]} : vector<16x384xbf16> to vector<16x32xbf16>
    %41 = vector.extract_strided_slice %18 {offsets = [0, 288], sizes = [16, 32], strides = [1, 1]} : vector<16x384xbf16> to vector<16x32xbf16>
    "tpu.trace_start"() <{level = 10 : i32, message = "qd,kd->qk"}> : () -> ()
    %cst_18 = arith.constant dense<0.000000e+00> : vector<16x16xf32>
    %42 = tpu.matmul %39, %40, %cst_18 {dimension_numbers = #tpu.dot_dimension_numbers<[1], [1], [0], [0], [0, 0, 1, 0], [], []>} : vector<16x32xbf16>, vector<16x32xbf16>, vector<16x16xf32> -> vector<16x16xf32>
    "tpu.trace_stop"() : () -> ()
    %cst_19 = arith.constant 0.176776692 : f32
    %43 = vector.broadcast %cst_19 : f32 to vector<16x16xf32>
    %44 = arith.mulf %42, %43 : vector<16x16xf32>
    %45 = vector.broadcast %10 : vector<1x16xf32> to vector<16x16xf32>
    %46 = arith.addf %44, %45 : vector<16x16xf32>
    %cst_20 = arith.constant dense<0xFF800000> : vector<16xf32>
    %47 = vector.multi_reduction <maximumf>, %46, %cst_20 [1] : vector<16x16xf32> to vector<16xf32>
    %48 = vector.shape_cast %47 : vector<16xf32> to vector<16x1xf32>
    %49 = vector.broadcast %48 : vector<16x1xf32> to vector<16x16xf32>
    %50 = arith.subf %46, %49 : vector<16x16xf32>
    %51 = math.exp %50 : vector<16x16xf32>
    %cst_21 = arith.constant dense<0.000000e+00> : vector<16xf32>
    %52 = vector.multi_reduction <add>, %51, %cst_21 [1] : vector<16x16xf32> to vector<16xf32>
    %53 = vector.shape_cast %52 : vector<16xf32> to vector<16x1xf32>
    %54 = tpu.reciprocal %53 {approx = true} : vector<16x1xf32> -> vector<16x1xf32>
    %55 = vector.broadcast %54 : vector<16x1xf32> to vector<16x16xf32>
    %56 = arith.mulf %51, %55 : vector<16x16xf32>
    %57 = arith.truncf %56 : vector<16x16xf32> to vector<16x16xbf16>
    %cst_22 = arith.constant dense<0.000000e+00> : vector<16x32xf32>
    %58 = tpu.matmul %57, %41, %cst_22 {dimension_numbers = #tpu.dot_dimension_numbers<[1], [0], [0], [1], [0, 0, 1, 1], [], []>} : vector<16x16xbf16>, vector<16x32xbf16>, vector<16x32xf32> -> vector<16x32xf32>
    %59 = vector.extract_strided_slice %18 {offsets = [0, 64], sizes = [16, 32], strides = [1, 1]} : vector<16x384xbf16> to vector<16x32xbf16>
    %60 = vector.extract_strided_slice %18 {offsets = [0, 192], sizes = [16, 32], strides = [1, 1]} : vector<16x384xbf16> to vector<16x32xbf16>
    %61 = vector.extract_strided_slice %18 {offsets = [0, 320], sizes = [16, 32], strides = [1, 1]} : vector<16x384xbf16> to vector<16x32xbf16>
    "tpu.trace_start"() <{level = 10 : i32, message = "qd,kd->qk"}> : () -> ()
    %cst_23 = arith.constant dense<0.000000e+00> : vector<16x16xf32>
    %62 = tpu.matmul %59, %60, %cst_23 {dimension_numbers = #tpu.dot_dimension_numbers<[1], [1], [0], [0], [0, 0, 1, 0], [], []>} : vector<16x32xbf16>, vector<16x32xbf16>, vector<16x16xf32> -> vector<16x16xf32>
    "tpu.trace_stop"() : () -> ()
    %cst_24 = arith.constant 0.176776692 : f32
    %63 = vector.broadcast %cst_24 : f32 to vector<16x16xf32>
    %64 = arith.mulf %62, %63 : vector<16x16xf32>
    %65 = vector.broadcast %10 : vector<1x16xf32> to vector<16x16xf32>
    %66 = arith.addf %64, %65 : vector<16x16xf32>
    %cst_25 = arith.constant dense<0xFF800000> : vector<16xf32>
    %67 = vector.multi_reduction <maximumf>, %66, %cst_25 [1] : vector<16x16xf32> to vector<16xf32>
    %68 = vector.shape_cast %67 : vector<16xf32> to vector<16x1xf32>
    %69 = vector.broadcast %68 : vector<16x1xf32> to vector<16x16xf32>
    %70 = arith.subf %66, %69 : vector<16x16xf32>
    %71 = math.exp %70 : vector<16x16xf32>
    %cst_26 = arith.constant dense<0.000000e+00> : vector<16xf32>
    %72 = vector.multi_reduction <add>, %71, %cst_26 [1] : vector<16x16xf32> to vector<16xf32>
    %73 = vector.shape_cast %72 : vector<16xf32> to vector<16x1xf32>
    %74 = tpu.reciprocal %73 {approx = true} : vector<16x1xf32> -> vector<16x1xf32>
    %75 = vector.broadcast %74 : vector<16x1xf32> to vector<16x16xf32>
    %76 = arith.mulf %71, %75 : vector<16x16xf32>
    %77 = arith.truncf %76 : vector<16x16xf32> to vector<16x16xbf16>
    %cst_27 = arith.constant dense<0.000000e+00> : vector<16x32xf32>
    %78 = tpu.matmul %77, %61, %cst_27 {dimension_numbers = #tpu.dot_dimension_numbers<[1], [0], [0], [1], [0, 0, 1, 1], [], []>} : vector<16x16xbf16>, vector<16x32xbf16>, vector<16x32xf32> -> vector<16x32xf32>
    %79 = vector.extract_strided_slice %18 {offsets = [0, 96], sizes = [16, 32], strides = [1, 1]} : vector<16x384xbf16> to vector<16x32xbf16>
    %80 = vector.extract_strided_slice %18 {offsets = [0, 224], sizes = [16, 32], strides = [1, 1]} : vector<16x384xbf16> to vector<16x32xbf16>
    %81 = vector.extract_strided_slice %18 {offsets = [0, 352], sizes = [16, 32], strides = [1, 1]} : vector<16x384xbf16> to vector<16x32xbf16>
    "tpu.trace_start"() <{level = 10 : i32, message = "qd,kd->qk"}> : () -> ()
    %cst_28 = arith.constant dense<0.000000e+00> : vector<16x16xf32>
    %82 = tpu.matmul %79, %80, %cst_28 {dimension_numbers = #tpu.dot_dimension_numbers<[1], [1], [0], [0], [0, 0, 1, 0], [], []>} : vector<16x32xbf16>, vector<16x32xbf16>, vector<16x16xf32> -> vector<16x16xf32>
    "tpu.trace_stop"() : () -> ()
    %cst_29 = arith.constant 0.176776692 : f32
    %83 = vector.broadcast %cst_29 : f32 to vector<16x16xf32>
    %84 = arith.mulf %82, %83 : vector<16x16xf32>
    %85 = vector.broadcast %10 : vector<1x16xf32> to vector<16x16xf32>
    %86 = arith.addf %84, %85 : vector<16x16xf32>
    %cst_30 = arith.constant dense<0xFF800000> : vector<16xf32>
    %87 = vector.multi_reduction <maximumf>, %86, %cst_30 [1] : vector<16x16xf32> to vector<16xf32>
    %88 = vector.shape_cast %87 : vector<16xf32> to vector<16x1xf32>
    %89 = vector.broadcast %88 : vector<16x1xf32> to vector<16x16xf32>
    %90 = arith.subf %86, %89 : vector<16x16xf32>
    %91 = math.exp %90 : vector<16x16xf32>
    %cst_31 = arith.constant dense<0.000000e+00> : vector<16xf32>
    %92 = vector.multi_reduction <add>, %91, %cst_31 [1] : vector<16x16xf32> to vector<16xf32>
    %93 = vector.shape_cast %92 : vector<16xf32> to vector<16x1xf32>
    %94 = tpu.reciprocal %93 {approx = true} : vector<16x1xf32> -> vector<16x1xf32>
    %95 = vector.broadcast %94 : vector<16x1xf32> to vector<16x16xf32>
    %96 = arith.mulf %91, %95 : vector<16x16xf32>
    %97 = arith.truncf %96 : vector<16x16xf32> to vector<16x16xbf16>
    %cst_32 = arith.constant dense<0.000000e+00> : vector<16x32xf32>
    %98 = tpu.matmul %97, %81, %cst_32 {dimension_numbers = #tpu.dot_dimension_numbers<[1], [0], [0], [1], [0, 0, 1, 1], [], []>} : vector<16x16xbf16>, vector<16x32xbf16>, vector<16x32xf32> -> vector<16x32xf32>
    %99 = tpu.concatenate %38, %58, %78, %98 in 1 : vector<16x32xf32>, vector<16x32xf32>, vector<16x32xf32>, vector<16x32xf32> -> vector<16x128xf32>
    %100 = arith.truncf %99 : vector<16x128xf32> to vector<16x128xbf16>
    %c0_33 = arith.constant 0 : index
    %c0_34 = arith.constant 0 : index
    %c0_35 = arith.constant 0 : index
    %101 = vector.load %arg11[%c0_33, %c0_34, %c0_35] : memref<1x128x128xbf16, #tpu.memory_space<vmem>>, vector<1x128x128xbf16>
    %102 = vector.shape_cast %101 : vector<1x128x128xbf16> to vector<128x128xbf16>
    %cst_36 = arith.constant dense<0.000000e+00> : vector<16x128xf32>
    %103 = tpu.matmul %100, %102, %cst_36 {dimension_numbers = #tpu.dot_dimension_numbers<[1], [0], [0], [1], [0, 0, 1, 1], [], []>} : vector<16x128xbf16>, vector<128x128xbf16>, vector<16x128xf32> -> vector<16x128xf32>
    %c0_37 = arith.constant 0 : index
    %c0_38 = arith.constant 0 : index
    %c0_39 = arith.constant 0 : index
    %104 = vector.load %arg12[%c0_37, %c0_38, %c0_39] : memref<1x6x128xf32, #tpu.memory_space<vmem>>, vector<1x1x128xf32>
    %105 = vector.shape_cast %104 : vector<1x1x128xf32> to vector<1x128xf32>
    %106 = vector.broadcast %105 : vector<1x128xf32> to vector<16x128xf32>
    %107 = arith.addf %103, %106 : vector<16x128xf32>
    %108 = arith.addf %107, %3 : vector<16x128xf32>
    %c0_40 = arith.constant 0 : index
    %c1 = arith.constant 1 : index
    %c0_41 = arith.constant 0 : index
    %109 = vector.load %arg12[%c0_40, %c1, %c0_41] : memref<1x6x128xf32, #tpu.memory_space<vmem>>, vector<1x1x128xf32>
    %110 = vector.shape_cast %109 : vector<1x1x128xf32> to vector<1x128xf32>
    %c0_42 = arith.constant 0 : index
    %c2 = arith.constant 2 : index
    %c0_43 = arith.constant 0 : index
    %111 = vector.load %arg12[%c0_42, %c2, %c0_43] : memref<1x6x128xf32, #tpu.memory_space<vmem>>, vector<1x1x128xf32>
    %112 = vector.shape_cast %111 : vector<1x1x128xf32> to vector<1x128xf32>
    %cst_44 = arith.constant dense<0.000000e+00> : vector<16xf32>
    %113 = vector.multi_reduction <add>, %108, %cst_44 [1] : vector<16x128xf32> to vector<16xf32>
    %114 = vector.shape_cast %113 : vector<16xf32> to vector<16x1xf32>
    %cst_45 = arith.constant 1.280000e+02 : f32
    %115 = vector.broadcast %cst_45 : f32 to vector<16x1xf32>
    %116 = arith.divf %114, %115 : vector<16x1xf32>
    %117 = vector.broadcast %116 : vector<16x1xf32> to vector<16x128xf32>
    %118 = arith.subf %108, %117 : vector<16x128xf32>
    %119 = arith.mulf %118, %118 : vector<16x128xf32>
    %cst_46 = arith.constant dense<0.000000e+00> : vector<16xf32>
    %120 = vector.multi_reduction <add>, %119, %cst_46 [1] : vector<16x128xf32> to vector<16xf32>
    %121 = vector.shape_cast %120 : vector<16xf32> to vector<16x1xf32>
    %cst_47 = arith.constant 1.280000e+02 : f32
    %122 = vector.broadcast %cst_47 : f32 to vector<16x1xf32>
    %123 = arith.divf %121, %122 : vector<16x1xf32>
    %124 = vector.broadcast %116 : vector<16x1xf32> to vector<16x128xf32>
    %125 = arith.subf %108, %124 : vector<16x128xf32>
    %cst_48 = arith.constant 9.99999996E-13 : f32
    %126 = vector.broadcast %cst_48 : f32 to vector<16x1xf32>
    %127 = arith.addf %123, %126 : vector<16x1xf32>
    %128 = math.rsqrt %127 : vector<16x1xf32>
    %129 = vector.broadcast %128 : vector<16x1xf32> to vector<16x128xf32>
    %130 = arith.mulf %125, %129 : vector<16x128xf32>
    %131 = vector.broadcast %110 : vector<1x128xf32> to vector<16x128xf32>
    %132 = arith.mulf %130, %131 : vector<16x128xf32>
    %133 = vector.broadcast %112 : vector<1x128xf32> to vector<16x128xf32>
    %134 = arith.addf %132, %133 : vector<16x128xf32>
    %135 = arith.truncf %134 : vector<16x128xf32> to vector<16x128xbf16>
    %c0_49 = arith.constant 0 : index
    %c0_50 = arith.constant 0 : index
    %c0_51 = arith.constant 0 : index
    %136 = vector.load %arg13[%c0_49, %c0_50, %c0_51] : memref<1x128x256xbf16, #tpu.memory_space<vmem>>, vector<1x128x256xbf16>
    %137 = vector.shape_cast %136 : vector<1x128x256xbf16> to vector<128x256xbf16>
    %cst_52 = arith.constant dense<0.000000e+00> : vector<16x256xf32>
    %138 = tpu.matmul %135, %137, %cst_52 {dimension_numbers = #tpu.dot_dimension_numbers<[1], [0], [0], [1], [0, 0, 1, 1], [], []>} : vector<16x128xbf16>, vector<128x256xbf16>, vector<16x256xf32> -> vector<16x256xf32>
    %c0_53 = arith.constant 0 : index
    %c0_54 = arith.constant 0 : index
    %c0_55 = arith.constant 0 : index
    %139 = vector.load %arg14[%c0_53, %c0_54, %c0_55] : memref<1x1x256xf32, #tpu.memory_space<vmem>>, vector<1x1x256xf32>
    %140 = vector.shape_cast %139 : vector<1x1x256xf32> to vector<1x256xf32>
    %141 = vector.broadcast %140 : vector<1x256xf32> to vector<16x256xf32>
    %142 = arith.addf %138, %141 : vector<16x256xf32>
    %143 = arith.mulf %142, %142 : vector<16x256xf32>
    %144 = arith.mulf %142, %143 : vector<16x256xf32>
    %cst_56 = arith.constant 4.471500e-02 : f32
    %145 = vector.broadcast %cst_56 : f32 to vector<16x256xf32>
    %146 = arith.mulf %145, %144 : vector<16x256xf32>
    %147 = arith.addf %142, %146 : vector<16x256xf32>
    %cst_57 = arith.constant 0.797884583 : f32
    %148 = vector.broadcast %cst_57 : f32 to vector<16x256xf32>
    %149 = arith.mulf %148, %147 : vector<16x256xf32>
    %150 = math.tanh %149 : vector<16x256xf32>
    %cst_58 = arith.constant 1.000000e+00 : f32
    %151 = vector.broadcast %cst_58 : f32 to vector<16x256xf32>
    %152 = arith.addf %151, %150 : vector<16x256xf32>
    %cst_59 = arith.constant 5.000000e-01 : f32
    %153 = vector.broadcast %cst_59 : f32 to vector<16x256xf32>
    %154 = arith.mulf %153, %152 : vector<16x256xf32>
    %155 = arith.mulf %142, %154 : vector<16x256xf32>
    %156 = arith.truncf %155 : vector<16x256xf32> to vector<16x256xbf16>
    %c0_60 = arith.constant 0 : index
    %c0_61 = arith.constant 0 : index
    %c0_62 = arith.constant 0 : index
    %157 = vector.load %arg15[%c0_60, %c0_61, %c0_62] : memref<1x256x128xbf16, #tpu.memory_space<vmem>>, vector<1x256x128xbf16>
    %158 = vector.shape_cast %157 : vector<1x256x128xbf16> to vector<256x128xbf16>
    %cst_63 = arith.constant dense<0.000000e+00> : vector<16x128xf32>
    %159 = tpu.matmul %156, %158, %cst_63 {dimension_numbers = #tpu.dot_dimension_numbers<[1], [0], [0], [1], [0, 0, 1, 1], [], []>} : vector<16x256xbf16>, vector<256x128xbf16>, vector<16x128xf32> -> vector<16x128xf32>
    %c0_64 = arith.constant 0 : index
    %c3 = arith.constant 3 : index
    %c0_65 = arith.constant 0 : index
    %160 = vector.load %arg12[%c0_64, %c3, %c0_65] : memref<1x6x128xf32, #tpu.memory_space<vmem>>, vector<1x1x128xf32>
    %161 = vector.shape_cast %160 : vector<1x1x128xf32> to vector<1x128xf32>
    %162 = vector.broadcast %161 : vector<1x128xf32> to vector<16x128xf32>
    %163 = arith.addf %159, %162 : vector<16x128xf32>
    %164 = arith.addf %163, %134 : vector<16x128xf32>
    %c0_66 = arith.constant 0 : index
    %c4 = arith.constant 4 : index
    %c0_67 = arith.constant 0 : index
    %165 = vector.load %arg12[%c0_66, %c4, %c0_67] : memref<1x6x128xf32, #tpu.memory_space<vmem>>, vector<1x1x128xf32>
    %166 = vector.shape_cast %165 : vector<1x1x128xf32> to vector<1x128xf32>
    %c0_68 = arith.constant 0 : index
    %c5 = arith.constant 5 : index
    %c0_69 = arith.constant 0 : index
    %167 = vector.load %arg12[%c0_68, %c5, %c0_69] : memref<1x6x128xf32, #tpu.memory_space<vmem>>, vector<1x1x128xf32>
    %168 = vector.shape_cast %167 : vector<1x1x128xf32> to vector<1x128xf32>
    %cst_70 = arith.constant dense<0.000000e+00> : vector<16xf32>
    %169 = vector.multi_reduction <add>, %164, %cst_70 [1] : vector<16x128xf32> to vector<16xf32>
    %170 = vector.shape_cast %169 : vector<16xf32> to vector<16x1xf32>
    %cst_71 = arith.constant 1.280000e+02 : f32
    %171 = vector.broadcast %cst_71 : f32 to vector<16x1xf32>
    %172 = arith.divf %170, %171 : vector<16x1xf32>
    %173 = vector.broadcast %172 : vector<16x1xf32> to vector<16x128xf32>
    %174 = arith.subf %164, %173 : vector<16x128xf32>
    %175 = arith.mulf %174, %174 : vector<16x128xf32>
    %cst_72 = arith.constant dense<0.000000e+00> : vector<16xf32>
    %176 = vector.multi_reduction <add>, %175, %cst_72 [1] : vector<16x128xf32> to vector<16xf32>
    %177 = vector.shape_cast %176 : vector<16xf32> to vector<16x1xf32>
    %cst_73 = arith.constant 1.280000e+02 : f32
    %178 = vector.broadcast %cst_73 : f32 to vector<16x1xf32>
    %179 = arith.divf %177, %178 : vector<16x1xf32>
    %180 = vector.broadcast %172 : vector<16x1xf32> to vector<16x128xf32>
    %181 = arith.subf %164, %180 : vector<16x128xf32>
    %cst_74 = arith.constant 9.99999996E-13 : f32
    %182 = vector.broadcast %cst_74 : f32 to vector<16x1xf32>
    %183 = arith.addf %179, %182 : vector<16x1xf32>
    %184 = math.rsqrt %183 : vector<16x1xf32>
    %185 = vector.broadcast %184 : vector<16x1xf32> to vector<16x128xf32>
    %186 = arith.mulf %181, %185 : vector<16x128xf32>
    %187 = vector.broadcast %166 : vector<1x128xf32> to vector<16x128xf32>
    %188 = arith.mulf %186, %187 : vector<16x128xf32>
    %189 = vector.broadcast %168 : vector<1x128xf32> to vector<16x128xf32>
    %190 = arith.addf %188, %189 : vector<16x128xf32>
    %c0_75 = arith.constant 0 : index
    %c0_76 = arith.constant 0 : index
    %191 = vector.load %arg21[%c0_75, %c0_76] : memref<16x128xf32, #tpu.memory_space<vmem>>, vector<16x128xf32>
    tpu.vector_store %arg21[%c0_75, %c0_76], %190 {strides = array<i32>} : memref<16x128xf32, #tpu.memory_space<vmem>>, vector<16x128xf32>,
    %c1_i32 = arith.constant 1 : i32
    %192 = arith.cmpi eq, %arg1, %c1_i32 : i32
    %193 = arith.extui %192 : i1 to i32
    %c0_i32_77 = arith.constant 0 : i32
    %194 = arith.cmpi ne, %193, %c0_i32_77 : i32
    scf.if %194 {
      %195 = vector.extract_strided_slice %190 {offsets = [0, 0], sizes = [1, 128], strides = [1, 1]} : vector<16x128xf32> to vector<1x128xf32>
      %196 = arith.truncf %195 : vector<1x128xf32> to vector<1x128xbf16>
      %c0_78 = arith.constant 0 : index
      %c0_79 = arith.constant 0 : index
      %197 = vector.load %arg16[%c0_78, %c0_79] : memref<128x128xbf16, #tpu.memory_space<vmem>>, vector<128x128xbf16>
      %cst_80 = arith.constant dense<0.000000e+00> : vector<1x128xf32>
      %198 = tpu.matmul %196, %197, %cst_80 {dimension_numbers = #tpu.dot_dimension_numbers<[1], [0], [0], [1], [0, 0, 1, 1], [], []>} : vector<1x128xbf16>, vector<128x128xbf16>, vector<1x128xf32> -> vector<1x128xf32>
      %c0_81 = arith.constant 0 : index
      %c0_82 = arith.constant 0 : index
      %199 = vector.load %arg18[%c0_81, %c0_82] : memref<2x128xf32, #tpu.memory_space<vmem>>, vector<1x128xf32>
      %200 = arith.addf %198, %199 : vector<1x128xf32>
      %201 = math.tanh %200 : vector<1x128xf32>
      %202 = arith.truncf %201 : vector<1x128xf32> to vector<1x128xbf16>
      %c0_83 = arith.constant 0 : index
      %c0_84 = arith.constant 0 : index
      %203 = vector.load %arg17[%c0_83, %c0_84] : memref<128x128xbf16, #tpu.memory_space<vmem>>, vector<128x128xbf16>
      %cst_85 = arith.constant dense<0.000000e+00> : vector<1x128xf32>
      %204 = tpu.matmul %202, %203, %cst_85 {dimension_numbers = #tpu.dot_dimension_numbers<[1], [0], [0], [1], [0, 0, 1, 1], [], []>} : vector<1x128xbf16>, vector<128x128xbf16>, vector<1x128xf32> -> vector<1x128xf32>
      %c1_86 = arith.constant 1 : index
      %c0_87 = arith.constant 0 : index
      %205 = vector.load %arg18[%c1_86, %c0_87] : memref<2x128xf32, #tpu.memory_space<vmem>>, vector<1x128xf32>
      %206 = arith.addf %204, %205 : vector<1x128xf32>
      %c0_88 = arith.constant 0 : index
      %c0_89 = arith.constant 0 : index
      %c0_90 = arith.constant 0 : index
      %207 = vector.load %arg19[%c0_88, %c0_89, %c0_90] : memref<1x1x128xf32, #tpu.memory_space<vmem>>, vector<1x1x128xf32>
      %208 = vector.shape_cast %207 : vector<1x1x128xf32> to vector<1x128xf32>
      %209 = vector.shape_cast %201 : vector<1x128xf32> to vector<1x1x128xf32>
      tpu.vector_store %arg19[%c0_88, %c0_89, %c0_90], %209 {strides = array<i32>} : memref<1x1x128xf32, #tpu.memory_space<vmem>>, vector<1x1x128xf32>,
      %c0_91 = arith.constant 0 : index
      %c0_92 = arith.constant 0 : index
      %c0_93 = arith.constant 0 : index
      %210 = vector.load %arg20[%c0_91, %c0_92, %c0_93] : memref<1x1x128xf32, #tpu.memory_space<vmem>>, vector<1x1x128xf32>
      %211 = vector.shape_cast %210 : vector<1x1x128xf32> to vector<1x128xf32>
      %212 = vector.shape_cast %206 : vector<1x128xf32> to vector<1x1x128xf32>
      tpu.vector_store %arg20[%c0_91, %c0_92, %c0_93], %212 {strides = array<i32>} : memref<1x1x128xf32, #tpu.memory_space<vmem>>, vector<1x1x128xf32>,
    } else {
    }
    return
  }
  func.func @transform_0(%arg0: i32, %arg1: i32) -> (i32, i32) {
    %c0_i32 = arith.constant 0 : i32
    %c0_i32_0 = arith.constant 0 : i32
    return %arg0, %c0_i32 : i32, i32
  }
  func.func @transform_1(%arg0: i32, %arg1: i32) -> (i32, i32, i32) {
    %c0_i32 = arith.constant 0 : i32
    %c0_i32_0 = arith.constant 0 : i32
    %c0_i32_1 = arith.constant 0 : i32
    return %arg0, %c0_i32, %c0_i32_0 : i32, i32, i32
  }
  func.func @transform_2(%arg0: i32, %arg1: i32) -> (i32, i32) {
    %c0_i32 = arith.constant 0 : i32
    %c0_i32_0 = arith.constant 0 : i32
    return %arg0, %c0_i32 : i32, i32
  }
  func.func @transform_3(%arg0: i32, %arg1: i32) -> (i32, i32) {
    %c0_i32 = arith.constant 0 : i32
    %c0_i32_0 = arith.constant 0 : i32
    return %arg0, %c0_i32 : i32, i32
  }
  func.func @transform_4(%arg0: i32, %arg1: i32) -> (i32, i32) {
    %c0_i32 = arith.constant 0 : i32
    %c0_i32_0 = arith.constant 0 : i32
    %c0_i32_1 = arith.constant 0 : i32
    return %c0_i32, %c0_i32_0 : i32, i32
  }
  func.func @transform_5(%arg0: i32, %arg1: i32) -> (i32, i32) {
    %c0_i32 = arith.constant 0 : i32
    %c0_i32_0 = arith.constant 0 : i32
    %c0_i32_1 = arith.constant 0 : i32
    return %c0_i32, %c0_i32_0 : i32, i32
  }
  func.func @transform_6(%arg0: i32, %arg1: i32) -> (i32, i32) {
    %c0_i32 = arith.constant 0 : i32
    %c0_i32_0 = arith.constant 0 : i32
    %c0_i32_1 = arith.constant 0 : i32
    return %c0_i32, %c0_i32_0 : i32, i32
  }
  func.func @transform_7(%arg0: i32, %arg1: i32) -> (i32, i32, i32) {
    %c0_i32 = arith.constant 0 : i32
    %c0_i32_0 = arith.constant 0 : i32
    %c0_i32_1 = arith.constant 0 : i32
    return %arg1, %c0_i32, %c0_i32_0 : i32, i32, i32
  }
  func.func @transform_8(%arg0: i32, %arg1: i32) -> (i32, i32, i32) {
    %c0_i32 = arith.constant 0 : i32
    %c0_i32_0 = arith.constant 0 : i32
    %c0_i32_1 = arith.constant 0 : i32
    return %arg1, %c0_i32, %c0_i32_0 : i32, i32, i32
  }
  func.func @transform_9(%arg0: i32, %arg1: i32) -> (i32, i32, i32) {
    %c0_i32 = arith.constant 0 : i32
    %c0_i32_0 = arith.constant 0 : i32
    %c0_i32_1 = arith.constant 0 : i32
    return %arg1, %c0_i32, %c0_i32_0 : i32, i32, i32
  }
  func.func @transform_10(%arg0: i32, %arg1: i32) -> (i32, i32, i32) {
    %c0_i32 = arith.constant 0 : i32
    %c0_i32_0 = arith.constant 0 : i32
    %c0_i32_1 = arith.constant 0 : i32
    return %arg1, %c0_i32, %c0_i32_0 : i32, i32, i32
  }
  func.func @transform_11(%arg0: i32, %arg1: i32) -> (i32, i32, i32) {
    %c0_i32 = arith.constant 0 : i32
    %c0_i32_0 = arith.constant 0 : i32
    %c0_i32_1 = arith.constant 0 : i32
    return %arg1, %c0_i32, %c0_i32_0 : i32, i32, i32
  }
  func.func @transform_12(%arg0: i32, %arg1: i32) -> (i32, i32, i32) {
    %c0_i32 = arith.constant 0 : i32
    %c0_i32_0 = arith.constant 0 : i32
    %c0_i32_1 = arith.constant 0 : i32
    return %arg1, %c0_i32, %c0_i32_0 : i32, i32, i32
  }
  func.func @transform_13(%arg0: i32, %arg1: i32) -> (i32, i32, i32) {
    %c0_i32 = arith.constant 0 : i32
    %c0_i32_0 = arith.constant 0 : i32
    %c0_i32_1 = arith.constant 0 : i32
    return %arg1, %c0_i32, %c0_i32_0 : i32, i32, i32
  }
  func.func @transform_14(%arg0: i32, %arg1: i32) -> (i32, i32) {
    %c0_i32 = arith.constant 0 : i32
    %c0_i32_0 = arith.constant 0 : i32
    %c0_i32_1 = arith.constant 0 : i32
    return %c0_i32, %c0_i32_0 : i32, i32
  }
  func.func @transform_15(%arg0: i32, %arg1: i32) -> (i32, i32) {
    %c0_i32 = arith.constant 0 : i32
    %c0_i32_0 = arith.constant 0 : i32
    %c0_i32_1 = arith.constant 0 : i32
    return %c0_i32, %c0_i32_0 : i32, i32
  }
  func.func @transform_16(%arg0: i32, %arg1: i32) -> (i32, i32) {
    %c0_i32 = arith.constant 0 : i32
    %c0_i32_0 = arith.constant 0 : i32
    %c0_i32_1 = arith.constant 0 : i32
    return %c0_i32, %c0_i32_0 : i32, i32
  }
  func.func @transform_17(%arg0: i32, %arg1: i32) -> (i32, i32, i32) {
    %c0_i32 = arith.constant 0 : i32
    %c0_i32_0 = arith.constant 0 : i32
    %c0_i32_1 = arith.constant 0 : i32
    return %arg0, %c0_i32, %c0_i32_0 : i32, i32, i32
  }
  func.func @transform_18(%arg0: i32, %arg1: i32) -> (i32, i32, i32) {
    %c0_i32 = arith.constant 0 : i32
    %c0_i32_0 = arith.constant 0 : i32
    %c0_i32_1 = arith.constant 0 : i32
    return %arg0, %c0_i32, %c0_i32_0 : i32, i32, i32
  }
}

</mosaic_0001>

<llo_original>
// kernel: tpu_custom_call.1
$region0: #{tpu_custom_call.1}
  #allocation0 [shape = 'u32[]', space=smem, size = 0x4, offset = 0x4, fixed_abs, tag = 'smem constant byte address 0x4 - core index']
  #allocation1 [shape = 'u32[144,128]{1,0:T(1,128)}', space=vmem, size = 0x12000, scoped, tag = 'internal scratch']
  #allocation2 [shape = 'f32[16,128]{1,0:T(8,128)}', space=vmem, size = 0x2000, scoped, tag = 'scratch operand']
  %s0 = inlined_call_operand.vmem [shape: f32[16,128], index: 0, kind: input, shape index: {}]
  %s1 = inlined_call_operand.hbm [shape: f32[2,1,16], index: 1, kind: input, shape index: {}]
  %s2 = inlined_call_operand.hbm [shape: bf16[16,2048], index: 2, kind: input, shape index: {}]
  %s3 = inlined_call_operand.vmem [shape: f32[16,8], index: 3, kind: input, shape index: {}]
  %s4 = inlined_call_operand.hbm [shape: bf16[2048,128], index: 4, kind: input, shape index: {}]
  %s5 = inlined_call_operand.vmem [shape: f32[8,128], index: 5, kind: input, shape index: {}]
  %s6 = inlined_call_operand.vmem [shape: f32[9,128], index: 6, kind: input, shape index: {}]
  %s7 = inlined_call_operand.hbm [shape: bf16[2,128,384], index: 7, kind: input, shape index: {}]
  %s8 = inlined_call_operand.hbm [shape: f32[2,1,384], index: 8, kind: input, shape index: {}]
  %s9 = inlined_call_operand.hbm [shape: bf16[2,128,128], index: 9, kind: input, shape index: {}]
  %s10 = inlined_call_operand.vmem [shape: f32[2,6,128], index: 10, kind: input, shape index: {}]
  %s11 = inlined_call_operand.hbm [shape: bf16[2,128,256], index: 11, kind: input, shape index: {}]
  %s12 = inlined_call_operand.hbm [shape: f32[2,1,256], index: 12, kind: input, shape index: {}]
  %s13 = inlined_call_operand.hbm [shape: bf16[2,256,128], index: 13, kind: input, shape index: {}]
  %s14 = inlined_call_operand.vmem [shape: bf16[128,128], index: 14, kind: input, shape index: {}]
  %s15 = inlined_call_operand.hbm [shape: bf16[128,128], index: 15, kind: input, shape index: {}]
  %s16 = inlined_call_operand.vmem [shape: f32[2,128], index: 16, kind: input, shape index: {}]
  %s17 = inlined_call_operand.hbm [shape: f32[2,1,128], index: 17, kind: output, shape index: {0}]
  %s18 = inlined_call_operand.hbm [shape: f32[2,1,128], index: 18, kind: output, shape index: {1}]
  %19 = xla_tuple %s17, %s18
  %s20 = sld [smem:[#allocation0]]
  $region157: #{tpu_custom_call.1} parent=0
    _
  %s22 = ssub.s32 1, %s20
  %s23 = scalar_select 0, %s22, %s20
  $region1: #{tpu_custom_call.1} parent=0
    #allocation3 [shape = 'u8[1024]{0}', space=vmem, size = 0x400, scoped, tag = 'input window, operand 1']
    #allocation4 [shape = 's32[2]{0}', space=sflag, size = 0x8, scoped, tag = 'scoped memory for tpu_custom_call.1']
    #allocation5 [shape = 's32[2]{0}', space=sflag, size = 0x8, scoped, tag = 'scoped memory for tpu_custom_call.1']
    #allocation6 [shape = 'u8[65536]{0}', space=vmem, size = 0x10000, scoped, tag = 'input window, operand 2']
    #allocation7 [shape = 's32[2]{0}', space=sflag, size = 0x8, scoped, tag = 'scoped memory for tpu_custom_call.1']
    #allocation8 [shape = 'u8[524288]{0}', space=vmem, size = 0x80000, scoped, tag = 'input window, operand 4, single buffered']
    #allocation9 [shape = 'u8[196608]{0}', space=vmem, size = 0x30000, scoped, tag = 'input window, operand 7']
    #allocation10 [shape = 's32[2]{0}', space=sflag, size = 0x8, scoped, tag = 'scoped memory for tpu_custom_call.1']
    #allocation11 [shape = 'u8[3072]{0}', space=vmem, size = 0xc00, scoped, tag = 'input window, operand 8']
    #allocation12 [shape = 'u8[65536]{0}', space=vmem, size = 0x10000, scoped, tag = 'input window, operand 9']
    #allocation13 [shape = 's32[2]{0}', space=sflag, size = 0x8, scoped, tag = 'scoped memory for tpu_custom_call.1']
    #allocation14 [shape = 'u8[131072]{0}', space=vmem, size = 0x20000, scoped, tag = 'input window, operand 11']
    #allocation15 [shape = 'u8[2048]{0}', space=vmem, size = 0x800, scoped, tag = 'input window, operand 12']
    #allocation16 [shape = 's32[2]{0}', space=sflag, size = 0x8, scoped, tag = 'scoped memory for tpu_custom_call.1']
    #allocation17 [shape = 'u8[131072]{0}', space=vmem, size = 0x20000, scoped, tag = 'input window, operand 13']
    #allocation18 [shape = 'u8[32768]{0}', space=vmem, size = 0x8000, scoped, tag = 'input window, operand 15, single buffered']
    #allocation19 [shape = 's32[1]{0}', space=sflag, size = 0x4, scoped, tag = 'scoped memory for tpu_custom_call.1']
    #allocation20 [shape = 'u8[1024]{0}', space=vmem, size = 0x400, scoped, tag = 'output window, operand 0']
    #allocation21 [shape = 'u8[1024]{0}', space=vmem, size = 0x400, scoped, tag = 'output window, operand 1']
    #allocation22 [shape = 's32[2]{0}', space=sflag, size = 0x8, scoped, tag = 'scoped memory for tpu_custom_call.1']
    %24 = vsyncpa [#allocation4], 0
    %s25 = scalar_lea.sflag [#allocation4], 1
    %26 = vsyncpa %s25, 0
    %27 = vsyncpa [#allocation7], 0
    %s28 = scalar_lea.sflag [#allocation7], 1
    %29 = vsyncpa %s28, 0
    %30 = vsyncpa [#allocation10], 0
    %s31 = scalar_lea.sflag [#allocation10], 1
    %32 = vsyncpa %s31, 0
    %33 = vsyncpa [#allocation13], 0
    %s34 = scalar_lea.sflag [#allocation13], 1
    %35 = vsyncpa %s34, 0
    %36 = vsyncpa [#allocation16], 0
    %s37 = scalar_lea.sflag [#allocation16], 1
    %38 = vsyncpa %s37, 0
    %39 = vsyncpa [#allocation19], 0
    %40 = vsyncpa [#allocation5], 0
    %s41 = scalar_lea.sflag [#allocation5], 1
    %42 = vsyncpa %s41, 0
    %43 = vsyncpa [#allocation22], 0
    %s44 = scalar_lea.sflag [#allocation22], 1
    %45 = vsyncpa %s44, 0
    loop: start=0, step=1, limit=6
    $region2: #{tpu_custom_call.1} parent=1 // loop_pre_header
      _
    $region3: #{tpu_custom_call.1} parent=1 // loop_header
      %s47 = sphi 0, %s51
      %p48 = scmp.ge.s32.totalorder %s47, 6
      %s54 = sphi 0, %s66
      %s55 = sphi 0, %s62
      %s56 = sphi 0, %s54
      %s57 = sphi 0, %s55
      %s58 = sphi 0, %s56
      %s59 = sphi 0, %s57
      %s69 = sphi 0, %s71
      %s72 = sphi 0, %s69
      %s73 = sphi 0, %s72
      %s89 = sphi 0, %s73
      %s95 = sphi 0, %s97
      %s98 = sphi 0, %s95
      %s99 = sphi 0, %s98
      %s115 = sphi 0, %s99
      %s121 = sphi 0, %s123
      %s124 = sphi 0, %s121
      %s125 = sphi 0, %s124
      %s141 = sphi 0, %s125
      %s147 = sphi 0, %s149
      %s150 = sphi 0, %s147
      %s151 = sphi 0, %s150
      %s167 = sphi 0, %s151
      %s171 = sphi 0, %s171
      %s173 = sphi 0, %s171
      %s174 = sphi 0, %s173
      %s188 = sphi 0, %s174
      %s192 = sphi 0, %s192
      %s194 = sphi 0, %s192
      %s195 = sphi 0, %s194
      %s209 = sphi 0, %s195
      %s213 = sphi 0, %s213
      %s215 = sphi 0, %s213
      %s216 = sphi 0, %s215
      %s230 = sphi 0, %s216
      %s236 = sphi 0, %s238
      %s239 = sphi 0, %s236
      %s240 = sphi 0, %s239
      %s256 = sphi 0, %s240
      %s262 = sphi 0, %s264
      %s265 = sphi 0, %s262
      %s266 = sphi 0, %s265
      %s282 = sphi 0, %s266
      %s288 = sphi 0, %s290
      %s291 = sphi 0, %s288
      %s292 = sphi 0, %s291
      %s308 = sphi 0, %s292
      %s314 = sphi 0, %s316
      %s317 = sphi 0, %s314
      %s318 = sphi 0, %s317
      %s334 = sphi 0, %s318
      %s340 = sphi 0, %s342
      %s343 = sphi 0, %s340
      %s344 = sphi 0, %s343
      %s360 = sphi 0, %s344
      %s366 = sphi 0, %s368
      %s369 = sphi 0, %s366
      %s370 = sphi 0, %s369
      %s386 = sphi 0, %s370
      %s392 = sphi 0, %s394
      %s395 = sphi 0, %s392
      %s396 = sphi 0, %s395
      %s412 = sphi 0, %s396
      %s416 = sphi 0, %s416
      %s418 = sphi 0, %s416
      %s419 = sphi 0, %s418
      %s433 = sphi 0, %s419
      %s437 = sphi 0, %s437
      %s439 = sphi 0, %s437
      %s440 = sphi 0, %s439
      %s454 = sphi 0, %s440
      %s458 = sphi 0, %s458
      %s460 = sphi 0, %s458
      %s461 = sphi 0, %s460
      %s475 = sphi 0, %s461
      %s481 = sphi 0, %s483
      %s484 = sphi 0, %s481
      %s485 = sphi 0, %s484
      %s501 = sphi 0, %s485
      %s507 = sphi 0, %s509
      %s510 = sphi 0, %s507
      %s511 = sphi 0, %s510
      %s527 = sphi 0, %s511
    $region4: #{tpu_custom_call.1} parent=1 // loop_header_branch
      %50 = sbr.rel (%p48) target = $region8
    $region5: #{tpu_custom_call.1} parent=1 // loop_body
      %s52 = ssub.s32 %s47, 1
      %s53 = ssub.s32 %s47, 2
      %s60 = sadd.s32 1, %s55
      %p61 = scmp.ge.s32.totalorder %s60, 2
      %s62 = scalar_select %p61, 0, %s60
      %s63 = sadd.s32 1, %s54
      %s64 = scalar_select %p61, %s63, %s54
      %p65 = scmp.ge.s32.totalorder %s64, 2
      %s66 = scalar_select %p65, 0, %s64
      %s67 = ssub.s32 %s54, %s66
      %p68 = scmp.eq.s32.totalorder %s67, 0
      %s70 = sadd.s32 %s69, 1
      %s71 = scalar_select %p68, %s69, %s70
      %p74 = pneg %p68
      %p75 = scmp.eq.s32.totalorder %s47, 3
      %p76 = por %p74, %p75
      %p77 = scmp.ne.s32.totalorder %s69, %s72
      %p78 = scmp.eq.s32.totalorder %s47, 0
      %p79 = por %p77, %p78
      %p80 = scmp.ne.s32.totalorder %s69, %s72
      %p81 = scmp.eq.s32.totalorder %s52, 3
      %p82 = por %p80, %p81
      %p83 = scmp.ne.s32.totalorder %s72, %s73
      %p84 = scmp.eq.s32.totalorder %s52, 0
      %p85 = por %p83, %p84
      %p86 = scmp.ne.s32.totalorder %s72, %s73
      %p87 = scmp.eq.s32.totalorder %s53, 3
      %p88 = por %p86, %p87
      %p90 = scmp.ne.s32.totalorder %s73, %s89
      %p91 = scmp.eq.s32.totalorder %s53, 0
      %p92 = por %p90, %p91
      %s93 = ssub.s32 %s54, %s66
      %p94 = scmp.eq.s32.totalorder %s93, 0
      %s96 = sadd.s32 %s95, 1
      %s97 = scalar_select %p94, %s95, %s96
      %p100 = pneg %p94
      %p101 = scmp.eq.s32.totalorder %s47, 3
      %p102 = por %p100, %p101
      %p103 = scmp.ne.s32.totalorder %s95, %s98
      %p104 = scmp.eq.s32.totalorder %s47, 0
      %p105 = por %p103, %p104
      %p106 = scmp.ne.s32.totalorder %s95, %s98
      %p107 = scmp.eq.s32.totalorder %s52, 3
      %p108 = por %p106, %p107
      %p109 = scmp.ne.s32.totalorder %s98, %s99
      %p110 = scmp.eq.s32.totalorder %s52, 0
      %p111 = por %p109, %p110
      %p112 = scmp.ne.s32.totalorder %s98, %s99
      %p113 = scmp.eq.s32.totalorder %s53, 3
      %p114 = por %p112, %p113
      %p116 = scmp.ne.s32.totalorder %s99, %s115
      %p117 = scmp.eq.s32.totalorder %s53, 0
      %p118 = por %p116, %p117
      %s119 = ssub.s32 %s54, %s66
      %p120 = scmp.eq.s32.totalorder %s119, 0
      %s122 = sadd.s32 %s121, 1
      %s123 = scalar_select %p120, %s121, %s122
      %p126 = pneg %p120
      %p127 = scmp.eq.s32.totalorder %s47, 3
      %p128 = por %p126, %p127
      %p129 = scmp.ne.s32.totalorder %s121, %s124
      %p130 = scmp.eq.s32.totalorder %s47, 0
      %p131 = por %p129, %p130
      %p132 = scmp.ne.s32.totalorder %s121, %s124
      %p133 = scmp.eq.s32.totalorder %s52, 3
      %p134 = por %p132, %p133
      %p135 = scmp.ne.s32.totalorder %s124, %s125
      %p136 = scmp.eq.s32.totalorder %s52, 0
      %p137 = por %p135, %p136
      %p138 = scmp.ne.s32.totalorder %s124, %s125
      %p139 = scmp.eq.s32.totalorder %s53, 3
      %p140 = por %p138, %p139
      %p142 = scmp.ne.s32.totalorder %s125, %s141
      %p143 = scmp.eq.s32.totalorder %s53, 0
      %p144 = por %p142, %p143
      %s145 = ssub.s32 %s54, %s66
      %p146 = scmp.eq.s32.totalorder %s145, 0
      %s148 = sadd.s32 %s147, 1
      %s149 = scalar_select %p146, %s147, %s148
      %p152 = pneg %p146
      %p153 = scmp.eq.s32.totalorder %s47, 3
      %p154 = por %p152, %p153
      %p155 = scmp.ne.s32.totalorder %s147, %s150
      %p156 = scmp.eq.s32.totalorder %s47, 0
      %p157 = por %p155, %p156
      %p158 = scmp.ne.s32.totalorder %s147, %s150
      %p159 = scmp.eq.s32.totalorder %s52, 3
      %p160 = por %p158, %p159
      %p161 = scmp.ne.s32.totalorder %s150, %s151
      %p162 = scmp.eq.s32.totalorder %s52, 0
      %p163 = por %p161, %p162
      %p164 = scmp.ne.s32.totalorder %s150, %s151
      %p165 = scmp.eq.s32.totalorder %s53, 3
      %p166 = por %p164, %p165
      %p168 = scmp.ne.s32.totalorder %s151, %s167
      %p169 = scmp.eq.s32.totalorder %s53, 0
      %p170 = por %p168, %p169
      %s172 = sadd.s32 %s171, 1
      %p175 = scmp.eq.s32.totalorder %s47, 3
      %p176 = scmp.ne.s32.totalorder %s171, %s173
      %p177 = scmp.eq.s32.totalorder %s47, 0
      %p178 = por %p176, %p177
      %p179 = scmp.ne.s32.totalorder %s171, %s173
      %p180 = scmp.eq.s32.totalorder %s52, 3
      %p181 = por %p179, %p180
      %p182 = scmp.ne.s32.totalorder %s173, %s174
      %p183 = scmp.eq.s32.totalorder %s52, 0
      %p184 = por %p182, %p183
      %p185 = scmp.ne.s32.totalorder %s173, %s174
      %p186 = scmp.eq.s32.totalorder %s53, 3
      %p187 = por %p185, %p186
      %p189 = scmp.ne.s32.totalorder %s174, %s188
      %p190 = scmp.eq.s32.totalorder %s53, 0
      %p191 = por %p189, %p190
      %s193 = sadd.s32 %s192, 1
      %p196 = scmp.eq.s32.totalorder %s47, 3
      %p197 = scmp.ne.s32.totalorder %s192, %s194
      %p198 = scmp.eq.s32.totalorder %s47, 0
      %p199 = por %p197, %p198
      %p200 = scmp.ne.s32.totalorder %s192, %s194
      %p201 = scmp.eq.s32.totalorder %s52, 3
      %p202 = por %p200, %p201
      %p203 = scmp.ne.s32.totalorder %s194, %s195
      %p204 = scmp.eq.s32.totalorder %s52, 0
      %p205 = por %p203, %p204
      %p206 = scmp.ne.s32.totalorder %s194, %s195
      %p207 = scmp.eq.s32.totalorder %s53, 3
      %p208 = por %p206, %p207
      %p210 = scmp.ne.s32.totalorder %s195, %s209
      %p211 = scmp.eq.s32.totalorder %s53, 0
      %p212 = por %p210, %p211
      %s214 = sadd.s32 %s213, 1
      %p217 = scmp.eq.s32.totalorder %s47, 3
      %p218 = scmp.ne.s32.totalorder %s213, %s215
      %p219 = scmp.eq.s32.totalorder %s47, 0
      %p220 = por %p218, %p219
      %p221 = scmp.ne.s32.totalorder %s213, %s215
      %p222 = scmp.eq.s32.totalorder %s52, 3
      %p223 = por %p221, %p222
      %p224 = scmp.ne.s32.totalorder %s215, %s216
      %p225 = scmp.eq.s32.totalorder %s52, 0
      %p226 = por %p224, %p225
      %p227 = scmp.ne.s32.totalorder %s215, %s216
      %p228 = scmp.eq.s32.totalorder %s53, 3
      %p229 = por %p227, %p228
      %p231 = scmp.ne.s32.totalorder %s216, %s230
      %p232 = scmp.eq.s32.totalorder %s53, 0
      %p233 = por %p231, %p232
      %s234 = ssub.s32 %s55, %s62
      %p235 = scmp.eq.s32.totalorder %s234, 0
      %s237 = sadd.s32 %s236, 1
      %s238 = scalar_select %p235, %s236, %s237
      %p241 = pneg %p235
      %p242 = scmp.eq.s32.totalorder %s47, 3
      %p243 = por %p241, %p242
      %p244 = scmp.ne.s32.totalorder %s236, %s239
      %p245 = scmp.eq.s32.totalorder %s47, 0
      %p246 = por %p244, %p245
      %p247 = scmp.ne.s32.totalorder %s236, %s239
      %p248 = scmp.eq.s32.totalorder %s52, 3
      %p249 = por %p247, %p248
      %p250 = scmp.ne.s32.totalorder %s239, %s240
      %p251 = scmp.eq.s32.totalorder %s52, 0
      %p252 = por %p250, %p251
      %p253 = scmp.ne.s32.totalorder %s239, %s240
      %p254 = scmp.eq.s32.totalorder %s53, 3
      %p255 = por %p253, %p254
      %p257 = scmp.ne.s32.totalorder %s240, %s256
      %p258 = scmp.eq.s32.totalorder %s53, 0
      %p259 = por %p257, %p258
      %s260 = ssub.s32 %s55, %s62
      %p261 = scmp.eq.s32.totalorder %s260, 0
      %s263 = sadd.s32 %s262, 1
      %s264 = scalar_select %p261, %s262, %s263
      %p267 = pneg %p261
      %p268 = scmp.eq.s32.totalorder %s47, 3
      %p269 = por %p267, %p268
      %p270 = scmp.ne.s32.totalorder %s262, %s265
      %p271 = scmp.eq.s32.totalorder %s47, 0
      %p272 = por %p270, %p271
      %p273 = scmp.ne.s32.totalorder %s262, %s265
      %p274 = scmp.eq.s32.totalorder %s52, 3
      %p275 = por %p273, %p274
      %p276 = scmp.ne.s32.totalorder %s265, %s266
      %p277 = scmp.eq.s32.totalorder %s52, 0
      %p278 = por %p276, %p277
      %p279 = scmp.ne.s32.totalorder %s265, %s266
      %p280 = scmp.eq.s32.totalorder %s53, 3
      %p281 = por %p279, %p280
      %p283 = scmp.ne.s32.totalorder %s266, %s282
      %p284 = scmp.eq.s32.totalorder %s53, 0
      %p285 = por %p283, %p284
      %s286 = ssub.s32 %s55, %s62
      %p287 = scmp.eq.s32.totalorder %s286, 0
      %s289 = sadd.s32 %s288, 1
      %s290 = scalar_select %p287, %s288, %s289
      %p293 = pneg %p287
      %p294 = scmp.eq.s32.totalorder %s47, 3
      %p295 = por %p293, %p294
      %p296 = scmp.ne.s32.totalorder %s288, %s291
      %p297 = scmp.eq.s32.totalorder %s47, 0
      %p298 = por %p296, %p297
      %p299 = scmp.ne.s32.totalorder %s288, %s291
      %p300 = scmp.eq.s32.totalorder %s52, 3
      %p301 = por %p299, %p300
      %p302 = scmp.ne.s32.totalorder %s291, %s292
      %p303 = scmp.eq.s32.totalorder %s52, 0
      %p304 = por %p302, %p303
      %p305 = scmp.ne.s32.totalorder %s291, %s292
      %p306 = scmp.eq.s32.totalorder %s53, 3
      %p307 = por %p305, %p306
      %p309 = scmp.ne.s32.totalorder %s292, %s308
      %p310 = scmp.eq.s32.totalorder %s53, 0
      %p311 = por %p309, %p310
      %s312 = ssub.s32 %s55, %s62
      %p313 = scmp.eq.s32.totalorder %s312, 0
      %s315 = sadd.s32 %s314, 1
      %s316 = scalar_select %p313, %s314, %s315
      %p319 = pneg %p313
      %p320 = scmp.eq.s32.totalorder %s47, 3
      %p321 = por %p319, %p320
      %p322 = scmp.ne.s32.totalorder %s314, %s317
      %p323 = scmp.eq.s32.totalorder %s47, 0
      %p324 = por %p322, %p323
      %p325 = scmp.ne.s32.totalorder %s314, %s317
      %p326 = scmp.eq.s32.totalorder %s52, 3
      %p327 = por %p325, %p326
      %p328 = scmp.ne.s32.totalorder %s317, %s318
      %p329 = scmp.eq.s32.totalorder %s52, 0
      %p330 = por %p328, %p329
      %p331 = scmp.ne.s32.totalorder %s317, %s318
      %p332 = scmp.eq.s32.totalorder %s53, 3
      %p333 = por %p331, %p332
      %p335 = scmp.ne.s32.totalorder %s318, %s334
      %p336 = scmp.eq.s32.totalorder %s53, 0
      %p337 = por %p335, %p336
      %s338 = ssub.s32 %s55, %s62
      %p339 = scmp.eq.s32.totalorder %s338, 0
      %s341 = sadd.s32 %s340, 1
      %s342 = scalar_select %p339, %s340, %s341
      %p345 = pneg %p339
      %p346 = scmp.eq.s32.totalorder %s47, 3
      %p347 = por %p345, %p346
      %p348 = scmp.ne.s32.totalorder %s340, %s343
      %p349 = scmp.eq.s32.totalorder %s47, 0
      %p350 = por %p348, %p349
      %p351 = scmp.ne.s32.totalorder %s340, %s343
      %p352 = scmp.eq.s32.totalorder %s52, 3
      %p353 = por %p351, %p352
      %p354 = scmp.ne.s32.totalorder %s343, %s344
      %p355 = scmp.eq.s32.totalorder %s52, 0
      %p356 = por %p354, %p355
      %p357 = scmp.ne.s32.totalorder %s343, %s344
      %p358 = scmp.eq.s32.totalorder %s53, 3
      %p359 = por %p357, %p358
      %p361 = scmp.ne.s32.totalorder %s344, %s360
      %p362 = scmp.eq.s32.totalorder %s53, 0
      %p363 = por %p361, %p362
      %s364 = ssub.s32 %s55, %s62
      %p365 = scmp.eq.s32.totalorder %s364, 0
      %s367 = sadd.s32 %s366, 1
      %s368 = scalar_select %p365, %s366, %s367
      %p371 = pneg %p365
      %p372 = scmp.eq.s32.totalorder %s47, 3
      %p373 = por %p371, %p372
      %p374 = scmp.ne.s32.totalorder %s366, %s369
      %p375 = scmp.eq.s32.totalorder %s47, 0
      %p376 = por %p374, %p375
      %p377 = scmp.ne.s32.totalorder %s366, %s369
      %p378 = scmp.eq.s32.totalorder %s52, 3
      %p379 = por %p377, %p378
      %p380 = scmp.ne.s32.totalorder %s369, %s370
      %p381 = scmp.eq.s32.totalorder %s52, 0
      %p382 = por %p380, %p381
      %p383 = scmp.ne.s32.totalorder %s369, %s370
      %p384 = scmp.eq.s32.totalorder %s53, 3
      %p385 = por %p383, %p384
      %p387 = scmp.ne.s32.totalorder %s370, %s386
      %p388 = scmp.eq.s32.totalorder %s53, 0
      %p389 = por %p387, %p388
      %s390 = ssub.s32 %s55, %s62
      %p391 = scmp.eq.s32.totalorder %s390, 0
      %s393 = sadd.s32 %s392, 1
      %s394 = scalar_select %p391, %s392, %s393
      %p397 = pneg %p391
      %p398 = scmp.eq.s32.totalorder %s47, 3
      %p399 = por %p397, %p398
      %p400 = scmp.ne.s32.totalorder %s392, %s395
      %p401 = scmp.eq.s32.totalorder %s47, 0
      %p402 = por %p400, %p401
      %p403 = scmp.ne.s32.totalorder %s392, %s395
      %p404 = scmp.eq.s32.totalorder %s52, 3
      %p405 = por %p403, %p404
      %p406 = scmp.ne.s32.totalorder %s395, %s396
      %p407 = scmp.eq.s32.totalorder %s52, 0
      %p408 = por %p406, %p407
      %p409 = scmp.ne.s32.totalorder %s395, %s396
      %p410 = scmp.eq.s32.totalorder %s53, 3
      %p411 = por %p409, %p410
      %p413 = scmp.ne.s32.totalorder %s396, %s412
      %p414 = scmp.eq.s32.totalorder %s53, 0
      %p415 = por %p413, %p414
      %s417 = sadd.s32 %s416, 1
      %p420 = scmp.eq.s32.totalorder %s47, 3
      %p421 = scmp.ne.s32.totalorder %s416, %s418
      %p422 = scmp.eq.s32.totalorder %s47, 0
      %p423 = por %p421, %p422
      %p424 = scmp.ne.s32.totalorder %s416, %s418
      %p425 = scmp.eq.s32.totalorder %s52, 3
      %p426 = por %p424, %p425
      %p427 = scmp.ne.s32.totalorder %s418, %s419
      %p428 = scmp.eq.s32.totalorder %s52, 0
      %p429 = por %p427, %p428
      %p430 = scmp.ne.s32.totalorder %s418, %s419
      %p431 = scmp.eq.s32.totalorder %s53, 3
      %p432 = por %p430, %p431
      %p434 = scmp.ne.s32.totalorder %s419, %s433
      %p435 = scmp.eq.s32.totalorder %s53, 0
      %p436 = por %p434, %p435
      %s438 = sadd.s32 %s437, 1
      %p441 = scmp.eq.s32.totalorder %s47, 3
      %p442 = scmp.ne.s32.totalorder %s437, %s439
      %p443 = scmp.eq.s32.totalorder %s47, 0
      %p444 = por %p442, %p443
      %p445 = scmp.ne.s32.totalorder %s437, %s439
      %p446 = scmp.eq.s32.totalorder %s52, 3
      %p447 = por %p445, %p446
      %p448 = scmp.ne.s32.totalorder %s439, %s440
      %p449 = scmp.eq.s32.totalorder %s52, 0
      %p450 = por %p448, %p449
      %p451 = scmp.ne.s32.totalorder %s439, %s440
      %p452 = scmp.eq.s32.totalorder %s53, 3
      %p453 = por %p451, %p452
      %p455 = scmp.ne.s32.totalorder %s440, %s454
      %p456 = scmp.eq.s32.totalorder %s53, 0
      %p457 = por %p455, %p456
      %s459 = sadd.s32 %s458, 1
      %p462 = scmp.eq.s32.totalorder %s47, 3
      %p463 = scmp.ne.s32.totalorder %s458, %s460
      %p464 = scmp.eq.s32.totalorder %s47, 0
      %p465 = por %p463, %p464
      %p466 = scmp.ne.s32.totalorder %s458, %s460
      %p467 = scmp.eq.s32.totalorder %s52, 3
      %p468 = por %p466, %p467
      %p469 = scmp.ne.s32.totalorder %s460, %s461
      %p470 = scmp.eq.s32.totalorder %s52, 0
      %p471 = por %p469, %p470
      %p472 = scmp.ne.s32.totalorder %s460, %s461
      %p473 = scmp.eq.s32.totalorder %s53, 3
      %p474 = por %p472, %p473
      %p476 = scmp.ne.s32.totalorder %s461, %s475
      %p477 = scmp.eq.s32.totalorder %s53, 0
      %p478 = por %p476, %p477
      %s479 = ssub.s32 %s54, %s66
      %p480 = scmp.eq.s32.totalorder %s479, 0
      %s482 = sadd.s32 %s481, 1
      %s483 = scalar_select %p480, %s481, %s482
      %p486 = pneg %p480
      %p487 = scmp.eq.s32.totalorder %s47, 3
      %p488 = por %p486, %p487
      %p489 = scmp.ne.s32.totalorder %s481, %s484
      %p490 = scmp.eq.s32.totalorder %s47, 0
      %p491 = por %p489, %p490
      %p492 = scmp.ne.s32.totalorder %s481, %s484
      %p493 = scmp.eq.s32.totalorder %s52, 3
      %p494 = por %p492, %p493
      %p495 = scmp.ne.s32.totalorder %s484, %s485
      %p496 = scmp.eq.s32.totalorder %s52, 0
      %p497 = por %p495, %p496
      %p498 = scmp.ne.s32.totalorder %s484, %s485
      %p499 = scmp.eq.s32.totalorder %s53, 3
      %p500 = por %p498, %p499
      %p502 = scmp.ne.s32.totalorder %s485, %s501
      %p503 = scmp.eq.s32.totalorder %s53, 0
      %p504 = por %p502, %p503
      %s505 = ssub.s32 %s54, %s66
      %p506 = scmp.eq.s32.totalorder %s505, 0
      %s508 = sadd.s32 %s507, 1
      %s509 = scalar_select %p506, %s507, %s508
      %p512 = pneg %p506
      %p513 = scmp.eq.s32.totalorder %s47, 3
      %p514 = por %p512, %p513
      %p515 = scmp.ne.s32.totalorder %s507, %s510
      %p516 = scmp.eq.s32.totalorder %s47, 0
      %p517 = por %p515, %p516
      %p518 = scmp.ne.s32.totalorder %s507, %s510
      %p519 = scmp.eq.s32.totalorder %s52, 3
      %p520 = por %p518, %p519
      %p521 = scmp.ne.s32.totalorder %s510, %s511
      %p522 = scmp.eq.s32.totalorder %s52, 0
      %p523 = por %p521, %p522
      %p524 = scmp.ne.s32.totalorder %s510, %s511
      %p525 = scmp.eq.s32.totalorder %s53, 3
      %p526 = por %p524, %p525
      %p528 = scmp.ne.s32.totalorder %s511, %s527
      %p529 = scmp.eq.s32.totalorder %s53, 0
      %p530 = por %p528, %p529
      %p531 = scmp.le.s32.totalorder 1, %s47
      %p532 = scmp.lt.s32.totalorder %s47, 5
      %p533 = pnand %p531, %p532
      %p534 = pneg %p533
      // Predicated region
      $region9: #{tpu_custom_call.1} parent=5 // pred_check
        _
      $region10: #{tpu_custom_call.1} parent=5 // pred_check_branch
        %536 = sbr.rel (%p533) target = $region12
      $region11: #{tpu_custom_call.1} parent=5 // pred_region
        %s537 = ssub.s32 %s47, 1
        // Predicated region
        $region13: #{tpu_custom_call.1} parent=11 // pred_check
          %p538 = pneg %p184
        $region14: #{tpu_custom_call.1} parent=11 // pred_check_branch
          %540 = sbr.rel (%p538) target = $region16
        $region15: #{tpu_custom_call.1} parent=11 // pred_region
          %s542 = ssub.s32 16384, 16384
          %543 = vsyncadd [#allocation7], %s542
          %s544 = sshll.u32 [#allocation8], 4
          %s545 = int_to_ptr.vmem [resolvable:$true] %s544
          %550 = dma.hbm_to_vmem [thread:$0]  %s4, 16384, %s545, [#allocation7], 64, 64, 4
        $region16: #{tpu_custom_call.1} parent=11 // pred_fallthru
          _
        // Predicated region
        $region17: #{tpu_custom_call.1} parent=11 // pred_check
          %p551 = pneg %p205
        $region18: #{tpu_custom_call.1} parent=11 // pred_check_branch
          %553 = sbr.rel (%p551) target = $region20
        $region19: #{tpu_custom_call.1} parent=11 // pred_region
          _
        $region20: #{tpu_custom_call.1} parent=11 // pred_fallthru
          _
        // Predicated region
        $region21: #{tpu_custom_call.1} parent=11 // pred_check
          %p554 = pneg %p226
        $region22: #{tpu_custom_call.1} parent=11 // pred_check_branch
          %556 = sbr.rel (%p554) target = $region24
        $region23: #{tpu_custom_call.1} parent=11 // pred_region
          _
        $region24: #{tpu_custom_call.1} parent=11 // pred_fallthru
          _
        // Predicated region
        $region25: #{tpu_custom_call.1} parent=11 // pred_check
          %p557 = pneg %p429
        $region26: #{tpu_custom_call.1} parent=11 // pred_check_branch
          %559 = sbr.rel (%p557) target = $region28
        $region27: #{tpu_custom_call.1} parent=11 // pred_region
          _
        $region28: #{tpu_custom_call.1} parent=11 // pred_fallthru
          _
        // Predicated region
        $region29: #{tpu_custom_call.1} parent=11 // pred_check
          %p560 = pneg %p450
        $region30: #{tpu_custom_call.1} parent=11 // pred_check_branch
          %562 = sbr.rel (%p560) target = $region32
        $region31: #{tpu_custom_call.1} parent=11 // pred_region
          %s564 = ssub.s32 1024, 1024
          %565 = vsyncadd [#allocation19], %s564
          %s566 = sshll.u32 [#allocation18], 4
          %s567 = int_to_ptr.vmem [resolvable:$true] %s566
          %572 = dma.hbm_to_vmem [thread:$0]  %s15, 1024, %s567, [#allocation19], 64, 64, 4
        $region32: #{tpu_custom_call.1} parent=11 // pred_fallthru
          _
        // Predicated region
        $region33: #{tpu_custom_call.1} parent=11 // pred_check
          %p573 = pneg %p471
        $region34: #{tpu_custom_call.1} parent=11 // pred_check_branch
          %575 = sbr.rel (%p573) target = $region36
        $region35: #{tpu_custom_call.1} parent=11 // pred_region
          _
        $region36: #{tpu_custom_call.1} parent=11 // pred_fallthru
          _
      $region12: #{tpu_custom_call.1} parent=5 // pred_fallthru
        _
      %p576 = scmp.lt.s32.totalorder %s47, 4
      // Predicated region
      $region37: #{tpu_custom_call.1} parent=5 // pred_check
        %p577 = pneg %p576
      $region38: #{tpu_custom_call.1} parent=5 // pred_check_branch
        %579 = sbr.rel (%p577) target = $region40
      $region39: #{tpu_custom_call.1} parent=5 // pred_region
        // Predicated region
        $region41: #{tpu_custom_call.1} parent=39 // pred_check
          %p580 = pneg %p79
        $region42: #{tpu_custom_call.1} parent=39 // pred_check_branch
          %582 = sbr.rel (%p580) target = $region44
        $region43: #{tpu_custom_call.1} parent=39 // pred_region
          %p583 = scmp.lt.s32.totalorder %s54, 1
          %s584 = scalar_select %p583, %s54, 1
          %s585 = smul.addr %s584, 8
          %s586 = scalar_lea.vmem %s0, %s585
        $region44: #{tpu_custom_call.1} parent=39 // pred_fallthru
          _
        // Predicated region
        $region45: #{tpu_custom_call.1} parent=39 // pred_check
          %p587 = pneg %p105
        $region46: #{tpu_custom_call.1} parent=39 // pred_check_branch
          %589 = sbr.rel (%p587) target = $region48
        $region47: #{tpu_custom_call.1} parent=39 // pred_region
          %s590 = sand.u32 %s95, 1
          %s591 = scalar_lea.sflag [#allocation4], %s590
          %s592 = sand.u32 %s95, 1
          %s593 = scalar_lea.vmem [#allocation3], %s592
          %s595 = ssub.s32 16, 16
          %596 = vsyncadd %s591, %s595
          %s597 = smul.addr %s54, 16
          %s598 = scalar_lea.hbm %s1, %s597
          %s600 = sshll.u32 %s593, 4
          %s601 = int_to_ptr.vmem [resolvable:$true] %s600
          %603 = dma.hbm_to_vmem [thread:$0]  %s598, 16, %s601, %s591
        $region48: #{tpu_custom_call.1} parent=39 // pred_fallthru
          _
        // Predicated region
        $region49: #{tpu_custom_call.1} parent=39 // pred_check
          %p604 = pneg %p131
        $region50: #{tpu_custom_call.1} parent=39 // pred_check_branch
          %606 = sbr.rel (%p604) target = $region52
        $region51: #{tpu_custom_call.1} parent=39 // pred_region
          %s607 = sand.u32 %s47, 1
          %s608 = scalar_lea.sflag [#allocation7], %s607
          %s609 = sand.u32 %s121, 1
          %s610 = smul.addr %s609, 64
          %s611 = scalar_lea.vmem [#allocation6], %s610
          %s613 = ssub.s32 1024, 1024
          %614 = vsyncadd %s608, %s613
          %s615 = smul.addr %s54, 16
          %s616 = smul.addr %s615, 64
          %s617 = scalar_lea.hbm %s2, %s616
          %s619 = sshll.u32 %s611, 4
          %s620 = int_to_ptr.vmem [resolvable:$true] %s619
          %622 = dma.hbm_to_vmem [thread:$0]  %s617, 1024, %s620, %s608
        $region52: #{tpu_custom_call.1} parent=39 // pred_fallthru
          _
        // Predicated region
        $region53: #{tpu_custom_call.1} parent=39 // pred_check
          %p623 = pneg %p157
        $region54: #{tpu_custom_call.1} parent=39 // pred_check_branch
          %625 = sbr.rel (%p623) target = $region56
        $region55: #{tpu_custom_call.1} parent=39 // pred_region
          %p626 = scmp.lt.s32.totalorder %s54, 1
          %s627 = scalar_select %p626, %s54, 1
          %s628 = smul.addr %s627, 8
          %s629 = scalar_lea.vmem %s3, %s628
        $region56: #{tpu_custom_call.1} parent=39 // pred_fallthru
          _
        // Predicated region
        $region57: #{tpu_custom_call.1} parent=39 // pred_check
          %p630 = pneg %p246
        $region58: #{tpu_custom_call.1} parent=39 // pred_check_branch
          %632 = sbr.rel (%p630) target = $region60
        $region59: #{tpu_custom_call.1} parent=39 // pred_region
          %s633 = sand.u32 %s47, 1
          %s634 = scalar_lea.sflag [#allocation10], %s633
          %s635 = sand.u32 %s236, 1
          %s636 = smul.addr %s635, 192
          %s637 = scalar_lea.vmem [#allocation9], %s636
          %s639 = ssub.s32 3072, 3072
          %640 = vsyncadd %s634, %s639
          %s641 = smul.addr %s55, 48
          %s642 = smul.addr %s641, 64
          %s643 = scalar_lea.hbm %s7, %s642
          %s644 = sshll.u32 %s637, 4
          %s645 = int_to_ptr.vmem [resolvable:$true] %s644
          %650 = dma.hbm_to_vmem [thread:$0]  %s643, 3072, %s645, %s634, 192, 192, 12
        $region60: #{tpu_custom_call.1} parent=39 // pred_fallthru
          _
        // Predicated region
        $region61: #{tpu_custom_call.1} parent=39 // pred_check
          %p651 = pneg %p272
        $region62: #{tpu_custom_call.1} parent=39 // pred_check_branch
          %653 = sbr.rel (%p651) target = $region64
        $region63: #{tpu_custom_call.1} parent=39 // pred_region
          %s654 = sand.u32 %s47, 1
          %s655 = scalar_lea.sflag [#allocation10], %s654
          %s656 = sand.u32 %s262, 1
          %s657 = smul.addr %s656, 3
          %s658 = scalar_lea.vmem [#allocation11], %s657
          %s660 = ssub.s32 48, 48
          %661 = vsyncadd %s655, %s660
          %s662 = smul.addr %s55, 3
          %s663 = smul.addr %s662, 16
          %s664 = scalar_lea.hbm %s8, %s663
          %s666 = sshll.u32 %s658, 4
          %s667 = int_to_ptr.vmem [resolvable:$true] %s666
          %669 = dma.hbm_to_vmem [thread:$0]  %s664, 48, %s667, %s655
        $region64: #{tpu_custom_call.1} parent=39 // pred_fallthru
          _
        // Predicated region
        $region65: #{tpu_custom_call.1} parent=39 // pred_check
          %p670 = pneg %p298
        $region66: #{tpu_custom_call.1} parent=39 // pred_check_branch
          %672 = sbr.rel (%p670) target = $region68
        $region67: #{tpu_custom_call.1} parent=39 // pred_region
          %s673 = sand.u32 %s47, 1
          %s674 = scalar_lea.sflag [#allocation13], %s673
          %s675 = sand.u32 %s288, 1
          %s676 = smul.addr %s675, 64
          %s677 = scalar_lea.vmem [#allocation12], %s676
          %s679 = ssub.s32 1024, 1024
          %680 = vsyncadd %s674, %s679
          %s681 = smul.addr %s55, 16
          %s682 = smul.addr %s681, 64
          %s683 = scalar_lea.hbm %s9, %s682
          %s684 = sshll.u32 %s677, 4
          %s685 = int_to_ptr.vmem [resolvable:$true] %s684
          %690 = dma.hbm_to_vmem [thread:$0]  %s683, 1024, %s685, %s674, 64, 64, 4
        $region68: #{tpu_custom_call.1} parent=39 // pred_fallthru
          _
        // Predicated region
        $region69: #{tpu_custom_call.1} parent=39 // pred_check
          %p691 = pneg %p324
        $region70: #{tpu_custom_call.1} parent=39 // pred_check_branch
          %693 = sbr.rel (%p691) target = $region72
        $region71: #{tpu_custom_call.1} parent=39 // pred_region
          %p694 = scmp.lt.s32.totalorder %s55, 1
          %s695 = scalar_select %p694, %s55, 1
          %s696 = smul.addr %s695, 8
          %s697 = scalar_lea.vmem %s10, %s696
        $region72: #{tpu_custom_call.1} parent=39 // pred_fallthru
          _
        // Predicated region
        $region73: #{tpu_custom_call.1} parent=39 // pred_check
          %p698 = pneg %p350
        $region74: #{tpu_custom_call.1} parent=39 // pred_check_branch
          %700 = sbr.rel (%p698) target = $region76
        $region75: #{tpu_custom_call.1} parent=39 // pred_region
          %s701 = sand.u32 %s47, 1
          %s702 = scalar_lea.sflag [#allocation13], %s701
          %s703 = sand.u32 %s340, 1
          %s704 = smul.addr %s703, 128
          %s705 = scalar_lea.vmem [#allocation14], %s704
          %s707 = ssub.s32 2048, 2048
          %708 = vsyncadd %s702, %s707
          %s709 = smul.addr %s55, 32
          %s710 = smul.addr %s709, 64
          %s711 = scalar_lea.hbm %s11, %s710
          %s712 = sshll.u32 %s705, 4
          %s713 = int_to_ptr.vmem [resolvable:$true] %s712
          %718 = dma.hbm_to_vmem [thread:$0]  %s711, 2048, %s713, %s702, 128, 128, 8
        $region76: #{tpu_custom_call.1} parent=39 // pred_fallthru
          _
        // Predicated region
        $region77: #{tpu_custom_call.1} parent=39 // pred_check
          %p719 = pneg %p376
        $region78: #{tpu_custom_call.1} parent=39 // pred_check_branch
          %721 = sbr.rel (%p719) target = $region80
        $region79: #{tpu_custom_call.1} parent=39 // pred_region
          %s722 = sand.u32 %s47, 1
          %s723 = scalar_lea.sflag [#allocation16], %s722
          %s724 = sand.u32 %s366, 1
          %s725 = smul.addr %s724, 2
          %s726 = scalar_lea.vmem [#allocation15], %s725
          %s728 = ssub.s32 32, 32
          %729 = vsyncadd %s723, %s728
          %s730 = smul.addr %s55, 2
          %s731 = smul.addr %s730, 16
          %s732 = scalar_lea.hbm %s12, %s731
          %s734 = sshll.u32 %s726, 4
          %s735 = int_to_ptr.vmem [resolvable:$true] %s734
          %737 = dma.hbm_to_vmem [thread:$0]  %s732, 32, %s735, %s723
        $region80: #{tpu_custom_call.1} parent=39 // pred_fallthru
          _
        // Predicated region
        $region81: #{tpu_custom_call.1} parent=39 // pred_check
          %p738 = pneg %p402
        $region82: #{tpu_custom_call.1} parent=39 // pred_check_branch
          %740 = sbr.rel (%p738) target = $region84
        $region83: #{tpu_custom_call.1} parent=39 // pred_region
          %s741 = sand.u32 %s47, 1
          %s742 = scalar_lea.sflag [#allocation16], %s741
          %s743 = sand.u32 %s392, 1
          %s744 = smul.addr %s743, 128
          %s745 = scalar_lea.vmem [#allocation17], %s744
          %s747 = ssub.s32 2048, 2048
          %748 = vsyncadd %s742, %s747
          %s749 = smul.addr %s55, 32
          %s750 = smul.addr %s749, 64
          %s751 = scalar_lea.hbm %s13, %s750
          %s752 = sshll.u32 %s745, 4
          %s753 = int_to_ptr.vmem [resolvable:$true] %s752
          %758 = dma.hbm_to_vmem [thread:$0]  %s751, 2048, %s753, %s742, 64, 64, 4
        $region84: #{tpu_custom_call.1} parent=39 // pred_fallthru
          _
      $region40: #{tpu_custom_call.1} parent=5 // pred_fallthru
        _
      %p759 = scmp.le.s32.totalorder 1, %s47
      %p760 = scmp.lt.s32.totalorder %s47, 5
      %p761 = pnand %p759, %p760
      %p762 = pneg %p761
      // Predicated region
      $region85: #{tpu_custom_call.1} parent=5 // pred_check
        _
      $region86: #{tpu_custom_call.1} parent=5 // pred_check_branch
        %764 = sbr.rel (%p761) target = $region88
      $region87: #{tpu_custom_call.1} parent=5 // pred_region
        %s765 = ssub.s32 %s47, 1
        %s766 = sand.u32 %s98, 1
        %s767 = scalar_lea.sflag [#allocation4], %s766
        %s768 = sand.u32 %s98, 1
        %s769 = scalar_lea.vmem [#allocation3], %s768
        // Predicated region
        $region89: #{tpu_custom_call.1} parent=87 // pred_check
          %p770 = pneg %p111
        $region90: #{tpu_custom_call.1} parent=87 // pred_check_branch
          %772 = sbr.rel (%p770) target = $region92
        $region91: #{tpu_custom_call.1} parent=87 // pred_region
          %773 = dma.done %s767, 16
        $region92: #{tpu_custom_call.1} parent=87 // pred_fallthru
          _
        %s774 = sand.u32 %s52, 1
        %s775 = scalar_lea.sflag [#allocation7], %s774
        %s776 = sand.u32 %s124, 1
        %s777 = smul.addr %s776, 64
        %s778 = scalar_lea.vmem [#allocation6], %s777
        // Predicated region
        $region93: #{tpu_custom_call.1} parent=87 // pred_check
          %p779 = pneg %p137
        $region94: #{tpu_custom_call.1} parent=87 // pred_check_branch
          %781 = sbr.rel (%p779) target = $region96
        $region95: #{tpu_custom_call.1} parent=87 // pred_region
          %782 = dma.done %s775, 1024
        $region96: #{tpu_custom_call.1} parent=87 // pred_fallthru
          _
        // Predicated region
        $region97: #{tpu_custom_call.1} parent=87 // pred_check
          %p783 = pneg %p184
        $region98: #{tpu_custom_call.1} parent=87 // pred_check_branch
          %785 = sbr.rel (%p783) target = $region100
        $region99: #{tpu_custom_call.1} parent=87 // pred_region
          %786 = dma.done [#allocation7], 16384
        $region100: #{tpu_custom_call.1} parent=87 // pred_fallthru
          _
        %s787 = sand.u32 %s52, 1
        %s788 = scalar_lea.sflag [#allocation10], %s787
        %s789 = sand.u32 %s239, 1
        %s790 = smul.addr %s789, 192
        %s791 = scalar_lea.vmem [#allocation9], %s790
        // Predicated region
        $region101: #{tpu_custom_call.1} parent=87 // pred_check
          %p792 = pneg %p252
        $region102: #{tpu_custom_call.1} parent=87 // pred_check_branch
          %794 = sbr.rel (%p792) target = $region104
        $region103: #{tpu_custom_call.1} parent=87 // pred_region
          %795 = dma.done %s788, 3072
        $region104: #{tpu_custom_call.1} parent=87 // pred_fallthru
          _
        %s796 = sand.u32 %s52, 1
        %s797 = scalar_lea.sflag [#allocation10], %s796
        %s798 = sand.u32 %s265, 1
        %s799 = smul.addr %s798, 3
        %s800 = scalar_lea.vmem [#allocation11], %s799
        // Predicated region
        $region105: #{tpu_custom_call.1} parent=87 // pred_check
          %p801 = pneg %p278
        $region106: #{tpu_custom_call.1} parent=87 // pred_check_branch
          %803 = sbr.rel (%p801) target = $region108
        $region107: #{tpu_custom_call.1} parent=87 // pred_region
          %804 = dma.done %s797, 48
        $region108: #{tpu_custom_call.1} parent=87 // pred_fallthru
          _
        %s805 = sand.u32 %s52, 1
        %s806 = scalar_lea.sflag [#allocation13], %s805
        %s807 = sand.u32 %s291, 1
        %s808 = smul.addr %s807, 64
        %s809 = scalar_lea.vmem [#allocation12], %s808
        // Predicated region
        $region109: #{tpu_custom_call.1} parent=87 // pred_check
          %p810 = pneg %p304
        $region110: #{tpu_custom_call.1} parent=87 // pred_check_branch
          %812 = sbr.rel (%p810) target = $region112
        $region111: #{tpu_custom_call.1} parent=87 // pred_region
          %813 = dma.done %s806, 1024
        $region112: #{tpu_custom_call.1} parent=87 // pred_fallthru
          _
        %s814 = sand.u32 %s52, 1
        %s815 = scalar_lea.sflag [#allocation13], %s814
        %s816 = sand.u32 %s343, 1
        %s817 = smul.addr %s816, 128
        %s818 = scalar_lea.vmem [#allocation14], %s817
        // Predicated region
        $region113: #{tpu_custom_call.1} parent=87 // pred_check
          %p819 = pneg %p356
        $region114: #{tpu_custom_call.1} parent=87 // pred_check_branch
          %821 = sbr.rel (%p819) target = $region116
        $region115: #{tpu_custom_call.1} parent=87 // pred_region
          %822 = dma.done %s815, 2048
        $region116: #{tpu_custom_call.1} parent=87 // pred_fallthru
          _
        %s823 = sand.u32 %s52, 1
        %s824 = scalar_lea.sflag [#allocation16], %s823
        %s825 = sand.u32 %s369, 1
        %s826 = smul.addr %s825, 2
        %s827 = scalar_lea.vmem [#allocation15], %s826
        // Predicated region
        $region117: #{tpu_custom_call.1} parent=87 // pred_check
          %p828 = pneg %p382
        $region118: #{tpu_custom_call.1} parent=87 // pred_check_branch
          %830 = sbr.rel (%p828) target = $region120
        $region119: #{tpu_custom_call.1} parent=87 // pred_region
          %831 = dma.done %s824, 32
        $region120: #{tpu_custom_call.1} parent=87 // pred_fallthru
          _
        %s832 = sand.u32 %s52, 1
        %s833 = scalar_lea.sflag [#allocation16], %s832
        %s834 = sand.u32 %s395, 1
        %s835 = smul.addr %s834, 128
        %s836 = scalar_lea.vmem [#allocation17], %s835
        // Predicated region
        $region121: #{tpu_custom_call.1} parent=87 // pred_check
          %p837 = pneg %p408
        $region122: #{tpu_custom_call.1} parent=87 // pred_check_branch
          %839 = sbr.rel (%p837) target = $region124
        $region123: #{tpu_custom_call.1} parent=87 // pred_region
          %840 = dma.done %s833, 2048
        $region124: #{tpu_custom_call.1} parent=87 // pred_fallthru
          _
        // Predicated region
        $region125: #{tpu_custom_call.1} parent=87 // pred_check
          %p841 = pneg %p450
        $region126: #{tpu_custom_call.1} parent=87 // pred_check_branch
          %843 = sbr.rel (%p841) target = $region128
        $region127: #{tpu_custom_call.1} parent=87 // pred_region
          %844 = dma.done [#allocation19], 1024
        $region128: #{tpu_custom_call.1} parent=87 // pred_fallthru
          _
        %p845 = scmp.lt.s32.totalorder %s56, 1
        %s846 = scalar_select %p845, %s56, 1
        %s847 = smul.addr %s846, 8
        %s848 = scalar_lea.vmem %s0, %s847
        %p849 = pneg %p85
        %p850 = pneg %p82
        %s851 = sand.u32 %s98, 1
        %s852 = scalar_lea.sflag [#allocation4], %s851
        %s853 = sand.u32 %s98, 1
        %s854 = scalar_lea.vmem [#allocation3], %s853
        %p855 = pneg %p111
        %p856 = pneg %p108
        %s857 = sand.u32 %s52, 1
        %s858 = scalar_lea.sflag [#allocation7], %s857
        %s859 = sand.u32 %s124, 1
        %s860 = smul.addr %s859, 64
        %s861 = scalar_lea.vmem [#allocation6], %s860
        %p862 = pneg %p137
        %p863 = pneg %p134
        %p864 = scmp.lt.s32.totalorder %s56, 1
        %s865 = scalar_select %p864, %s56, 1
        %s866 = smul.addr %s865, 8
        %s867 = scalar_lea.vmem %s3, %s866
        %p868 = pneg %p163
        %p869 = pneg %p160
        %p870 = pneg %p184
        %p871 = pneg %p181
        %p872 = pneg %p205
        %p873 = pneg %p202
        %p874 = pneg %p226
        %p875 = pneg %p223
        %s876 = sand.u32 %s52, 1
        %s877 = scalar_lea.sflag [#allocation10], %s876
        %s878 = sand.u32 %s239, 1
        %s879 = smul.addr %s878, 192
        %s880 = scalar_lea.vmem [#allocation9], %s879
        %p881 = pneg %p252
        %p882 = pneg %p249
        %s883 = sand.u32 %s52, 1
        %s884 = scalar_lea.sflag [#allocation10], %s883
        %s885 = sand.u32 %s265, 1
        %s886 = smul.addr %s885, 3
        %s887 = scalar_lea.vmem [#allocation11], %s886
        %p888 = pneg %p278
        %p889 = pneg %p275
        %s890 = sand.u32 %s52, 1
        %s891 = scalar_lea.sflag [#allocation13], %s890
        %s892 = sand.u32 %s291, 1
        %s893 = smul.addr %s892, 64
        %s894 = scalar_lea.vmem [#allocation12], %s893
        %p895 = pneg %p304
        %p896 = pneg %p301
        %p897 = scmp.lt.s32.totalorder %s57, 1
        %s898 = scalar_select %p897, %s57, 1
        %s899 = smul.addr %s898, 8
        %s900 = scalar_lea.vmem %s10, %s899
        %p901 = pneg %p330
        %p902 = pneg %p327
        %s903 = sand.u32 %s52, 1
        %s904 = scalar_lea.sflag [#allocation13], %s903
        %s905 = sand.u32 %s343, 1
        %s906 = smul.addr %s905, 128
        %s907 = scalar_lea.vmem [#allocation14], %s906
        %p908 = pneg %p356
        %p909 = pneg %p353
        %s910 = sand.u32 %s52, 1
        %s911 = scalar_lea.sflag [#allocation16], %s910
        %s912 = sand.u32 %s369, 1
        %s913 = smul.addr %s912, 2
        %s914 = scalar_lea.vmem [#allocation15], %s913
        %p915 = pneg %p382
        %p916 = pneg %p379
        %s917 = sand.u32 %s52, 1
        %s918 = scalar_lea.sflag [#allocation16], %s917
        %s919 = sand.u32 %s395, 1
        %s920 = smul.addr %s919, 128
        %s921 = scalar_lea.vmem [#allocation17], %s920
        %p922 = pneg %p408
        %p923 = pneg %p405
        %p924 = pneg %p429
        %p925 = pneg %p426
        %p926 = pneg %p450
        %p927 = pneg %p447
        %p928 = pneg %p471
        %p929 = pneg %p468
        %p930 = pneg %p497
        %p931 = pneg %p494
        %s932 = sand.u32 %s484, 1
        %s933 = scalar_lea.sflag [#allocation5], %s932
        %s934 = sand.u32 %s484, 1
        %s935 = scalar_lea.vmem [#allocation20], %s934
        %p936 = pneg %p523
        %p937 = pneg %p520
        %s938 = sand.u32 %s510, 1
        %s939 = scalar_lea.sflag [#allocation22], %s938
        %s940 = sand.u32 %s510, 1
        %s941 = scalar_lea.vmem [#allocation21], %s940
        %p942 = scmp.lt.s32.totalorder %s56, 1
        %s943 = scalar_select %p942, %s56, 1
        %s944 = smul.addr %s943, 8
        %s945 = scalar_lea.vmem %s0, %s944
        %p946 = scmp.lt.s32.totalorder %s56, 1
        %s947 = scalar_select %p946, %s56, 1
        %s948 = smul.addr %s947, 8
        %s949 = scalar_lea.vmem %s3, %s948
        %p950 = scmp.lt.s32.totalorder %s57, 1
        %s951 = scalar_select %p950, %s57, 1
        %s952 = smul.addr %s951, 8
        %s953 = scalar_lea.vmem %s10, %s952
        %p955 = scmp.eq.s32.totalorder %s57, 0
        // Predicated region
        $region129: #{tpu_custom_call.1} parent=87 // pred_check
          %p956 = pneg %p955
        $region130: #{tpu_custom_call.1} parent=87 // pred_check_branch
          %958 = sbr.rel (%p956) target = $region132
        $region131: #{tpu_custom_call.1} parent=87 // pred_region
          %v959 = vld [vmem:[%s945] sm:$0xff]
          %960 = vst [vmem:[#allocation2] sm:$0xff] %v959
          %v961 = vld [vmem:[%s778] sm:$0xff]
          %v962 = vld [vmem:[%s778 + $0x8] sm:$0xff]
          %v963 = vld [vmem:[%s778 + $0x10] sm:$0xff]
          %v964 = vld [vmem:[%s778 + $0x18] sm:$0xff]
          %v965 = vld [vmem:[%s778 + $0x20] sm:$0xff]
          %v966 = vld [vmem:[%s778 + $0x28] sm:$0xff]
          %v967 = vld [vmem:[%s778 + $0x30] sm:$0xff]
          %v968 = vld [vmem:[%s778 + $0x38] sm:$0xff]
          %v969 = vld [vmem:[#allocation8] sm:$0xf]
          %v970 = vld [vmem:[#allocation8 + $0x4] sm:$0xf]
          %v971 = vld [vmem:[#allocation8 + $0x8] sm:$0xf]
          %v972 = vld [vmem:[#allocation8 + $0xc] sm:$0xf]
          %v973 = vld [vmem:[#allocation8 + $0x10] sm:$0xf]
          %v974 = vld [vmem:[#allocation8 + $0x14] sm:$0xf]
          %v975 = vld [vmem:[#allocation8 + $0x18] sm:$0xf]
          %v976 = vld [vmem:[#allocation8 + $0x1c] sm:$0xf]
          %v977 = vld [vmem:[#allocation8 + $0x20] sm:$0xf]
          %v978 = vld [vmem:[#allocation8 + $0x24] sm:$0xf]
          %v979 = vld [vmem:[#allocation8 + $0x28] sm:$0xf]
          %v980 = vld [vmem:[#allocation8 + $0x2c] sm:$0xf]
          %v981 = vld [vmem:[#allocation8 + $0x30] sm:$0xf]
          %v982 = vld [vmem:[#allocation8 + $0x34] sm:$0xf]
          %v983 = vld [vmem:[#allocation8 + $0x38] sm:$0xf]
          %v984 = vld [vmem:[#allocation8 + $0x3c] sm:$0xf]
          %v985 = vld [vmem:[#allocation8 + $0x40] sm:$0xf]
          %v986 = vld [vmem:[#allocation8 + $0x44] sm:$0xf]
          %v987 = vld [vmem:[#allocation8 + $0x48] sm:$0xf]
          %v988 = vld [vmem:[#allocation8 + $0x4c] sm:$0xf]
          %v989 = vld [vmem:[#allocation8 + $0x50] sm:$0xf]
          %v990 = vld [vmem:[#allocation8 + $0x54] sm:$0xf]
          %v991 = vld [vmem:[#allocation8 + $0x58] sm:$0xf]
          %v992 = vld [vmem:[#allocation8 + $0x5c] sm:$0xf]
          %v993 = vld [vmem:[#allocation8 + $0x60] sm:$0xf]
          %v994 = vld [vmem:[#allocation8 + $0x64] sm:$0xf]
          %v995 = vld [vmem:[#allocation8 + $0x68] sm:$0xf]
          %v996 = vld [vmem:[#allocation8 + $0x6c] sm:$0xf]
          %v997 = vld [vmem:[#allocation8 + $0x70] sm:$0xf]
          %v998 = vld [vmem:[#allocation8 + $0x74] sm:$0xf]
          %v999 = vld [vmem:[#allocation8 + $0x78] sm:$0xf]
          %v1000 = vld [vmem:[#allocation8 + $0x7c] sm:$0xf]
          %v1001 = vld [vmem:[#allocation8 + $0x80] sm:$0xf]
          %v1002 = vld [vmem:[#allocation8 + $0x84] sm:$0xf]
          %v1003 = vld [vmem:[#allocation8 + $0x88] sm:$0xf]
          %v1004 = vld [vmem:[#allocation8 + $0x8c] sm:$0xf]
          %v1005 = vld [vmem:[#allocation8 + $0x90] sm:$0xf]
          %v1006 = vld [vmem:[#allocation8 + $0x94] sm:$0xf]
          %v1007 = vld [vmem:[#allocation8 + $0x98] sm:$0xf]
          %v1008 = vld [vmem:[#allocation8 + $0x9c] sm:$0xf]
          %v1009 = vld [vmem:[#allocation8 + $0xa0] sm:$0xf]
          %v1010 = vld [vmem:[#allocation8 + $0xa4] sm:$0xf]
          %v1011 = vld [vmem:[#allocation8 + $0xa8] sm:$0xf]
          %v1012 = vld [vmem:[#allocation8 + $0xac] sm:$0xf]
          %v1013 = vld [vmem:[#allocation8 + $0xb0] sm:$0xf]
          %v1014 = vld [vmem:[#allocation8 + $0xb4] sm:$0xf]
          %v1015 = vld [vmem:[#allocation8 + $0xb8] sm:$0xf]
          %v1016 = vld [vmem:[#allocation8 + $0xbc] sm:$0xf]
          %v1017 = vld [vmem:[#allocation8 + $0xc0] sm:$0xf]
          %v1018 = vld [vmem:[#allocation8 + $0xc4] sm:$0xf]
          %v1019 = vld [vmem:[#allocation8 + $0xc8] sm:$0xf]
          %v1020 = vld [vmem:[#allocation8 + $0xcc] sm:$0xf]
          %v1021 = vld [vmem:[#allocation8 + $0xd0] sm:$0xf]
          %v1022 = vld [vmem:[#allocation8 + $0xd4] sm:$0xf]
          %v1023 = vld [vmem:[#allocation8 + $0xd8] sm:$0xf]
          %v1024 = vld [vmem:[#allocation8 + $0xdc] sm:$0xf]
          %v1025 = vld [vmem:[#allocation8 + $0xe0] sm:$0xf]
          %v1026 = vld [vmem:[#allocation8 + $0xe4] sm:$0xf]
          %v1027 = vld [vmem:[#allocation8 + $0xe8] sm:$0xf]
          %v1028 = vld [vmem:[#allocation8 + $0xec] sm:$0xf]
          %v1029 = vld [vmem:[#allocation8 + $0xf0] sm:$0xf]
          %v1030 = vld [vmem:[#allocation8 + $0xf4] sm:$0xf]
          %v1031 = vld [vmem:[#allocation8 + $0xf8] sm:$0xf]
          %v1032 = vld [vmem:[#allocation8 + $0xfc] sm:$0xf]
          %v1033 = vld [vmem:[#allocation8 + $0x100] sm:$0xf]
          %v1034 = vld [vmem:[#allocation8 + $0x104] sm:$0xf]
          %v1035 = vld [vmem:[#allocation8 + $0x108] sm:$0xf]
          %v1036 = vld [vmem:[#allocation8 + $0x10c] sm:$0xf]
          %v1037 = vld [vmem:[#allocation8 + $0x110] sm:$0xf]
          %v1038 = vld [vmem:[#allocation8 + $0x114] sm:$0xf]
          %v1039 = vld [vmem:[#allocation8 + $0x118] sm:$0xf]
          %v1040 = vld [vmem:[#allocation8 + $0x11c] sm:$0xf]
          %v1041 = vld [vmem:[#allocation8 + $0x120] sm:$0xf]
          %v1042 = vld [vmem:[#allocation8 + $0x124] sm:$0xf]
          %v1043 = vld [vmem:[#allocation8 + $0x128] sm:$0xf]
          %v1044 = vld [vmem:[#allocation8 + $0x12c] sm:$0xf]
          %v1045 = vld [vmem:[#allocation8 + $0x130] sm:$0xf]
          %v1046 = vld [vmem:[#allocation8 + $0x134] sm:$0xf]
          %v1047 = vld [vmem:[#allocation8 + $0x138] sm:$0xf]
          %v1048 = vld [vmem:[#allocation8 + $0x13c] sm:$0xf]
          %v1049 = vld [vmem:[#allocation8 + $0x140] sm:$0xf]
          %v1050 = vld [vmem:[#allocation8 + $0x144] sm:$0xf]
          %v1051 = vld [vmem:[#allocation8 + $0x148] sm:$0xf]
          %v1052 = vld [vmem:[#allocation8 + $0x14c] sm:$0xf]
          %v1053 = vld [vmem:[#allocation8 + $0x150] sm:$0xf]
          %v1054 = vld [vmem:[#allocation8 + $0x154] sm:$0xf]
          %v1055 = vld [vmem:[#allocation8 + $0x158] sm:$0xf]
          %v1056 = vld [vmem:[#allocation8 + $0x15c] sm:$0xf]
          %v1057 = vld [vmem:[#allocation8 + $0x160] sm:$0xf]
          %v1058 = vld [vmem:[#allocation8 + $0x164] sm:$0xf]
          %v1059 = vld [vmem:[#allocation8 + $0x168] sm:$0xf]
          %v1060 = vld [vmem:[#allocation8 + $0x16c] sm:$0xf]
          %v1061 = vld [vmem:[#allocation8 + $0x170] sm:$0xf]
          %v1062 = vld [vmem:[#allocation8 + $0x174] sm:$0xf]
          %v1063 = vld [vmem:[#allocation8 + $0x178] sm:$0xf]
          %v1064 = vld [vmem:[#allocation8 + $0x17c] sm:$0xf]
          %v1065 = vld [vmem:[#allocation8 + $0x180] sm:$0xf]
          %v1066 = vld [vmem:[#allocation8 + $0x184] sm:$0xf]
          %v1067 = vld [vmem:[#allocation8 + $0x188] sm:$0xf]
          %v1068 = vld [vmem:[#allocation8 + $0x18c] sm:$0xf]
          %v1069 = vld [vmem:[#allocation8 + $0x190] sm:$0xf]
          %v1070 = vld [vmem:[#allocation8 + $0x194] sm:$0xf]
          %v1071 = vld [vmem:[#allocation8 + $0x198] sm:$0xf]
          %v1072 = vld [vmem:[#allocation8 + $0x19c] sm:$0xf]
          %v1073 = vld [vmem:[#allocation8 + $0x1a0] sm:$0xf]
          %v1074 = vld [vmem:[#allocation8 + $0x1a4] sm:$0xf]
          %v1075 = vld [vmem:[#allocation8 + $0x1a8] sm:$0xf]
          %v1076 = vld [vmem:[#allocation8 + $0x1ac] sm:$0xf]
          %v1077 = vld [vmem:[#allocation8 + $0x1b0] sm:$0xf]
          %v1078 = vld [vmem:[#allocation8 + $0x1b4] sm:$0xf]
          %v1079 = vld [vmem:[#allocation8 + $0x1b8] sm:$0xf]
          %v1080 = vld [vmem:[#allocation8 + $0x1bc] sm:$0xf]
          %v1081 = vld [vmem:[#allocation8 + $0x1c0] sm:$0xf]
          %v1082 = vld [vmem:[#allocation8 + $0x1c4] sm:$0xf]
          %v1083 = vld [vmem:[#allocation8 + $0x1c8] sm:$0xf]
          %v1084 = vld [vmem:[#allocation8 + $0x1cc] sm:$0xf]
          %v1085 = vld [vmem:[#allocation8 + $0x1d0] sm:$0xf]
          %v1086 = vld [vmem:[#allocation8 + $0x1d4] sm:$0xf]
          %v1087 = vld [vmem:[#allocation8 + $0x1d8] sm:$0xf]
          %v1088 = vld [vmem:[#allocation8 + $0x1dc] sm:$0xf]
          %v1089 = vld [vmem:[#allocation8 + $0x1e0] sm:$0xf]
          %v1090 = vld [vmem:[#allocation8 + $0x1e4] sm:$0xf]
          %v1091 = vld [vmem:[#allocation8 + $0x1e8] sm:$0xf]
          %v1092 = vld [vmem:[#allocation8 + $0x1ec] sm:$0xf]
          %v1093 = vld [vmem:[#allocation8 + $0x1f0] sm:$0xf]
          %v1094 = vld [vmem:[#allocation8 + $0x1f4] sm:$0xf]
          %v1095 = vld [vmem:[#allocation8 + $0x1f8] sm:$0xf]
          %v1096 = vld [vmem:[#allocation8 + $0x1fc] sm:$0xf]
          %v1097 = vld [vmem:[#allocation8 + $0x200] sm:$0xf]
          %v1098 = vld [vmem:[#allocation8 + $0x204] sm:$0xf]
          %v1099 = vld [vmem:[#allocation8 + $0x208] sm:$0xf]
          %v1100 = vld [vmem:[#allocation8 + $0x20c] sm:$0xf]
          %v1101 = vld [vmem:[#allocation8 + $0x210] sm:$0xf]
          %v1102 = vld [vmem:[#allocation8 + $0x214] sm:$0xf]
          %v1103 = vld [vmem:[#allocation8 + $0x218] sm:$0xf]
          %v1104 = vld [vmem:[#allocation8 + $0x21c] sm:$0xf]
          %v1105 = vld [vmem:[#allocation8 + $0x220] sm:$0xf]
          %v1106 = vld [vmem:[#allocation8 + $0x224] sm:$0xf]
          %v1107 = vld [vmem:[#allocation8 + $0x228] sm:$0xf]
          %v1108 = vld [vmem:[#allocation8 + $0x22c] sm:$0xf]
          %v1109 = vld [vmem:[#allocation8 + $0x230] sm:$0xf]
          %v1110 = vld [vmem:[#allocation8 + $0x234] sm:$0xf]
          %v1111 = vld [vmem:[#allocation8 + $0x238] sm:$0xf]
          %v1112 = vld [vmem:[#allocation8 + $0x23c] sm:$0xf]
          %v1113 = vld [vmem:[#allocation8 + $0x240] sm:$0xf]
          %v1114 = vld [vmem:[#allocation8 + $0x244] sm:$0xf]
          %v1115 = vld [vmem:[#allocation8 + $0x248] sm:$0xf]
          %v1116 = vld [vmem:[#allocation8 + $0x24c] sm:$0xf]
          %v1117 = vld [vmem:[#allocation8 + $0x250] sm:$0xf]
          %v1118 = vld [vmem:[#allocation8 + $0x254] sm:$0xf]
          %v1119 = vld [vmem:[#allocation8 + $0x258] sm:$0xf]
          %v1120 = vld [vmem:[#allocation8 + $0x25c] sm:$0xf]
          %v1121 = vld [vmem:[#allocation8 + $0x260] sm:$0xf]
          %v1122 = vld [vmem:[#allocation8 + $0x264] sm:$0xf]
          %v1123 = vld [vmem:[#allocation8 + $0x268] sm:$0xf]
          %v1124 = vld [vmem:[#allocation8 + $0x26c] sm:$0xf]
          %v1125 = vld [vmem:[#allocation8 + $0x270] sm:$0xf]
          %v1126 = vld [vmem:[#allocation8 + $0x274] sm:$0xf]
          %v1127 = vld [vmem:[#allocation8 + $0x278] sm:$0xf]
          %v1128 = vld [vmem:[#allocation8 + $0x27c] sm:$0xf]
          %v1129 = vld [vmem:[#allocation8 + $0x280] sm:$0xf]
          %v1130 = vld [vmem:[#allocation8 + $0x284] sm:$0xf]
          %v1131 = vld [vmem:[#allocation8 + $0x288] sm:$0xf]
          %v1132 = vld [vmem:[#allocation8 + $0x28c] sm:$0xf]
          %v1133 = vld [vmem:[#allocation8 + $0x290] sm:$0xf]
          %v1134 = vld [vmem:[#allocation8 + $0x294] sm:$0xf]
          %v1135 = vld [vmem:[#allocation8 + $0x298] sm:$0xf]
          %v1136 = vld [vmem:[#allocation8 + $0x29c] sm:$0xf]
          %v1137 = vld [vmem:[#allocation8 + $0x2a0] sm:$0xf]
          %v1138 = vld [vmem:[#allocation8 + $0x2a4] sm:$0xf]
          %v1139 = vld [vmem:[#allocation8 + $0x2a8] sm:$0xf]
          %v1140 = vld [vmem:[#allocation8 + $0x2ac] sm:$0xf]
          %v1141 = vld [vmem:[#allocation8 + $0x2b0] sm:$0xf]
          %v1142 = vld [vmem:[#allocation8 + $0x2b4] sm:$0xf]
          %v1143 = vld [vmem:[#allocation8 + $0x2b8] sm:$0xf]
          %v1144 = vld [vmem:[#allocation8 + $0x2bc] sm:$0xf]
          %v1145 = vld [vmem:[#allocation8 + $0x2c0] sm:$0xf]
          %v1146 = vld [vmem:[#allocation8 + $0x2c4] sm:$0xf]
          %v1147 = vld [vmem:[#allocation8 + $0x2c8] sm:$0xf]
          %v1148 = vld [vmem:[#allocation8 + $0x2cc] sm:$0xf]
          %v1149 = vld [vmem:[#allocation8 + $0x2d0] sm:$0xf]
          %v1150 = vld [vmem:[#allocation8 + $0x2d4] sm:$0xf]
          %v1151 = vld [vmem:[#allocation8 + $0x2d8] sm:$0xf]
          %v1152 = vld [vmem:[#allocation8 + $0x2dc] sm:$0xf]
          %v1153 = vld [vmem:[#allocation8 + $0x2e0] sm:$0xf]
          %v1154 = vld [vmem:[#allocation8 + $0x2e4] sm:$0xf]
          %v1155 = vld [vmem:[#allocation8 + $0x2e8] sm:$0xf]
          %v1156 = vld [vmem:[#allocation8 + $0x2ec] sm:$0xf]
          %v1157 = vld [vmem:[#allocation8 + $0x2f0] sm:$0xf]
          %v1158 = vld [vmem:[#allocation8 + $0x2f4] sm:$0xf]
          %v1159 = vld [vmem:[#allocation8 + $0x2f8] sm:$0xf]
          %v1160 = vld [vmem:[#allocation8 + $0x2fc] sm:$0xf]
          %v1161 = vld [vmem:[#allocation8 + $0x300] sm:$0xf]
          %v1162 = vld [vmem:[#allocation8 + $0x304] sm:$0xf]
          %v1163 = vld [vmem:[#allocation8 + $0x308] sm:$0xf]
          %v1164 = vld [vmem:[#allocation8 + $0x30c] sm:$0xf]
          %v1165 = vld [vmem:[#allocation8 + $0x310] sm:$0xf]
          %v1166 = vld [vmem:[#allocation8 + $0x314] sm:$0xf]
          %v1167 = vld [vmem:[#allocation8 + $0x318] sm:$0xf]
          %v1168 = vld [vmem:[#allocation8 + $0x31c] sm:$0xf]
          %v1169 = vld [vmem:[#allocation8 + $0x320] sm:$0xf]
          %v1170 = vld [vmem:[#allocation8 + $0x324] sm:$0xf]
          %v1171 = vld [vmem:[#allocation8 + $0x328] sm:$0xf]
          %v1172 = vld [vmem:[#allocation8 + $0x32c] sm:$0xf]
          %v1173 = vld [vmem:[#allocation8 + $0x330] sm:$0xf]
          %v1174 = vld [vmem:[#allocation8 + $0x334] sm:$0xf]
          %v1175 = vld [vmem:[#allocation8 + $0x338] sm:$0xf]
          %v1176 = vld [vmem:[#allocation8 + $0x33c] sm:$0xf]
          %v1177 = vld [vmem:[#allocation8 + $0x340] sm:$0xf]
          %v1178 = vld [vmem:[#allocation8 + $0x344] sm:$0xf]
          %v1179 = vld [vmem:[#allocation8 + $0x348] sm:$0xf]
          %v1180 = vld [vmem:[#allocation8 + $0x34c] sm:$0xf]
          %v1181 = vld [vmem:[#allocation8 + $0x350] sm:$0xf]
          %v1182 = vld [vmem:[#allocation8 + $0x354] sm:$0xf]
          %v1183 = vld [vmem:[#allocation8 + $0x358] sm:$0xf]
          %v1184 = vld [vmem:[#allocation8 + $0x35c] sm:$0xf]
          %v1185 = vld [vmem:[#allocation8 + $0x360] sm:$0xf]
          %v1186 = vld [vmem:[#allocation8 + $0x364] sm:$0xf]
          %v1187 = vld [vmem:[#allocation8 + $0x368] sm:$0xf]
          %v1188 = vld [vmem:[#allocation8 + $0x36c] sm:$0xf]
          %v1189 = vld [vmem:[#allocation8 + $0x370] sm:$0xf]
          %v1190 = vld [vmem:[#allocation8 + $0x374] sm:$0xf]
          %v1191 = vld [vmem:[#allocation8 + $0x378] sm:$0xf]
          %v1192 = vld [vmem:[#allocation8 + $0x37c] sm:$0xf]
          %v1193 = vld [vmem:[#allocation8 + $0x380] sm:$0xf]
          %v1194 = vld [vmem:[#allocation8 + $0x384] sm:$0xf]
          %v1195 = vld [vmem:[#allocation8 + $0x388] sm:$0xf]
          %v1196 = vld [vmem:[#allocation8 + $0x38c] sm:$0xf]
          %v1197 = vld [vmem:[#allocation8 + $0x390] sm:$0xf]
          %v1198 = vld [vmem:[#allocation8 + $0x394] sm:$0xf]
          %v1199 = vld [vmem:[#allocation8 + $0x398] sm:$0xf]
          %v1200 = vld [vmem:[#allocation8 + $0x39c] sm:$0xf]
          %v1201 = vld [vmem:[#allocation8 + $0x3a0] sm:$0xf]
          %v1202 = vld [vmem:[#allocation8 + $0x3a4] sm:$0xf]
          %v1203 = vld [vmem:[#allocation8 + $0x3a8] sm:$0xf]
          %v1204 = vld [vmem:[#allocation8 + $0x3ac] sm:$0xf]
          %v1205 = vld [vmem:[#allocation8 + $0x3b0] sm:$0xf]
          %v1206 = vld [vmem:[#allocation8 + $0x3b4] sm:$0xf]
          %v1207 = vld [vmem:[#allocation8 + $0x3b8] sm:$0xf]
          %v1208 = vld [vmem:[#allocation8 + $0x3bc] sm:$0xf]
          %v1209 = vld [vmem:[#allocation8 + $0x3c0] sm:$0xf]
          %v1210 = vld [vmem:[#allocation8 + $0x3c4] sm:$0xf]
          %v1211 = vld [vmem:[#allocation8 + $0x3c8] sm:$0xf]
          %v1212 = vld [vmem:[#allocation8 + $0x3cc] sm:$0xf]
          %v1213 = vld [vmem:[#allocation8 + $0x3d0] sm:$0xf]
          %v1214 = vld [vmem:[#allocation8 + $0x3d4] sm:$0xf]
          %v1215 = vld [vmem:[#allocation8 + $0x3d8] sm:$0xf]
          %v1216 = vld [vmem:[#allocation8 + $0x3dc] sm:$0xf]
          %v1217 = vld [vmem:[#allocation8 + $0x3e0] sm:$0xf]
          %v1218 = vld [vmem:[#allocation8 + $0x3e4] sm:$0xf]
          %v1219 = vld [vmem:[#allocation8 + $0x3e8] sm:$0xf]
          %v1220 = vld [vmem:[#allocation8 + $0x3ec] sm:$0xf]
          %v1221 = vld [vmem:[#allocation8 + $0x3f0] sm:$0xf]
          %v1222 = vld [vmem:[#allocation8 + $0x3f4] sm:$0xf]
          %v1223 = vld [vmem:[#allocation8 + $0x3f8] sm:$0xf]
          %v1224 = vld [vmem:[#allocation8 + $0x3fc] sm:$0xf]
          %v1225 = vld [vmem:[%s6 + $0x7] sm:$0x1]
          %v1226 = vlaneseq
          %v1227 = vshrl.u32 %v1226, 7
          %v1228 = vsub.s32 0, %v1227
          %v1229 = vrot.slane %v1225, %v1228
          %v1238 = vunpack.c.l.b16 %v961
          %v1239 = vunpack.c.h.b16 %v961
          %v1240 = vunpack.c.l.b16 %v962
          %v1241 = vunpack.c.h.b16 %v962
          %v1242 = vunpack.c.l.b16 %v963
          %v1243 = vunpack.c.h.b16 %v963
          %v1244 = vunpack.c.l.b16 %v964
          %v1245 = vunpack.c.h.b16 %v964
          %v1246 = vunpack.c.l.b16 %v965
          %v1247 = vunpack.c.h.b16 %v965
          %v1248 = vunpack.c.l.b16 %v966
          %v1249 = vunpack.c.h.b16 %v966
          %v1250 = vunpack.c.l.b16 %v967
          %v1251 = vunpack.c.h.b16 %v967
          %v1252 = vunpack.c.l.b16 %v968
          %v1253 = vunpack.c.h.b16 %v968
          %v1254 = vpack.c.b16 %v1238, %v1238
          %v1255 = vpack.c.b16 %v1239, %v1239
          %v1256 = vpack.c.b16 %v1240, %v1240
          %v1257 = vpack.c.b16 %v1241, %v1241
          %v1258 = vpack.c.b16 %v1242, %v1242
          %v1259 = vpack.c.b16 %v1243, %v1243
          %v1260 = vpack.c.b16 %v1244, %v1244
          %v1261 = vpack.c.b16 %v1245, %v1245
          %v1262 = vpack.c.b16 %v1246, %v1246
          %v1263 = vpack.c.b16 %v1247, %v1247
          %v1264 = vpack.c.b16 %v1248, %v1248
          %v1265 = vpack.c.b16 %v1249, %v1249
          %v1266 = vpack.c.b16 %v1250, %v1250
          %v1267 = vpack.c.b16 %v1251, %v1251
          %v1268 = vpack.c.b16 %v1252, %v1252
          %v1269 = vpack.c.b16 %v1253, %v1253
          %v1542 = vunpack.c.l.b16 %v969
          %v1543 = vunpack.c.l.b16 %v970
          %v1544 = vunpack.c.l.b16 %v971
          %v1545 = vunpack.c.l.b16 %v972
          %v1546 = vunpack.c.l.b16 %v973
          %v1547 = vunpack.c.l.b16 %v974
          %v1548 = vunpack.c.l.b16 %v975
          %v1549 = vunpack.c.l.b16 %v976
          %v1550 = vunpack.c.l.b16 %v977
          %v1551 = vunpack.c.l.b16 %v978
          %v1552 = vunpack.c.l.b16 %v979
          %v1553 = vunpack.c.l.b16 %v980
          %v1554 = vunpack.c.l.b16 %v981
          %v1555 = vunpack.c.l.b16 %v982
          %v1556 = vunpack.c.l.b16 %v983
          %v1557 = vunpack.c.l.b16 %v984
          %v1558 = vunpack.c.l.b16 %v985
          %v1559 = vunpack.c.l.b16 %v986
          %v1560 = vunpack.c.l.b16 %v987
          %v1561 = vunpack.c.l.b16 %v988
          %v1562 = vunpack.c.l.b16 %v989
          %v1563 = vunpack.c.l.b16 %v990
          %v1564 = vunpack.c.l.b16 %v991
          %v1565 = vunpack.c.l.b16 %v992
          %v1566 = vunpack.c.l.b16 %v993
          %v1567 = vunpack.c.l.b16 %v994
          %v1568 = vunpack.c.l.b16 %v995
          %v1569 = vunpack.c.l.b16 %v996
          %v1570 = vunpack.c.l.b16 %v997
          %v1571 = vunpack.c.l.b16 %v998
          %v1572 = vunpack.c.l.b16 %v999
          %v1573 = vunpack.c.l.b16 %v1000
          %v1574 = vunpack.c.l.b16 %v1001
          %v1575 = vunpack.c.l.b16 %v1002
          %v1576 = vunpack.c.l.b16 %v1003
          %v1577 = vunpack.c.l.b16 %v1004
          %v1578 = vunpack.c.l.b16 %v1005
          %v1579 = vunpack.c.l.b16 %v1006
          %v1580 = vunpack.c.l.b16 %v1007
          %v1581 = vunpack.c.l.b16 %v1008
          %v1582 = vunpack.c.l.b16 %v1009
          %v1583 = vunpack.c.l.b16 %v1010
          %v1584 = vunpack.c.l.b16 %v1011
          %v1585 = vunpack.c.l.b16 %v1012
          %v1586 = vunpack.c.l.b16 %v1013
          %v1587 = vunpack.c.l.b16 %v1014
          %v1588 = vunpack.c.l.b16 %v1015
          %v1589 = vunpack.c.l.b16 %v1016
          %v1590 = vunpack.c.l.b16 %v1017
          %v1591 = vunpack.c.l.b16 %v1018
          %v1592 = vunpack.c.l.b16 %v1019
          %v1593 = vunpack.c.l.b16 %v1020
          %v1594 = vunpack.c.l.b16 %v1021
          %v1595 = vunpack.c.l.b16 %v1022
          %v1596 = vunpack.c.l.b16 %v1023
          %v1597 = vunpack.c.l.b16 %v1024
          %v1598 = vunpack.c.l.b16 %v1025
          %v1599 = vunpack.c.l.b16 %v1026
          %v1600 = vunpack.c.l.b16 %v1027
          %v1601 = vunpack.c.l.b16 %v1028
          %v1602 = vunpack.c.l.b16 %v1029
          %v1603 = vunpack.c.l.b16 %v1030
          %v1604 = vunpack.c.l.b16 %v1031
          %v1605 = vunpack.c.l.b16 %v1032
          %v1606 = vunpack.c.l.b16 %v1033
          %v1607 = vunpack.c.l.b16 %v1034
          %v1608 = vunpack.c.l.b16 %v1035
          %v1609 = vunpack.c.l.b16 %v1036
          %v1610 = vunpack.c.l.b16 %v1037
          %v1611 = vunpack.c.l.b16 %v1038
          %v1612 = vunpack.c.l.b16 %v1039
          %v1613 = vunpack.c.l.b16 %v1040
          %v1614 = vunpack.c.l.b16 %v1041
          %v1615 = vunpack.c.l.b16 %v1042
          %v1616 = vunpack.c.l.b16 %v1043
          %v1617 = vunpack.c.l.b16 %v1044
          %v1618 = vunpack.c.l.b16 %v1045
          %v1619 = vunpack.c.l.b16 %v1046
          %v1620 = vunpack.c.l.b16 %v1047
          %v1621 = vunpack.c.l.b16 %v1048
          %v1622 = vunpack.c.l.b16 %v1049
          %v1623 = vunpack.c.l.b16 %v1050
          %v1624 = vunpack.c.l.b16 %v1051
          %v1625 = vunpack.c.l.b16 %v1052
          %v1626 = vunpack.c.l.b16 %v1053
          %v1627 = vunpack.c.l.b16 %v1054
          %v1628 = vunpack.c.l.b16 %v1055
          %v1629 = vunpack.c.l.b16 %v1056
          %v1630 = vunpack.c.l.b16 %v1057
          %v1631 = vunpack.c.l.b16 %v1058
          %v1632 = vunpack.c.l.b16 %v1059
          %v1633 = vunpack.c.l.b16 %v1060
          %v1634 = vunpack.c.l.b16 %v1061
          %v1635 = vunpack.c.l.b16 %v1062
          %v1636 = vunpack.c.l.b16 %v1063
          %v1637 = vunpack.c.l.b16 %v1064
          %v1638 = vunpack.c.l.b16 %v1065
          %v1639 = vunpack.c.l.b16 %v1066
          %v1640 = vunpack.c.l.b16 %v1067
          %v1641 = vunpack.c.l.b16 %v1068
          %v1642 = vunpack.c.l.b16 %v1069
          %v1643 = vunpack.c.l.b16 %v1070
          %v1644 = vunpack.c.l.b16 %v1071
          %v1645 = vunpack.c.l.b16 %v1072
          %v1646 = vunpack.c.l.b16 %v1073
          %v1647 = vunpack.c.l.b16 %v1074
          %v1648 = vunpack.c.l.b16 %v1075
          %v1649 = vunpack.c.l.b16 %v1076
          %v1650 = vunpack.c.l.b16 %v1077
          %v1651 = vunpack.c.l.b16 %v1078
          %v1652 = vunpack.c.l.b16 %v1079
          %v1653 = vunpack.c.l.b16 %v1080
          %v1654 = vunpack.c.l.b16 %v1081
          %v1655 = vunpack.c.l.b16 %v1082
          %v1656 = vunpack.c.l.b16 %v1083
          %v1657 = vunpack.c.l.b16 %v1084
          %v1658 = vunpack.c.l.b16 %v1085
          %v1659 = vunpack.c.l.b16 %v1086
          %v1660 = vunpack.c.l.b16 %v1087
          %v1661 = vunpack.c.l.b16 %v1088
          %v1662 = vunpack.c.l.b16 %v1089
          %v1663 = vunpack.c.l.b16 %v1090
          %v1664 = vunpack.c.l.b16 %v1091
          %v1665 = vunpack.c.l.b16 %v1092
          %v1666 = vunpack.c.l.b16 %v1093
          %v1667 = vunpack.c.l.b16 %v1094
          %v1668 = vunpack.c.l.b16 %v1095
          %v1669 = vunpack.c.l.b16 %v1096
          %v1670 = vunpack.c.l.b16 %v1097
          %v1671 = vunpack.c.l.b16 %v1098
          %v1672 = vunpack.c.l.b16 %v1099
          %v1673 = vunpack.c.l.b16 %v1100
          %v1674 = vunpack.c.l.b16 %v1101
          %v1675 = vunpack.c.l.b16 %v1102
          %v1676 = vunpack.c.l.b16 %v1103
          %v1677 = vunpack.c.l.b16 %v1104
          %v1678 = vunpack.c.l.b16 %v1105
          %v1679 = vunpack.c.l.b16 %v1106
          %v1680 = vunpack.c.l.b16 %v1107
          %v1681 = vunpack.c.l.b16 %v1108
          %v1682 = vunpack.c.l.b16 %v1109
          %v1683 = vunpack.c.l.b16 %v1110
          %v1684 = vunpack.c.l.b16 %v1111
          %v1685 = vunpack.c.l.b16 %v1112
          %v1686 = vunpack.c.l.b16 %v1113
          %v1687 = vunpack.c.l.b16 %v1114
          %v1688 = vunpack.c.l.b16 %v1115
          %v1689 = vunpack.c.l.b16 %v1116
          %v1690 = vunpack.c.l.b16 %v1117
          %v1691 = vunpack.c.l.b16 %v1118
          %v1692 = vunpack.c.l.b16 %v1119
          %v1693 = vunpack.c.l.b16 %v1120
          %v1694 = vunpack.c.l.b16 %v1121
          %v1695 = vunpack.c.l.b16 %v1122
          %v1696 = vunpack.c.l.b16 %v1123
          %v1697 = vunpack.c.l.b16 %v1124
          %v1698 = vunpack.c.l.b16 %v1125
          %v1699 = vunpack.c.l.b16 %v1126
          %v1700 = vunpack.c.l.b16 %v1127
          %v1701 = vunpack.c.l.b16 %v1128
          %v1702 = vunpack.c.l.b16 %v1129
          %v1703 = vunpack.c.l.b16 %v1130
          %v1704 = vunpack.c.l.b16 %v1131
          %v1705 = vunpack.c.l.b16 %v1132
          %v1706 = vunpack.c.l.b16 %v1133
          %v1707 = vunpack.c.l.b16 %v1134
          %v1708 = vunpack.c.l.b16 %v1135
          %v1709 = vunpack.c.l.b16 %v1136
          %v1710 = vunpack.c.l.b16 %v1137
          %v1711 = vunpack.c.l.b16 %v1138
          %v1712 = vunpack.c.l.b16 %v1139
          %v1713 = vunpack.c.l.b16 %v1140
          %v1714 = vunpack.c.l.b16 %v1141
          %v1715 = vunpack.c.l.b16 %v1142
          %v1716 = vunpack.c.l.b16 %v1143
          %v1717 = vunpack.c.l.b16 %v1144
          %v1718 = vunpack.c.l.b16 %v1145
          %v1719 = vunpack.c.l.b16 %v1146
          %v1720 = vunpack.c.l.b16 %v1147
          %v1721 = vunpack.c.l.b16 %v1148
          %v1722 = vunpack.c.l.b16 %v1149
          %v1723 = vunpack.c.l.b16 %v1150
          %v1724 = vunpack.c.l.b16 %v1151
          %v1725 = vunpack.c.l.b16 %v1152
          %v1726 = vunpack.c.l.b16 %v1153
          %v1727 = vunpack.c.l.b16 %v1154
          %v1728 = vunpack.c.l.b16 %v1155
          %v1729 = vunpack.c.l.b16 %v1156
          %v1730 = vunpack.c.l.b16 %v1157
          %v1731 = vunpack.c.l.b16 %v1158
          %v1732 = vunpack.c.l.b16 %v1159
          %v1733 = vunpack.c.l.b16 %v1160
          %v1734 = vunpack.c.l.b16 %v1161
          %v1735 = vunpack.c.l.b16 %v1162
          %v1736 = vunpack.c.l.b16 %v1163
          %v1737 = vunpack.c.l.b16 %v1164
          %v1738 = vunpack.c.l.b16 %v1165
          %v1739 = vunpack.c.l.b16 %v1166
          %v1740 = vunpack.c.l.b16 %v1167
          %v1741 = vunpack.c.l.b16 %v1168
          %v1742 = vunpack.c.l.b16 %v1169
          %v1743 = vunpack.c.l.b16 %v1170
          %v1744 = vunpack.c.l.b16 %v1171
          %v1745 = vunpack.c.l.b16 %v1172
          %v1746 = vunpack.c.l.b16 %v1173
          %v1747 = vunpack.c.l.b16 %v1174
          %v1748 = vunpack.c.l.b16 %v1175
          %v1749 = vunpack.c.l.b16 %v1176
          %v1750 = vunpack.c.l.b16 %v1177
          %v1751 = vunpack.c.l.b16 %v1178
          %v1752 = vunpack.c.l.b16 %v1179
          %v1753 = vunpack.c.l.b16 %v1180
          %v1754 = vunpack.c.l.b16 %v1181
          %v1755 = vunpack.c.l.b16 %v1182
          %v1756 = vunpack.c.l.b16 %v1183
          %v1757 = vunpack.c.l.b16 %v1184
          %v1758 = vunpack.c.l.b16 %v1185
          %v1759 = vunpack.c.l.b16 %v1186
          %v1760 = vunpack.c.l.b16 %v1187
          %v1761 = vunpack.c.l.b16 %v1188
          %v1762 = vunpack.c.l.b16 %v1189
          %v1763 = vunpack.c.l.b16 %v1190
          %v1764 = vunpack.c.l.b16 %v1191
          %v1765 = vunpack.c.l.b16 %v1192
          %v1766 = vunpack.c.l.b16 %v1193
          %v1767 = vunpack.c.l.b16 %v1194
          %v1768 = vunpack.c.l.b16 %v1195
          %v1769 = vunpack.c.l.b16 %v1196
          %v1770 = vunpack.c.l.b16 %v1197
          %v1771 = vunpack.c.l.b16 %v1198
          %v1772 = vunpack.c.l.b16 %v1199
          %v1773 = vunpack.c.l.b16 %v1200
          %v1774 = vunpack.c.l.b16 %v1201
          %v1775 = vunpack.c.l.b16 %v1202
          %v1776 = vunpack.c.l.b16 %v1203
          %v1777 = vunpack.c.l.b16 %v1204
          %v1778 = vunpack.c.l.b16 %v1205
          %v1779 = vunpack.c.l.b16 %v1206
          %v1780 = vunpack.c.l.b16 %v1207
          %v1781 = vunpack.c.l.b16 %v1208
          %v1782 = vunpack.c.l.b16 %v1209
          %v1783 = vunpack.c.l.b16 %v1210
          %v1784 = vunpack.c.l.b16 %v1211
          %v1785 = vunpack.c.l.b16 %v1212
          %v1786 = vunpack.c.l.b16 %v1213
          %v1787 = vunpack.c.l.b16 %v1214
          %v1788 = vunpack.c.l.b16 %v1215
          %v1789 = vunpack.c.l.b16 %v1216
          %v1790 = vunpack.c.l.b16 %v1217
          %v1791 = vunpack.c.l.b16 %v1218
          %v1792 = vunpack.c.l.b16 %v1219
          %v1793 = vunpack.c.l.b16 %v1220
          %v1794 = vunpack.c.l.b16 %v1221
          %v1795 = vunpack.c.l.b16 %v1222
          %v1796 = vunpack.c.l.b16 %v1223
          %v1797 = vunpack.c.l.b16 %v1224
          %v1798 = vpack.c.b16 %v1543, %v1542
          %v1799 = vpack.c.b16 %v1545, %v1544
          %v1800 = vpack.c.b16 %v1547, %v1546
          %v1801 = vpack.c.b16 %v1549, %v1548
          %v1802 = vpack.c.b16 %v1551, %v1550
          %v1803 = vpack.c.b16 %v1553, %v1552
          %v1804 = vpack.c.b16 %v1555, %v1554
          %v1805 = vpack.c.b16 %v1557, %v1556
          %v1806 = vpack.c.b16 %v1559, %v1558
          %v1807 = vpack.c.b16 %v1561, %v1560
          %v1808 = vpack.c.b16 %v1563, %v1562
          %v1809 = vpack.c.b16 %v1565, %v1564
          %v1810 = vpack.c.b16 %v1567, %v1566
          %v1811 = vpack.c.b16 %v1569, %v1568
          %v1812 = vpack.c.b16 %v1571, %v1570
          %v1813 = vpack.c.b16 %v1573, %v1572
          %v1814 = vpack.c.b16 %v1575, %v1574
          %v1815 = vpack.c.b16 %v1577, %v1576
          %v1816 = vpack.c.b16 %v1579, %v1578
          %v1817 = vpack.c.b16 %v1581, %v1580
          %v1818 = vpack.c.b16 %v1583, %v1582
          %v1819 = vpack.c.b16 %v1585, %v1584
          %v1820 = vpack.c.b16 %v1587, %v1586
          %v1821 = vpack.c.b16 %v1589, %v1588
          %v1822 = vpack.c.b16 %v1591, %v1590
          %v1823 = vpack.c.b16 %v1593, %v1592
          %v1824 = vpack.c.b16 %v1595, %v1594
          %v1825 = vpack.c.b16 %v1597, %v1596
          %v1826 = vpack.c.b16 %v1599, %v1598
          %v1827 = vpack.c.b16 %v1601, %v1600
          %v1828 = vpack.c.b16 %v1603, %v1602
          %v1829 = vpack.c.b16 %v1605, %v1604
          %v1830 = vpack.c.b16 %v1607, %v1606
          %v1831 = vpack.c.b16 %v1609, %v1608
          %v1832 = vpack.c.b16 %v1611, %v1610
          %v1833 = vpack.c.b16 %v1613, %v1612
          %v1834 = vpack.c.b16 %v1615, %v1614
          %v1835 = vpack.c.b16 %v1617, %v1616
          %v1836 = vpack.c.b16 %v1619, %v1618
          %v1837 = vpack.c.b16 %v1621, %v1620
          %v1838 = vpack.c.b16 %v1623, %v1622
          %v1839 = vpack.c.b16 %v1625, %v1624
          %v1840 = vpack.c.b16 %v1627, %v1626
          %v1841 = vpack.c.b16 %v1629, %v1628
          %v1842 = vpack.c.b16 %v1631, %v1630
          %v1843 = vpack.c.b16 %v1633, %v1632
          %v1844 = vpack.c.b16 %v1635, %v1634
          %v1845 = vpack.c.b16 %v1637, %v1636
          %v1846 = vpack.c.b16 %v1639, %v1638
          %v1847 = vpack.c.b16 %v1641, %v1640
          %v1848 = vpack.c.b16 %v1643, %v1642
          %v1849 = vpack.c.b16 %v1645, %v1644
          %v1850 = vpack.c.b16 %v1647, %v1646
          %v1851 = vpack.c.b16 %v1649, %v1648
          %v1852 = vpack.c.b16 %v1651, %v1650
          %v1853 = vpack.c.b16 %v1653, %v1652
          %v1854 = vpack.c.b16 %v1655, %v1654
          %v1855 = vpack.c.b16 %v1657, %v1656
          %v1856 = vpack.c.b16 %v1659, %v1658
          %v1857 = vpack.c.b16 %v1661, %v1660
          %v1858 = vpack.c.b16 %v1663, %v1662
          %v1859 = vpack.c.b16 %v1665, %v1664
          %v1860 = vpack.c.b16 %v1667, %v1666
          %v1861 = vpack.c.b16 %v1669, %v1668
          %v1862 = vpack.c.b16 %v1671, %v1670
          %v1863 = vpack.c.b16 %v1673, %v1672
          %v1864 = vpack.c.b16 %v1675, %v1674
          %v1865 = vpack.c.b16 %v1677, %v1676
          %v1866 = vpack.c.b16 %v1679, %v1678
          %v1867 = vpack.c.b16 %v1681, %v1680
          %v1868 = vpack.c.b16 %v1683, %v1682
          %v1869 = vpack.c.b16 %v1685, %v1684
          %v1870 = vpack.c.b16 %v1687, %v1686
          %v1871 = vpack.c.b16 %v1689, %v1688
          %v1872 = vpack.c.b16 %v1691, %v1690
          %v1873 = vpack.c.b16 %v1693, %v1692
          %v1874 = vpack.c.b16 %v1695, %v1694
          %v1875 = vpack.c.b16 %v1697, %v1696
          %v1876 = vpack.c.b16 %v1699, %v1698
          %v1877 = vpack.c.b16 %v1701, %v1700
          %v1878 = vpack.c.b16 %v1703, %v1702
          %v1879 = vpack.c.b16 %v1705, %v1704
          %v1880 = vpack.c.b16 %v1707, %v1706
          %v1881 = vpack.c.b16 %v1709, %v1708
          %v1882 = vpack.c.b16 %v1711, %v1710
          %v1883 = vpack.c.b16 %v1713, %v1712
          %v1884 = vpack.c.b16 %v1715, %v1714
          %v1885 = vpack.c.b16 %v1717, %v1716
          %v1886 = vpack.c.b16 %v1719, %v1718
          %v1887 = vpack.c.b16 %v1721, %v1720
          %v1888 = vpack.c.b16 %v1723, %v1722
          %v1889 = vpack.c.b16 %v1725, %v1724
          %v1890 = vpack.c.b16 %v1727, %v1726
          %v1891 = vpack.c.b16 %v1729, %v1728
          %v1892 = vpack.c.b16 %v1731, %v1730
          %v1893 = vpack.c.b16 %v1733, %v1732
          %v1894 = vpack.c.b16 %v1735, %v1734
          %v1895 = vpack.c.b16 %v1737, %v1736
          %v1896 = vpack.c.b16 %v1739, %v1738
          %v1897 = vpack.c.b16 %v1741, %v1740
          %v1898 = vpack.c.b16 %v1743, %v1742
          %v1899 = vpack.c.b16 %v1745, %v1744
          %v1900 = vpack.c.b16 %v1747, %v1746
          %v1901 = vpack.c.b16 %v1749, %v1748
          %v1902 = vpack.c.b16 %v1751, %v1750
          %v1903 = vpack.c.b16 %v1753, %v1752
          %v1904 = vpack.c.b16 %v1755, %v1754
          %v1905 = vpack.c.b16 %v1757, %v1756
          %v1906 = vpack.c.b16 %v1759, %v1758
          %v1907 = vpack.c.b16 %v1761, %v1760
          %v1908 = vpack.c.b16 %v1763, %v1762
          %v1909 = vpack.c.b16 %v1765, %v1764
          %v1910 = vpack.c.b16 %v1767, %v1766
          %v1911 = vpack.c.b16 %v1769, %v1768
          %v1912 = vpack.c.b16 %v1771, %v1770
          %v1913 = vpack.c.b16 %v1773, %v1772
          %v1914 = vpack.c.b16 %v1775, %v1774
          %v1915 = vpack.c.b16 %v1777, %v1776
          %v1916 = vpack.c.b16 %v1779, %v1778
          %v1917 = vpack.c.b16 %v1781, %v1780
          %v1918 = vpack.c.b16 %v1783, %v1782
          %v1919 = vpack.c.b16 %v1785, %v1784
          %v1920 = vpack.c.b16 %v1787, %v1786
          %v1921 = vpack.c.b16 %v1789, %v1788
          %v1922 = vpack.c.b16 %v1791, %v1790
          %v1923 = vpack.c.b16 %v1793, %v1792
          %v1924 = vpack.c.b16 %v1795, %v1794
          %v1925 = vpack.c.b16 %v1797, %v1796
          %2054 = vmatprep.subr.bf16.mxu0 0
          %2055 = vmatpush1.bf16.msra.mxu0 %v1798
          %2056 = vmatprep.subr.bf16.mxu0 0
          %2057 = vmatpush1.bf16.msra.mxu0 %v1799
          %2058 = vmatprep.subr.bf16.mxu0 0
          %2059 = vmatpush1.bf16.msra.mxu0 %v1800
          %2060 = vmatprep.subr.bf16.mxu0 0
          %2061 = vmatpush1.bf16.msra.mxu0 %v1801
          %2062 = vmatprep.subr.bf16.mxu0 0
          %2063 = vmatpush1.bf16.msra.mxu0 %v1802
          %2064 = vmatprep.subr.bf16.mxu0 0
          %2065 = vmatpush1.bf16.msra.mxu0 %v1803
          %2066 = vmatprep.subr.bf16.mxu0 0
          %2067 = vmatpush1.bf16.msra.mxu0 %v1804
          %2068 = vmatprep.subr.bf16.mxu0 0
          %2069 = vmatpush1.bf16.msra.mxu0 %v1805
          %2070 = vmatprep.subr.bf16.mxu0 0
          %2071 = vmatpush1.bf16.msra.mxu0 %v1806
          %2072 = vmatprep.subr.bf16.mxu0 0
          %2073 = vmatpush1.bf16.msra.mxu0 %v1807
          %2074 = vmatprep.subr.bf16.mxu0 0
          %2075 = vmatpush1.bf16.msra.mxu0 %v1808
          %2076 = vmatprep.subr.bf16.mxu0 0
          %2077 = vmatpush1.bf16.msra.mxu0 %v1809
          %2078 = vmatprep.subr.bf16.mxu0 0
          %2079 = vmatpush1.bf16.msra.mxu0 %v1810
          %2080 = vmatprep.subr.bf16.mxu0 0
          %2081 = vmatpush1.bf16.msra.mxu0 %v1811
          %2082 = vmatprep.subr.bf16.mxu0 0
          %2083 = vmatpush1.bf16.msra.mxu0 %v1812
          %2084 = vmatprep.subr.bf16.mxu0 0
          %2085 = vmatpush1.bf16.msra.mxu0 %v1813
          %2086 = vmatprep.mubr.bf16.mxu0 %v1255
          %2087 = vmatmul.mubr.bf16.gmra.mrb[0].mxu0 %v1254
          %v2088 = vpop.f32.mrb[0].mxu0
          %v2089 = vadd.f32 %v1229, %v2088
          %v2090 = vpop.f32.mrb[0].mxu0
          %v2091 = vpop.f32.mrb[0].mxu0
          %v2092 = vpop.f32.mrb[0].mxu0
          %2093 = vdwg.mxu0
          %2094 = vmatprep.subr.bf16.mxu0 0
          %2095 = vmatpush1.bf16.msra.mxu0 %v1814
          %2096 = vmatprep.subr.bf16.mxu0 0
          %2097 = vmatpush1.bf16.msra.mxu0 %v1815
          %2098 = vmatprep.subr.bf16.mxu0 0
          %2099 = vmatpush1.bf16.msra.mxu0 %v1816
          %2100 = vmatprep.subr.bf16.mxu0 0
          %2101 = vmatpush1.bf16.msra.mxu0 %v1817
          %2102 = vmatprep.subr.bf16.mxu0 0
          %2103 = vmatpush1.bf16.msra.mxu0 %v1818
          %2104 = vmatprep.subr.bf16.mxu0 0
          %2105 = vmatpush1.bf16.msra.mxu0 %v1819
          %2106 = vmatprep.subr.bf16.mxu0 0
          %2107 = vmatpush1.bf16.msra.mxu0 %v1820
          %2108 = vmatprep.subr.bf16.mxu0 0
          %2109 = vmatpush1.bf16.msra.mxu0 %v1821
          %2110 = vmatprep.subr.bf16.mxu0 0
          %2111 = vmatpush1.bf16.msra.mxu0 %v1822
          %2112 = vmatprep.subr.bf16.mxu0 0
          %2113 = vmatpush1.bf16.msra.mxu0 %v1823
          %2114 = vmatprep.subr.bf16.mxu0 0
          %2115 = vmatpush1.bf16.msra.mxu0 %v1824
          %2116 = vmatprep.subr.bf16.mxu0 0
          %2117 = vmatpush1.bf16.msra.mxu0 %v1825
          %2118 = vmatprep.subr.bf16.mxu0 0
          %2119 = vmatpush1.bf16.msra.mxu0 %v1826
          %2120 = vmatprep.subr.bf16.mxu0 0
          %2121 = vmatpush1.bf16.msra.mxu0 %v1827
          %2122 = vmatprep.subr.bf16.mxu0 0
          %2123 = vmatpush1.bf16.msra.mxu0 %v1828
          %2124 = vmatprep.subr.bf16.mxu0 0
          %2125 = vmatpush1.bf16.msra.mxu0 %v1829
          %2126 = vmatprep.mubr.bf16.mxu0 %v1257
          %2127 = vmatmul.mubr.bf16.gmra.mrb[0].mxu0 %v1256
          %v2128 = vpop.f32.mrb[0].mxu0
          %v2129 = vadd.f32 %v2089, %v2128
          %v2130 = vpop.f32.mrb[0].mxu0
          %v2131 = vpop.f32.mrb[0].mxu0
          %v2132 = vpop.f32.mrb[0].mxu0
          %2133 = vdwg.mxu0
          %2134 = vmatprep.subr.bf16.mxu0 0
          %2135 = vmatpush1.bf16.msra.mxu0 %v1830
          %2136 = vmatprep.subr.bf16.mxu0 0
          %2137 = vmatpush1.bf16.msra.mxu0 %v1831
          %2138 = vmatprep.subr.bf16.mxu0 0
          %2139 = vmatpush1.bf16.msra.mxu0 %v1832
          %2140 = vmatprep.subr.bf16.mxu0 0
          %2141 = vmatpush1.bf16.msra.mxu0 %v1833
          %2142 = vmatprep.subr.bf16.mxu0 0
          %2143 = vmatpush1.bf16.msra.mxu0 %v1834
          %2144 = vmatprep.subr.bf16.mxu0 0
          %2145 = vmatpush1.bf16.msra.mxu0 %v1835
          %2146 = vmatprep.subr.bf16.mxu0 0
          %2147 = vmatpush1.bf16.msra.mxu0 %v1836
          %2148 = vmatprep.subr.bf16.mxu0 0
          %2149 = vmatpush1.bf16.msra.mxu0 %v1837
          %2150 = vmatprep.subr.bf16.mxu0 0
          %2151 = vmatpush1.bf16.msra.mxu0 %v1838
          %2152 = vmatprep.subr.bf16.mxu0 0
          %2153 = vmatpush1.bf16.msra.mxu0 %v1839
          %2154 = vmatprep.subr.bf16.mxu0 0
          %2155 = vmatpush1.bf16.msra.mxu0 %v1840
          %2156 = vmatprep.subr.bf16.mxu0 0
          %2157 = vmatpush1.bf16.msra.mxu0 %v1841
          %2158 = vmatprep.subr.bf16.mxu0 0
          %2159 = vmatpush1.bf16.msra.mxu0 %v1842
          %2160 = vmatprep.subr.bf16.mxu0 0
          %2161 = vmatpush1.bf16.msra.mxu0 %v1843
          %2162 = vmatprep.subr.bf16.mxu0 0
          %2163 = vmatpush1.bf16.msra.mxu0 %v1844
          %2164 = vmatprep.subr.bf16.mxu0 0
          %2165 = vmatpush1.bf16.msra.mxu0 %v1845
          %2166 = vmatprep.mubr.bf16.mxu0 %v1259
          %2167 = vmatmul.mubr.bf16.gmra.mrb[0].mxu0 %v1258
          %v2168 = vpop.f32.mrb[0].mxu0
          %v2169 = vadd.f32 %v2129, %v2168
          %v2170 = vpop.f32.mrb[0].mxu0
          %v2171 = vpop.f32.mrb[0].mxu0
          %v2172 = vpop.f32.mrb[0].mxu0
          %2173 = vdwg.mxu0
          %2174 = vmatprep.subr.bf16.mxu0 0
          %2175 = vmatpush1.bf16.msra.mxu0 %v1846
          %2176 = vmatprep.subr.bf16.mxu0 0
          %2177 = vmatpush1.bf16.msra.mxu0 %v1847
          %2178 = vmatprep.subr.bf16.mxu0 0
          %2179 = vmatpush1.bf16.msra.mxu0 %v1848
          %2180 = vmatprep.subr.bf16.mxu0 0
          %2181 = vmatpush1.bf16.msra.mxu0 %v1849
          %2182 = vmatprep.subr.bf16.mxu0 0
          %2183 = vmatpush1.bf16.msra.mxu0 %v1850
          %2184 = vmatprep.subr.bf16.mxu0 0
          %2185 = vmatpush1.bf16.msra.mxu0 %v1851
          %2186 = vmatprep.subr.bf16.mxu0 0
          %2187 = vmatpush1.bf16.msra.mxu0 %v1852
          %2188 = vmatprep.subr.bf16.mxu0 0
          %2189 = vmatpush1.bf16.msra.mxu0 %v1853
          %2190 = vmatprep.subr.bf16.mxu0 0
          %2191 = vmatpush1.bf16.msra.mxu0 %v1854
          %2192 = vmatprep.subr.bf16.mxu0 0
          %2193 = vmatpush1.bf16.msra.mxu0 %v1855
          %2194 = vmatprep.subr.bf16.mxu0 0
          %2195 = vmatpush1.bf16.msra.mxu0 %v1856
          %2196 = vmatprep.subr.bf16.mxu0 0
          %2197 = vmatpush1.bf16.msra.mxu0 %v1857
          %2198 = vmatprep.subr.bf16.mxu0 0
          %2199 = vmatpush1.bf16.msra.mxu0 %v1858
          %2200 = vmatprep.subr.bf16.mxu0 0
          %2201 = vmatpush1.bf16.msra.mxu0 %v1859
          %2202 = vmatprep.subr.bf16.mxu0 0
          %2203 = vmatpush1.bf16.msra.mxu0 %v1860
          %2204 = vmatprep.subr.bf16.mxu0 0
          %2205 = vmatpush1.bf16.msra.mxu0 %v1861
          %2206 = vmatprep.mubr.bf16.mxu0 %v1261
          %2207 = vmatmul.mubr.bf16.gmra.mrb[0].mxu0 %v1260
          %v2208 = vpop.f32.mrb[0].mxu0
          %v2209 = vadd.f32 %v2169, %v2208
          %v2210 = vpop.f32.mrb[0].mxu0
          %v2211 = vpop.f32.mrb[0].mxu0
          %v2212 = vpop.f32.mrb[0].mxu0
          %2213 = vdwg.mxu0
          %2214 = vmatprep.subr.bf16.mxu0 0
          %2215 = vmatpush1.bf16.msra.mxu0 %v1862
          %2216 = vmatprep.subr.bf16.mxu0 0
          %2217 = vmatpush1.bf16.msra.mxu0 %v1863
          %2218 = vmatprep.subr.bf16.mxu0 0
          %2219 = vmatpush1.bf16.msra.mxu0 %v1864
          %2220 = vmatprep.subr.bf16.mxu0 0
          %2221 = vmatpush1.bf16.msra.mxu0 %v1865
          %2222 = vmatprep.subr.bf16.mxu0 0
          %2223 = vmatpush1.bf16.msra.mxu0 %v1866
          %2224 = vmatprep.subr.bf16.mxu0 0
          %2225 = vmatpush1.bf16.msra.mxu0 %v1867
          %2226 = vmatprep.subr.bf16.mxu0 0
          %2227 = vmatpush1.bf16.msra.mxu0 %v1868
          %2228 = vmatprep.subr.bf16.mxu0 0
          %2229 = vmatpush1.bf16.msra.mxu0 %v1869
          %2230 = vmatprep.subr.bf16.mxu0 0
          %2231 = vmatpush1.bf16.msra.mxu0 %v1870
          %2232 = vmatprep.subr.bf16.mxu0 0
          %2233 = vmatpush1.bf16.msra.mxu0 %v1871
          %2234 = vmatprep.subr.bf16.mxu0 0
          %2235 = vmatpush1.bf16.msra.mxu0 %v1872
          %2236 = vmatprep.subr.bf16.mxu0 0
          %2237 = vmatpush1.bf16.msra.mxu0 %v1873
          %2238 = vmatprep.subr.bf16.mxu0 0
          %2239 = vmatpush1.bf16.msra.mxu0 %v1874
          %2240 = vmatprep.subr.bf16.mxu0 0
          %2241 = vmatpush1.bf16.msra.mxu0 %v1875
          %2242 = vmatprep.subr.bf16.mxu0 0
          %2243 = vmatpush1.bf16.msra.mxu0 %v1876
          %2244 = vmatprep.subr.bf16.mxu0 0
          %2245 = vmatpush1.bf16.msra.mxu0 %v1877
          %2246 = vmatprep.mubr.bf16.mxu0 %v1263
          %2247 = vmatmul.mubr.bf16.gmra.mrb[0].mxu0 %v1262
          %v2248 = vpop.f32.mrb[0].mxu0
          %v2249 = vadd.f32 %v2209, %v2248
          %v2250 = vpop.f32.mrb[0].mxu0
          %v2251 = vpop.f32.mrb[0].mxu0
          %v2252 = vpop.f32.mrb[0].mxu0
          %2253 = vdwg.mxu0
          %2254 = vmatprep.subr.bf16.mxu0 0
          %2255 = vmatpush1.bf16.msra.mxu0 %v1878
          %2256 = vmatprep.subr.bf16.mxu0 0
          %2257 = vmatpush1.bf16.msra.mxu0 %v1879
          %2258 = vmatprep.subr.bf16.mxu0 0
          %2259 = vmatpush1.bf16.msra.mxu0 %v1880
          %2260 = vmatprep.subr.bf16.mxu0 0
          %2261 = vmatpush1.bf16.msra.mxu0 %v1881
          %2262 = vmatprep.subr.bf16.mxu0 0
          %2263 = vmatpush1.bf16.msra.mxu0 %v1882
          %2264 = vmatprep.subr.bf16.mxu0 0
          %2265 = vmatpush1.bf16.msra.mxu0 %v1883
          %2266 = vmatprep.subr.bf16.mxu0 0
          %2267 = vmatpush1.bf16.msra.mxu0 %v1884
          %2268 = vmatprep.subr.bf16.mxu0 0
          %2269 = vmatpush1.bf16.msra.mxu0 %v1885
          %2270 = vmatprep.subr.bf16.mxu0 0
          %2271 = vmatpush1.bf16.msra.mxu0 %v1886
          %2272 = vmatprep.subr.bf16.mxu0 0
          %2273 = vmatpush1.bf16.msra.mxu0 %v1887
          %2274 = vmatprep.subr.bf16.mxu0 0
          %2275 = vmatpush1.bf16.msra.mxu0 %v1888
          %2276 = vmatprep.subr.bf16.mxu0 0
          %2277 = vmatpush1.bf16.msra.mxu0 %v1889
          %2278 = vmatprep.subr.bf16.mxu0 0
          %2279 = vmatpush1.bf16.msra.mxu0 %v1890
          %2280 = vmatprep.subr.bf16.mxu0 0
          %2281 = vmatpush1.bf16.msra.mxu0 %v1891
          %2282 = vmatprep.subr.bf16.mxu0 0
          %2283 = vmatpush1.bf16.msra.mxu0 %v1892
          %2284 = vmatprep.subr.bf16.mxu0 0
          %2285 = vmatpush1.bf16.msra.mxu0 %v1893
          %2286 = vmatprep.mubr.bf16.mxu0 %v1265
          %2287 = vmatmul.mubr.bf16.gmra.mrb[0].mxu0 %v1264
          %v2288 = vpop.f32.mrb[0].mxu0
          %v2289 = vadd.f32 %v2249, %v2288
          %v2290 = vpop.f32.mrb[0].mxu0
          %v2291 = vpop.f32.mrb[0].mxu0
          %v2292 = vpop.f32.mrb[0].mxu0
          %2293 = vdwg.mxu0
          %2294 = vmatprep.subr.bf16.mxu0 0
          %2295 = vmatpush1.bf16.msra.mxu0 %v1894
          %2296 = vmatprep.subr.bf16.mxu0 0
          %2297 = vmatpush1.bf16.msra.mxu0 %v1895
          %2298 = vmatprep.subr.bf16.mxu0 0
          %2299 = vmatpush1.bf16.msra.mxu0 %v1896
          %2300 = vmatprep.subr.bf16.mxu0 0
          %2301 = vmatpush1.bf16.msra.mxu0 %v1897
          %2302 = vmatprep.subr.bf16.mxu0 0
          %2303 = vmatpush1.bf16.msra.mxu0 %v1898
          %2304 = vmatprep.subr.bf16.mxu0 0
          %2305 = vmatpush1.bf16.msra.mxu0 %v1899
          %2306 = vmatprep.subr.bf16.mxu0 0
          %2307 = vmatpush1.bf16.msra.mxu0 %v1900
          %2308 = vmatprep.subr.bf16.mxu0 0
          %2309 = vmatpush1.bf16.msra.mxu0 %v1901
          %2310 = vmatprep.subr.bf16.mxu0 0
          %2311 = vmatpush1.bf16.msra.mxu0 %v1902
          %2312 = vmatprep.subr.bf16.mxu0 0
          %2313 = vmatpush1.bf16.msra.mxu0 %v1903
          %2314 = vmatprep.subr.bf16.mxu0 0
          %2315 = vmatpush1.bf16.msra.mxu0 %v1904
          %2316 = vmatprep.subr.bf16.mxu0 0
          %2317 = vmatpush1.bf16.msra.mxu0 %v1905
          %2318 = vmatprep.subr.bf16.mxu0 0
          %2319 = vmatpush1.bf16.msra.mxu0 %v1906
          %2320 = vmatprep.subr.bf16.mxu0 0
          %2321 = vmatpush1.bf16.msra.mxu0 %v1907
          %2322 = vmatprep.subr.bf16.mxu0 0
          %2323 = vmatpush1.bf16.msra.mxu0 %v1908
          %2324 = vmatprep.subr.bf16.mxu0 0
          %2325 = vmatpush1.bf16.msra.mxu0 %v1909
          %2326 = vmatprep.mubr.bf16.mxu0 %v1267
          %2327 = vmatmul.mubr.bf16.gmra.mrb[0].mxu0 %v1266
          %v2328 = vpop.f32.mrb[0].mxu0
          %v2329 = vadd.f32 %v2289, %v2328
          %v2330 = vpop.f32.mrb[0].mxu0
          %v2331 = vpop.f32.mrb[0].mxu0
          %v2332 = vpop.f32.mrb[0].mxu0
          %2333 = vdwg.mxu0
          %2334 = vmatprep.subr.bf16.mxu0 0
          %2335 = vmatpush1.bf16.msra.mxu0 %v1910
          %2336 = vmatprep.subr.bf16.mxu0 0
          %2337 = vmatpush1.bf16.msra.mxu0 %v1911
          %2338 = vmatprep.subr.bf16.mxu0 0
          %2339 = vmatpush1.bf16.msra.mxu0 %v1912
          %2340 = vmatprep.subr.bf16.mxu0 0
          %2341 = vmatpush1.bf16.msra.mxu0 %v1913
          %2342 = vmatprep.subr.bf16.mxu0 0
          %2343 = vmatpush1.bf16.msra.mxu0 %v1914
          %2344 = vmatprep.subr.bf16.mxu0 0
          %2345 = vmatpush1.bf16.msra.mxu0 %v1915
          %2346 = vmatprep.subr.bf16.mxu0 0
          %2347 = vmatpush1.bf16.msra.mxu0 %v1916
          %2348 = vmatprep.subr.bf16.mxu0 0
          %2349 = vmatpush1.bf16.msra.mxu0 %v1917
          %2350 = vmatprep.subr.bf16.mxu0 0
          %2351 = vmatpush1.bf16.msra.mxu0 %v1918
          %2352 = vmatprep.subr.bf16.mxu0 0
          %2353 = vmatpush1.bf16.msra.mxu0 %v1919
          %2354 = vmatprep.subr.bf16.mxu0 0
          %2355 = vmatpush1.bf16.msra.mxu0 %v1920
          %2356 = vmatprep.subr.bf16.mxu0 0
          %2357 = vmatpush1.bf16.msra.mxu0 %v1921
          %2358 = vmatprep.subr.bf16.mxu0 0
          %2359 = vmatpush1.bf16.msra.mxu0 %v1922
          %2360 = vmatprep.subr.bf16.mxu0 0
          %2361 = vmatpush1.bf16.msra.mxu0 %v1923
          %2362 = vmatprep.subr.bf16.mxu0 0
          %2363 = vmatpush1.bf16.msra.mxu0 %v1924
          %2364 = vmatprep.subr.bf16.mxu0 0
          %2365 = vmatpush1.bf16.msra.mxu0 %v1925
          %2366 = vmatprep.mubr.bf16.mxu0 %v1269
          %2367 = vmatmul.mubr.bf16.gmra.mrb[0].mxu0 %v1268
          %v2368 = vpop.f32.mrb[0].mxu0
          %v2369 = vadd.f32 %v2329, %v2368
          %v2370 = vpop.f32.mrb[0].mxu0
          %v2371 = vpop.f32.mrb[0].mxu0
          %v2372 = vpop.f32.mrb[0].mxu0
          %2373 = vdwg.mxu0
          %v2374 = vld [vmem:[%s6] sm:$0x1]
          %v2375 = vld [vmem:[%s6 + $0x1] sm:$0x1]
          %2376 = vadd.xlane.f32.xlu0 %v2369
          %v2377 = vpop.xlane.xlu0 %2376
          %v2378 = vrcp.pop 128.0
          %v2379 = vmul.f32 %v2377, %v2378
          %v2380 = vsub.f32 %v2369, %v2379
          %v2381 = vmul.f32 %v2380, %v2380
          %2382 = vadd.xlane.f32.xlu0 %v2381
          %v2383 = vpop.xlane.xlu0 %2382
          %v2384 = vmul.f32 %v2383, %v2378
          %v2385 = vadd.f32 %v2384, 1e-12
          %v2386 = vrsqrt.pop %v2385
          %v2387 = vmul.f32 %v2380, %v2386
          %v2388 = vlaneseq
          %v2389 = vshrl.u32 %v2388, 7
          %v2390 = vsub.s32 0, %v2389
          %v2391 = vrot.slane %v2374, %v2390
          %v2392 = vmul.f32 %v2387, %v2391
          %v2393 = vlaneseq
          %v2394 = vshrl.u32 %v2393, 7
          %v2395 = vsub.s32 0, %v2394
          %v2396 = vrot.slane %v2375, %v2395
          %v2397 = vadd.f32 %v2392, %v2396
          %v2398 = vld [vmem:[%s949] sm:$0xff]
          %v2399 = vld [vmem:[%s5] sm:$0xff]
          %v2400 = vld [vmem:[%s6 + $0x8] sm:$0x1]
          %v2401 = vlaneseq
          %v2402 = vshrl.u32 %v2401, 7
          %v2403 = vsub.s32 0, %v2402
          %v2404 = vrot.slane %v2400, %v2403
          %vm2405 = vcmask 64512
          %v2407 = vsel %vm2405, %v2398, 0
          %2409 = vmatprep.subr.mxu0 0.0
          %2410 = vmatpush1.msra.mxu0 %v2399
          %2411 = vmatprep.subr.mxu0 0.0
          %2412 = vmatpush1.msra.mxu0 0.0
          %2413 = vmatprep.subr.mxu0 0.0
          %2414 = vmatpush1.msra.mxu0 0.0
          %2415 = vmatprep.subr.mxu0 0.0
          %2416 = vmatpush1.msra.mxu0 0.0
          %2417 = vmatprep.subr.mxu0 0.0
          %2418 = vmatpush1.msra.mxu0 0.0
          %2419 = vmatprep.subr.mxu0 0.0
          %2420 = vmatpush1.msra.mxu0 0.0
          %2421 = vmatprep.subr.mxu0 0.0
          %2422 = vmatpush1.msra.mxu0 0.0
          %2423 = vmatprep.subr.mxu0 0.0
          %2424 = vmatpush1.msra.mxu0 0.0
          %2425 = vmatprep.subr.mxu0 0.0
          %2426 = vmatpush1.msra.mxu0 0.0
          %2427 = vmatprep.subr.mxu0 0.0
          %2428 = vmatpush1.msra.mxu0 0.0
          %2429 = vmatprep.subr.mxu0 0.0
          %2430 = vmatpush1.msra.mxu0 0.0
          %2431 = vmatprep.subr.mxu0 0.0
          %2432 = vmatpush1.msra.mxu0 0.0
          %2433 = vmatprep.subr.mxu0 0.0
          %2434 = vmatpush1.msra.mxu0 0.0
          %2435 = vmatprep.subr.mxu0 0.0
          %2436 = vmatpush1.msra.mxu0 0.0
          %2437 = vmatprep.subr.mxu0 0.0
          %2438 = vmatpush1.msra.mxu0 0.0
          %2439 = vmatprep.subr.mxu0 0.0
          %2440 = vmatpush1.msra.mxu0 0.0
          %2441 = vmatprep.subr.mxu0 0.0
          %2442 = vmatpush1.msra.mxu0 0.0
          %2443 = vmatprep.subr.mxu0 0.0
          %2444 = vmatpush1.msra.mxu0 0.0
          %2445 = vmatprep.subr.mxu0 0.0
          %2446 = vmatpush1.msra.mxu0 0.0
          %2447 = vmatprep.subr.mxu0 0.0
          %2448 = vmatpush1.msra.mxu0 0.0
          %2449 = vmatprep.subr.mxu0 0.0
          %2450 = vmatpush1.msra.mxu0 0.0
          %2451 = vmatprep.subr.mxu0 0.0
          %2452 = vmatpush1.msra.mxu0 0.0
          %2453 = vmatprep.subr.mxu0 0.0
          %2454 = vmatpush1.msra.mxu0 0.0
          %2455 = vmatprep.subr.mxu0 0.0
          %2456 = vmatpush1.msra.mxu0 0.0
          %2457 = vmatprep.subr.mxu0 0.0
          %2458 = vmatpush1.msra.mxu0 0.0
          %2459 = vmatprep.subr.mxu0 0.0
          %2460 = vmatpush1.msra.mxu0 0.0
          %2461 = vmatprep.subr.mxu0 0.0
          %2462 = vmatpush1.msra.mxu0 0.0
          %2463 = vmatprep.subr.mxu0 0.0
          %2464 = vmatpush1.msra.mxu0 0.0
          %2465 = vmatprep.subr.mxu0 0.0
          %2466 = vmatpush1.msra.mxu0 0.0
          %2467 = vmatprep.subr.mxu0 0.0
          %2468 = vmatpush1.msra.mxu0 0.0
          %2469 = vmatprep.subr.mxu0 0.0
          %2470 = vmatpush1.msra.mxu0 0.0
          %2471 = vmatprep.subr.mxu0 0.0
          %2472 = vmatpush1.msra.mxu0 0.0
          %2473 = vmatprep.mubr.f32.mxu0 0.0
          %2474 = vmatmul.mubr.f32.gmra.mrb[0].mxu0 %v2407
          %v2475 = vpop.f32.mrb[0].mxu0
          %v2476 = vadd.f32 %v2404, %v2475
          %v2477 = vpop.f32.mrb[0].mxu0
          %2478 = vdwg.mxu0
          %v2479 = vld [vmem:[%s6 + $0x2] sm:$0x1]
          %v2480 = vld [vmem:[%s6 + $0x3] sm:$0x1]
          %2481 = vadd.xlane.f32.xlu0 %v2476
          %v2482 = vpop.xlane.xlu0 %2481
          %v2483 = vmul.f32 %v2482, %v2378
          %v2484 = vsub.f32 %v2476, %v2483
          %v2485 = vmul.f32 %v2484, %v2484
          %2486 = vadd.xlane.f32.xlu0 %v2485
          %v2487 = vpop.xlane.xlu0 %2486
          %v2488 = vmul.f32 %v2487, %v2378
          %v2489 = vadd.f32 %v2488, 1e-12
          %v2490 = vrsqrt.pop %v2489
          %v2491 = vmul.f32 %v2484, %v2490
          %v2492 = vlaneseq
          %v2493 = vshrl.u32 %v2492, 7
          %v2494 = vsub.s32 0, %v2493
          %v2495 = vrot.slane %v2479, %v2494
          %v2496 = vmul.f32 %v2491, %v2495
          %v2497 = vlaneseq
          %v2498 = vshrl.u32 %v2497, 7
          %v2499 = vsub.s32 0, %v2498
          %v2500 = vrot.slane %v2480, %v2499
          %v2501 = vadd.f32 %v2496, %v2500
          %v2502 = vadd.f32 %v2397, %v2501
          %v2503 = vld [vmem:[%s6 + $0x4] sm:$0x1]
          %v2504 = vlaneseq
          %v2505 = vshrl.u32 %v2504, 7
          %v2506 = vsub.s32 0, %v2505
          %v2507 = vrot.slane %v2503, %v2506
          %v2508 = vadd.f32 %v2502, %v2507
          %v2509 = vld [vmem:[%s6 + $0x5] sm:$0x1]
          %v2510 = vld [vmem:[%s6 + $0x6] sm:$0x1]
          %2511 = vadd.xlane.f32.xlu0 %v2508
          %v2512 = vpop.xlane.xlu0 %2511
          %v2513 = vmul.f32 %v2512, %v2378
          %v2514 = vsub.f32 %v2508, %v2513
          %v2515 = vmul.f32 %v2514, %v2514
          %2516 = vadd.xlane.f32.xlu0 %v2515
          %v2517 = vpop.xlane.xlu0 %2516
          %v2518 = vmul.f32 %v2517, %v2378
          %v2519 = vadd.f32 %v2518, 1e-12
          %v2520 = vrsqrt.pop %v2519
          %v2521 = vmul.f32 %v2514, %v2520
          %v2522 = vlaneseq
          %v2523 = vshrl.u32 %v2522, 7
          %v2524 = vsub.s32 0, %v2523
          %v2525 = vrot.slane %v2509, %v2524
          %v2526 = vmul.f32 %v2521, %v2525
          %v2527 = vlaneseq
          %v2528 = vshrl.u32 %v2527, 7
          %v2529 = vsub.s32 0, %v2528
          %v2530 = vrot.slane %v2510, %v2529
          %v2531 = vadd.f32 %v2526, %v2530
          %2532 = vst [vmem:[#allocation2 + $0x8] sm:$0xff] %v2531
        $region132: #{tpu_custom_call.1} parent=87 // pred_fallthru
          _
        %v2533 = vld [vmem:[#allocation2] sm:$0xff]
        %v2534 = vld [vmem:[#allocation2 + $0x8] sm:$0xff]
        %v2535 = vpack.c.bf16 %v2534, %v2533
        %v2536 = vld [vmem:[%s769] sm:$0x1]
        %v2537 = vsub.f32 1.0, %v2536
        %v2538 = vmul.f32 %v2537, -1e+09
        %v2539 = vld [vmem:[%s791] sm:$0xff]
        %v2540 = vld [vmem:[%s791 + $0x8] sm:$0xf]
        %v2541 = vld [vmem:[%s791 + $0xc] sm:$0xff]
        %v2542 = vld [vmem:[%s791 + $0x14] sm:$0xf]
        %v2543 = vld [vmem:[%s791 + $0x18] sm:$0xff]
        %v2544 = vld [vmem:[%s791 + $0x20] sm:$0xf]
        %v2545 = vld [vmem:[%s791 + $0x24] sm:$0xff]
        %v2546 = vld [vmem:[%s791 + $0x2c] sm:$0xf]
        %v2547 = vld [vmem:[%s791 + $0x30] sm:$0xff]
        %v2548 = vld [vmem:[%s791 + $0x38] sm:$0xf]
        %v2549 = vld [vmem:[%s791 + $0x3c] sm:$0xff]
        %v2550 = vld [vmem:[%s791 + $0x44] sm:$0xf]
        %v2551 = vld [vmem:[%s791 + $0x48] sm:$0xff]
        %v2552 = vld [vmem:[%s791 + $0x50] sm:$0xf]
        %v2553 = vld [vmem:[%s791 + $0x54] sm:$0xff]
        %v2554 = vld [vmem:[%s791 + $0x5c] sm:$0xf]
        %v2555 = vld [vmem:[%s791 + $0x60] sm:$0xff]
        %v2556 = vld [vmem:[%s791 + $0x68] sm:$0xf]
        %v2557 = vld [vmem:[%s791 + $0x6c] sm:$0xff]
        %v2558 = vld [vmem:[%s791 + $0x74] sm:$0xf]
        %v2559 = vld [vmem:[%s791 + $0x78] sm:$0xff]
        %v2560 = vld [vmem:[%s791 + $0x80] sm:$0xf]
        %v2561 = vld [vmem:[%s791 + $0x84] sm:$0xff]
        %v2562 = vld [vmem:[%s791 + $0x8c] sm:$0xf]
        %v2563 = vld [vmem:[%s791 + $0x90] sm:$0xff]
        %v2564 = vld [vmem:[%s791 + $0x98] sm:$0xf]
        %v2565 = vld [vmem:[%s791 + $0x9c] sm:$0xff]
        %v2566 = vld [vmem:[%s791 + $0xa4] sm:$0xf]
        %v2567 = vld [vmem:[%s791 + $0xa8] sm:$0xff]
        %v2568 = vld [vmem:[%s791 + $0xb0] sm:$0xf]
        %v2569 = vld [vmem:[%s791 + $0xb4] sm:$0xff]
        %v2570 = vld [vmem:[%s791 + $0xbc] sm:$0xf]
        %v2571 = vld [vmem:[%s800] sm:$0x7]
        %v2573 = vlaneseq
        %v2574 = vshrl.u32 %v2573, 7
        %v2575 = vsub.s32 0, %v2574
        %v2576 = vrot.slane %v2571, %v2575
        %v2577 = vlaneseq
        %v2578 = vshrl.u32 %v2577, 7
        %v2579 = vsub.s32 1, %v2578
        %v2580 = vrot.slane %v2571, %v2579
        %v2581 = vlaneseq
        %v2582 = vshrl.u32 %v2581, 7
        %v2583 = vsub.s32 2, %v2582
        %v2584 = vrot.slane %v2571, %v2583
        %v2620 = vunpack.c.l.b16 %v2539
        %v2621 = vunpack.c.h.b16 %v2539
        %v2622 = vunpack.c.l.b16 %v2540
        %v2623 = vunpack.c.l.b16 %v2541
        %v2624 = vunpack.c.h.b16 %v2541
        %v2625 = vunpack.c.l.b16 %v2542
        %v2626 = vunpack.c.l.b16 %v2543
        %v2627 = vunpack.c.h.b16 %v2543
        %v2628 = vunpack.c.l.b16 %v2544
        %v2629 = vunpack.c.l.b16 %v2545
        %v2630 = vunpack.c.h.b16 %v2545
        %v2631 = vunpack.c.l.b16 %v2546
        %v2632 = vunpack.c.l.b16 %v2547
        %v2633 = vunpack.c.h.b16 %v2547
        %v2634 = vunpack.c.l.b16 %v2548
        %v2635 = vunpack.c.l.b16 %v2549
        %v2636 = vunpack.c.h.b16 %v2549
        %v2637 = vunpack.c.l.b16 %v2550
        %v2638 = vunpack.c.l.b16 %v2551
        %v2639 = vunpack.c.h.b16 %v2551
        %v2640 = vunpack.c.l.b16 %v2552
        %v2641 = vunpack.c.l.b16 %v2553
        %v2642 = vunpack.c.h.b16 %v2553
        %v2643 = vunpack.c.l.b16 %v2554
        %v2644 = vunpack.c.l.b16 %v2555
        %v2645 = vunpack.c.h.b16 %v2555
        %v2646 = vunpack.c.l.b16 %v2556
        %v2647 = vunpack.c.l.b16 %v2557
        %v2648 = vunpack.c.h.b16 %v2557
        %v2649 = vunpack.c.l.b16 %v2558
        %v2650 = vunpack.c.l.b16 %v2559
        %v2651 = vunpack.c.h.b16 %v2559
        %v2652 = vunpack.c.l.b16 %v2560
        %v2653 = vunpack.c.l.b16 %v2561
        %v2654 = vunpack.c.h.b16 %v2561
        %v2655 = vunpack.c.l.b16 %v2562
        %v2656 = vunpack.c.l.b16 %v2563
        %v2657 = vunpack.c.h.b16 %v2563
        %v2658 = vunpack.c.l.b16 %v2564
        %v2659 = vunpack.c.l.b16 %v2565
        %v2660 = vunpack.c.h.b16 %v2565
        %v2661 = vunpack.c.l.b16 %v2566
        %v2662 = vunpack.c.l.b16 %v2567
        %v2663 = vunpack.c.h.b16 %v2567
        %v2664 = vunpack.c.l.b16 %v2568
        %v2665 = vunpack.c.l.b16 %v2569
        %v2666 = vunpack.c.h.b16 %v2569
        %v2667 = vunpack.c.l.b16 %v2570
        %v2668 = vpack.c.b16 %v2623, %v2620
        %v2669 = vpack.c.b16 %v2624, %v2621
        %v2670 = vpack.c.b16 %v2625, %v2622
        %v2671 = vpack.c.b16 %v2629, %v2626
        %v2672 = vpack.c.b16 %v2630, %v2627
        %v2673 = vpack.c.b16 %v2631, %v2628
        %v2674 = vpack.c.b16 %v2635, %v2632
        %v2675 = vpack.c.b16 %v2636, %v2633
        %v2676 = vpack.c.b16 %v2637, %v2634
        %v2677 = vpack.c.b16 %v2641, %v2638
        %v2678 = vpack.c.b16 %v2642, %v2639
        %v2679 = vpack.c.b16 %v2643, %v2640
        %v2680 = vpack.c.b16 %v2647, %v2644
        %v2681 = vpack.c.b16 %v2648, %v2645
        %v2682 = vpack.c.b16 %v2649, %v2646
        %v2683 = vpack.c.b16 %v2653, %v2650
        %v2684 = vpack.c.b16 %v2654, %v2651
        %v2685 = vpack.c.b16 %v2655, %v2652
        %v2686 = vpack.c.b16 %v2659, %v2656
        %v2687 = vpack.c.b16 %v2660, %v2657
        %v2688 = vpack.c.b16 %v2661, %v2658
        %v2689 = vpack.c.b16 %v2665, %v2662
        %v2690 = vpack.c.b16 %v2666, %v2663
        %v2691 = vpack.c.b16 %v2667, %v2664
        %2716 = vmatprep.subr.bf16.mxu0 %v2669
        %2717 = vmatpush1.bf16.msra.mxu0 %v2668
        %2718 = vmatprep.subr.bf16.mxu0 %v2672
        %2719 = vmatpush1.bf16.msra.mxu0 %v2671
        %2720 = vmatprep.subr.bf16.mxu0 %v2675
        %2721 = vmatpush1.bf16.msra.mxu0 %v2674
        %2722 = vmatprep.subr.bf16.mxu0 %v2678
        %2723 = vmatpush1.bf16.msra.mxu0 %v2677
        %2724 = vmatprep.subr.bf16.mxu0 %v2681
        %2725 = vmatpush1.bf16.msra.mxu0 %v2680
        %2726 = vmatprep.subr.bf16.mxu0 %v2684
        %2727 = vmatpush1.bf16.msra.mxu0 %v2683
        %2728 = vmatprep.subr.bf16.mxu0 %v2687
        %2729 = vmatpush1.bf16.msra.mxu0 %v2686
        %2730 = vmatprep.subr.bf16.mxu0 %v2690
        %2731 = vmatpush1.bf16.msra.mxu0 %v2689
        %2732 = vmatprep.subr.bf16.mxu0 0
        %2733 = vmatpush1.bf16.msra.mxu0 0
        %2734 = vmatprep.subr.bf16.mxu0 0
        %2735 = vmatpush1.bf16.msra.mxu0 0
        %2736 = vmatprep.subr.bf16.mxu0 0
        %2737 = vmatpush1.bf16.msra.mxu0 0
        %2738 = vmatprep.subr.bf16.mxu0 0
        %2739 = vmatpush1.bf16.msra.mxu0 0
        %2740 = vmatprep.subr.bf16.mxu0 0
        %2741 = vmatpush1.bf16.msra.mxu0 0
        %2742 = vmatprep.subr.bf16.mxu0 0
        %2743 = vmatpush1.bf16.msra.mxu0 0
        %2744 = vmatprep.subr.bf16.mxu0 0
        %2745 = vmatpush1.bf16.msra.mxu0 0
        %2746 = vmatprep.subr.bf16.mxu0 0
        %2747 = vmatpush1.bf16.msra.mxu0 0
        %2748 = vmatprep.mubr.bf16.mxu0 0
        %2749 = vmatmul.mubr.bf16.gmra.mrb[0].mxu0 %v2535
        %v2750 = vpop.f32.mrb[0].mxu0
        %v2751 = vadd.f32 %v2576, %v2750
        %v2752 = vpop.f32.mrb[0].mxu0
        %v2753 = vadd.f32 %v2580, %v2752
        %v2754 = vpop.f32.mrb[0].mxu0
        %v2755 = vadd.f32 %v2576, %v2754
        %v2756 = vpop.f32.mrb[0].mxu0
        %v2757 = vadd.f32 %v2580, %v2756
        %2758 = vdwg.mxu0
        %2759 = vmatprep.subr.bf16.mxu0 0
        %2760 = vmatpush1.bf16.msra.mxu0 %v2670
        %2761 = vmatprep.subr.bf16.mxu0 0
        %2762 = vmatpush1.bf16.msra.mxu0 %v2673
        %2763 = vmatprep.subr.bf16.mxu0 0
        %2764 = vmatpush1.bf16.msra.mxu0 %v2676
        %2765 = vmatprep.subr.bf16.mxu0 0
        %2766 = vmatpush1.bf16.msra.mxu0 %v2679
        %2767 = vmatprep.subr.bf16.mxu0 0
        %2768 = vmatpush1.bf16.msra.mxu0 %v2682
        %2769 = vmatprep.subr.bf16.mxu0 0
        %2770 = vmatpush1.bf16.msra.mxu0 %v2685
        %2771 = vmatprep.subr.bf16.mxu0 0
        %2772 = vmatpush1.bf16.msra.mxu0 %v2688
        %2773 = vmatprep.subr.bf16.mxu0 0
        %2774 = vmatpush1.bf16.msra.mxu0 %v2691
        %2775 = vmatprep.subr.bf16.mxu0 0
        %2776 = vmatpush1.bf16.msra.mxu0 0
        %2777 = vmatprep.subr.bf16.mxu0 0
        %2778 = vmatpush1.bf16.msra.mxu0 0
        %2779 = vmatprep.subr.bf16.mxu0 0
        %2780 = vmatpush1.bf16.msra.mxu0 0
        %2781 = vmatprep.subr.bf16.mxu0 0
        %2782 = vmatpush1.bf16.msra.mxu0 0
        %2783 = vmatprep.subr.bf16.mxu0 0
        %2784 = vmatpush1.bf16.msra.mxu0 0
        %2785 = vmatprep.subr.bf16.mxu0 0
        %2786 = vmatpush1.bf16.msra.mxu0 0
        %2787 = vmatprep.subr.bf16.mxu0 0
        %2788 = vmatpush1.bf16.msra.mxu0 0
        %2789 = vmatprep.subr.bf16.mxu0 0
        %2790 = vmatpush1.bf16.msra.mxu0 0
        %2791 = vmatprep.mubr.bf16.mxu0 0
        %2792 = vmatmul.mubr.bf16.gmra.mrb[0].mxu0 %v2535
        %v2793 = vpop.f32.mrb[0].mxu0
        %v2794 = vadd.f32 %v2584, %v2793
        %v2795 = vpop.f32.mrb[0].mxu0
        %v2796 = vpop.f32.mrb[0].mxu0
        %v2797 = vadd.f32 %v2584, %v2796
        %v2798 = vpop.f32.mrb[0].mxu0
        %2799 = vdwg.mxu0
        %v2800 = vpack.c.bf16 %v2755, %v2751
        %v2801 = vpack.c.bf16 %v2757, %v2753
        %v2802 = vpack.c.bf16 %v2797, %v2794
        %vm2803 = vcmask 261120
        %v2805 = vsel %vm2803, %v2800, 0
        %v2808 = vsel %vm2803, %v2801, 0
        %2810 = vmatprep.subr.bf16.mxu0 0
        %2811 = vmatpush1.bf16.xpose.msra.mxu0 %v2808
        %2812 = vmatprep.subr.bf16.mxu0 0
        %2813 = vmatpush1.bf16.xpose.msra.mxu0 0
        %2814 = vmatprep.subr.bf16.mxu0 0
        %2815 = vmatpush1.bf16.xpose.msra.mxu0 0
        %2816 = vmatprep.subr.bf16.mxu0 0
        %2817 = vmatpush1.bf16.xpose.msra.mxu0 0
        %2818 = vmatprep.subr.bf16.mxu0 0
        %2819 = vmatpush1.bf16.xpose.msra.mxu0 0
        %2820 = vmatprep.subr.bf16.mxu0 0
        %2821 = vmatpush1.bf16.xpose.msra.mxu0 0
        %2822 = vmatprep.subr.bf16.mxu0 0
        %2823 = vmatpush1.bf16.xpose.msra.mxu0 0
        %2824 = vmatprep.subr.bf16.mxu0 0
        %2825 = vmatpush1.bf16.xpose.msra.mxu0 0
        %2826 = vmatprep.subr.bf16.mxu0 0
        %2827 = vmatpush1.bf16.xpose.msra.mxu0 0
        %2828 = vmatprep.subr.bf16.mxu0 0
        %2829 = vmatpush1.bf16.xpose.msra.mxu0 0
        %2830 = vmatprep.subr.bf16.mxu0 0
        %2831 = vmatpush1.bf16.xpose.msra.mxu0 0
        %2832 = vmatprep.subr.bf16.mxu0 0
        %2833 = vmatpush1.bf16.xpose.msra.mxu0 0
        %2834 = vmatprep.subr.bf16.mxu0 0
        %2835 = vmatpush1.bf16.xpose.msra.mxu0 0
        %2836 = vmatprep.subr.bf16.mxu0 0
        %2837 = vmatpush1.bf16.xpose.msra.mxu0 0
        %2838 = vmatprep.subr.bf16.mxu0 0
        %2839 = vmatpush1.bf16.xpose.msra.mxu0 0
        %2840 = vmatprep.subr.bf16.mxu0 0
        %2841 = vmatpush1.bf16.xpose.msra.mxu0 0
        %2842 = vmatprep.mubr.bf16.mxu0 0
        %2843 = vmatmul.mubr.bf16.gmra.mrb[0].mxu0 %v2805
        %v2844 = vpop.f32.mrb[0].mxu0
        %v2845 = vadd.f32 0.0, %v2844
        %v2846 = vpop.f32.mrb[0].mxu0
        %v2847 = vpop.f32.mrb[0].mxu0
        %v2848 = vadd.f32 0.0, %v2847
        %v2849 = vpop.f32.mrb[0].mxu0
        %2850 = vdwg.mxu0
        %v2851 = vmul.f32 %v2845, 0.17677669
        %v2852 = vmul.f32 %v2848, 0.17677669
        %v2854 = vlaneseq
        %v2855 = vshrl.u32 %v2854, 7
        %v2856 = vsub.s32 0, %v2855
        %v2857 = vrot.slane %v2538, %v2856
        %v2859 = vadd.f32 %v2851, %v2857
        %v2860 = vadd.f32 %v2852, %v2857
        %vm2861 = vcmask 130048
        %v2862 = vsel %vm2861, %v2859, -inf
        %2863 = vmax.xlane.f32.xlu0 %v2862
        %v2864 = vpop.xlane.xlu0 %2863
        %v2865 = vsel %vm2861, %v2860, -inf
        %2866 = vmax.xlane.f32.xlu0 %v2865
        %v2867 = vpop.xlane.xlu0 %2866
        %v2868 = vsub.f32 %v2859, %v2864
        %v2869 = vsub.f32 %v2860, %v2867
        %v2870 = vmul.f32 %v2868, 1.442695
        %v2871 = vpow.pop %v2870
        %v2872 = vmul.f32 %v2869, 1.442695
        %v2873 = vpow.pop %v2872
        %v2874 = vsel %vm2861, %v2871, 0.0
        %2875 = vadd.xlane.f32.xlu0 %v2874
        %v2876 = vpop.xlane.xlu0 %2875
        %v2877 = vsel %vm2861, %v2873, 0.0
        %2878 = vadd.xlane.f32.xlu0 %v2877
        %v2879 = vpop.xlane.xlu0 %2878
        %v2880 = vrcp.pop %v2876
        %v2881 = vrcp.pop %v2879
        %v2882 = vmul.f32 %v2871, %v2880
        %v2883 = vmul.f32 %v2873, %v2881
        %v2884 = vpack.c.bf16 %v2883, %v2882
        %v2886 = vsel %vm2861, %v2884, 0
        %2888 = vmatprep.subr.bf16.mxu0 0
        %2889 = vmatpush1.bf16.msra.mxu0 %v2802
        %2890 = vmatprep.subr.bf16.mxu0 0
        %2891 = vmatpush1.bf16.msra.mxu0 0
        %2892 = vmatprep.subr.bf16.mxu0 0
        %2893 = vmatpush1.bf16.msra.mxu0 0
        %2894 = vmatprep.subr.bf16.mxu0 0
        %2895 = vmatpush1.bf16.msra.mxu0 0
        %2896 = vmatprep.subr.bf16.mxu0 0
        %2897 = vmatpush1.bf16.msra.mxu0 0
        %2898 = vmatprep.subr.bf16.mxu0 0
        %2899 = vmatpush1.bf16.msra.mxu0 0
        %2900 = vmatprep.subr.bf16.mxu0 0
        %2901 = vmatpush1.bf16.msra.mxu0 0
        %2902 = vmatprep.subr.bf16.mxu0 0
        %2903 = vmatpush1.bf16.msra.mxu0 0
        %2904 = vmatprep.subr.bf16.mxu0 0
        %2905 = vmatpush1.bf16.msra.mxu0 0
        %2906 = vmatprep.subr.bf16.mxu0 0
        %2907 = vmatpush1.bf16.msra.mxu0 0
        %2908 = vmatprep.subr.bf16.mxu0 0
        %2909 = vmatpush1.bf16.msra.mxu0 0
        %2910 = vmatprep.subr.bf16.mxu0 0
        %2911 = vmatpush1.bf16.msra.mxu0 0
        %2912 = vmatprep.subr.bf16.mxu0 0
        %2913 = vmatpush1.bf16.msra.mxu0 0
        %2914 = vmatprep.subr.bf16.mxu0 0
        %2915 = vmatpush1.bf16.msra.mxu0 0
        %2916 = vmatprep.subr.bf16.mxu0 0
        %2917 = vmatpush1.bf16.msra.mxu0 0
        %2918 = vmatprep.subr.bf16.mxu0 0
        %2919 = vmatpush1.bf16.msra.mxu0 0
        %2920 = vmatprep.mubr.bf16.mxu0 0
        %2921 = vmatmul.mubr.bf16.gmra.mrb[0].mxu0 %v2886
        %v2922 = vpop.f32.mrb[0].mxu0
        %v2923 = vadd.f32 0.0, %v2922
        %v2924 = vpop.f32.mrb[0].mxu0
        %v2925 = vpop.f32.mrb[0].mxu0
        %v2926 = vadd.f32 0.0, %v2925
        %v2927 = vpop.f32.mrb[0].mxu0
        %2928 = vdwg.mxu0
        %2930 = vrot.lane.b32.xlu0 %v2800, 96
        %v2931 = vpop.permute.xlu0 %2930
        %2933 = vrot.lane.b32.xlu0 %v2801, 96
        %v2934 = vpop.permute.xlu0 %2933
        %v2936 = vsel %vm2803, %v2931, 0
        %v2939 = vsel %vm2803, %v2934, 0
        %2941 = vmatprep.subr.bf16.mxu0 0
        %2942 = vmatpush1.bf16.xpose.msra.mxu0 %v2939
        %2943 = vmatprep.subr.bf16.mxu0 0
        %2944 = vmatpush1.bf16.xpose.msra.mxu0 0
        %2945 = vmatprep.subr.bf16.mxu0 0
        %2946 = vmatpush1.bf16.xpose.msra.mxu0 0
        %2947 = vmatprep.subr.bf16.mxu0 0
        %2948 = vmatpush1.bf16.xpose.msra.mxu0 0
        %2949 = vmatprep.subr.bf16.mxu0 0
        %2950 = vmatpush1.bf16.xpose.msra.mxu0 0
        %2951 = vmatprep.subr.bf16.mxu0 0
        %2952 = vmatpush1.bf16.xpose.msra.mxu0 0
        %2953 = vmatprep.subr.bf16.mxu0 0
        %2954 = vmatpush1.bf16.xpose.msra.mxu0 0
        %2955 = vmatprep.subr.bf16.mxu0 0
        %2956 = vmatpush1.bf16.xpose.msra.mxu0 0
        %2957 = vmatprep.subr.bf16.mxu0 0
        %2958 = vmatpush1.bf16.xpose.msra.mxu0 0
        %2959 = vmatprep.subr.bf16.mxu0 0
        %2960 = vmatpush1.bf16.xpose.msra.mxu0 0
        %2961 = vmatprep.subr.bf16.mxu0 0
        %2962 = vmatpush1.bf16.xpose.msra.mxu0 0
        %2963 = vmatprep.subr.bf16.mxu0 0
        %2964 = vmatpush1.bf16.xpose.msra.mxu0 0
        %2965 = vmatprep.subr.bf16.mxu0 0
        %2966 = vmatpush1.bf16.xpose.msra.mxu0 0
        %2967 = vmatprep.subr.bf16.mxu0 0
        %2968 = vmatpush1.bf16.xpose.msra.mxu0 0
        %2969 = vmatprep.subr.bf16.mxu0 0
        %2970 = vmatpush1.bf16.xpose.msra.mxu0 0
        %2971 = vmatprep.subr.bf16.mxu0 0
        %2972 = vmatpush1.bf16.xpose.msra.mxu0 0
        %2973 = vmatprep.mubr.bf16.mxu0 0
        %2974 = vmatmul.mubr.bf16.gmra.mrb[0].mxu0 %v2936
        %v2975 = vpop.f32.mrb[0].mxu0
        %v2976 = vadd.f32 0.0, %v2975
        %v2977 = vpop.f32.mrb[0].mxu0
        %v2978 = vpop.f32.mrb[0].mxu0
        %v2979 = vadd.f32 0.0, %v2978
        %v2980 = vpop.f32.mrb[0].mxu0
        %2981 = vdwg.mxu0
        %v2982 = vmul.f32 %v2976, 0.17677669
        %v2983 = vmul.f32 %v2979, 0.17677669
        %v2984 = vadd.f32 %v2982, %v2857
        %v2985 = vadd.f32 %v2983, %v2857
        %v2986 = vsel %vm2861, %v2984, -inf
        %2987 = vmax.xlane.f32.xlu0 %v2986
        %v2988 = vpop.xlane.xlu0 %2987
        %v2989 = vsel %vm2861, %v2985, -inf
        %2990 = vmax.xlane.f32.xlu0 %v2989
        %v2991 = vpop.xlane.xlu0 %2990
        %v2992 = vsub.f32 %v2984, %v2988
        %v2993 = vsub.f32 %v2985, %v2991
        %v2994 = vmul.f32 %v2992, 1.442695
        %v2995 = vpow.pop %v2994
        %v2996 = vmul.f32 %v2993, 1.442695
        %v2997 = vpow.pop %v2996
        %v2998 = vsel %vm2861, %v2995, 0.0
        %2999 = vadd.xlane.f32.xlu0 %v2998
        %v3000 = vpop.xlane.xlu0 %2999
        %v3001 = vsel %vm2861, %v2997, 0.0
        %3002 = vadd.xlane.f32.xlu0 %v3001
        %v3003 = vpop.xlane.xlu0 %3002
        %v3004 = vrcp.pop %v3000
        %v3005 = vrcp.pop %v3003
        %v3006 = vmul.f32 %v2995, %v3004
        %v3007 = vmul.f32 %v2997, %v3005
        %v3008 = vpack.c.bf16 %v3007, %v3006
        %3010 = vrot.lane.b32.xlu0 %v2802, 96
        %v3011 = vpop.permute.xlu0 %3010
        %v3014 = vsel %vm2861, %v3008, 0
        %3016 = vmatprep.subr.bf16.mxu0 0
        %3017 = vmatpush1.bf16.msra.mxu0 %v3011
        %3018 = vmatprep.subr.bf16.mxu0 0
        %3019 = vmatpush1.bf16.msra.mxu0 0
        %3020 = vmatprep.subr.bf16.mxu0 0
        %3021 = vmatpush1.bf16.msra.mxu0 0
        %3022 = vmatprep.subr.bf16.mxu0 0
        %3023 = vmatpush1.bf16.msra.mxu0 0
        %3024 = vmatprep.subr.bf16.mxu0 0
        %3025 = vmatpush1.bf16.msra.mxu0 0
        %3026 = vmatprep.subr.bf16.mxu0 0
        %3027 = vmatpush1.bf16.msra.mxu0 0
        %3028 = vmatprep.subr.bf16.mxu0 0
        %3029 = vmatpush1.bf16.msra.mxu0 0
        %3030 = vmatprep.subr.bf16.mxu0 0
        %3031 = vmatpush1.bf16.msra.mxu0 0
        %3032 = vmatprep.subr.bf16.mxu0 0
        %3033 = vmatpush1.bf16.msra.mxu0 0
        %3034 = vmatprep.subr.bf16.mxu0 0
        %3035 = vmatpush1.bf16.msra.mxu0 0
        %3036 = vmatprep.subr.bf16.mxu0 0
        %3037 = vmatpush1.bf16.msra.mxu0 0
        %3038 = vmatprep.subr.bf16.mxu0 0
        %3039 = vmatpush1.bf16.msra.mxu0 0
        %3040 = vmatprep.subr.bf16.mxu0 0
        %3041 = vmatpush1.bf16.msra.mxu0 0
        %3042 = vmatprep.subr.bf16.mxu0 0
        %3043 = vmatpush1.bf16.msra.mxu0 0
        %3044 = vmatprep.subr.bf16.mxu0 0
        %3045 = vmatpush1.bf16.msra.mxu0 0
        %3046 = vmatprep.subr.bf16.mxu0 0
        %3047 = vmatpush1.bf16.msra.mxu0 0
        %3048 = vmatprep.mubr.bf16.mxu0 0
        %3049 = vmatmul.mubr.bf16.gmra.mrb[0].mxu0 %v3014
        %v3050 = vpop.f32.mrb[0].mxu0
        %v3051 = vadd.f32 0.0, %v3050
        %v3052 = vpop.f32.mrb[0].mxu0
        %v3053 = vpop.f32.mrb[0].mxu0
        %v3054 = vadd.f32 0.0, %v3053
        %v3055 = vpop.f32.mrb[0].mxu0
        %3056 = vdwg.mxu0
        %3057 = vrot.lane.b32.xlu0 %v2800, 64
        %v3058 = vpop.permute.xlu0 %3057
        %3059 = vrot.lane.b32.xlu0 %v2801, 64
        %v3060 = vpop.permute.xlu0 %3059
        %v3062 = vsel %vm2803, %v3058, 0
        %v3065 = vsel %vm2803, %v3060, 0
        %3067 = vmatprep.subr.bf16.mxu0 0
        %3068 = vmatpush1.bf16.xpose.msra.mxu0 %v3065
        %3069 = vmatprep.subr.bf16.mxu0 0
        %3070 = vmatpush1.bf16.xpose.msra.mxu0 0
        %3071 = vmatprep.subr.bf16.mxu0 0
        %3072 = vmatpush1.bf16.xpose.msra.mxu0 0
        %3073 = vmatprep.subr.bf16.mxu0 0
        %3074 = vmatpush1.bf16.xpose.msra.mxu0 0
        %3075 = vmatprep.subr.bf16.mxu0 0
        %3076 = vmatpush1.bf16.xpose.msra.mxu0 0
        %3077 = vmatprep.subr.bf16.mxu0 0
        %3078 = vmatpush1.bf16.xpose.msra.mxu0 0
        %3079 = vmatprep.subr.bf16.mxu0 0
        %3080 = vmatpush1.bf16.xpose.msra.mxu0 0
        %3081 = vmatprep.subr.bf16.mxu0 0
        %3082 = vmatpush1.bf16.xpose.msra.mxu0 0
        %3083 = vmatprep.subr.bf16.mxu0 0
        %3084 = vmatpush1.bf16.xpose.msra.mxu0 0
        %3085 = vmatprep.subr.bf16.mxu0 0
        %3086 = vmatpush1.bf16.xpose.msra.mxu0 0
        %3087 = vmatprep.subr.bf16.mxu0 0
        %3088 = vmatpush1.bf16.xpose.msra.mxu0 0
        %3089 = vmatprep.subr.bf16.mxu0 0
        %3090 = vmatpush1.bf16.xpose.msra.mxu0 0
        %3091 = vmatprep.subr.bf16.mxu0 0
        %3092 = vmatpush1.bf16.xpose.msra.mxu0 0
        %3093 = vmatprep.subr.bf16.mxu0 0
        %3094 = vmatpush1.bf16.xpose.msra.mxu0 0
        %3095 = vmatprep.subr.bf16.mxu0 0
        %3096 = vmatpush1.bf16.xpose.msra.mxu0 0
        %3097 = vmatprep.subr.bf16.mxu0 0
        %3098 = vmatpush1.bf16.xpose.msra.mxu0 0
        %3099 = vmatprep.mubr.bf16.mxu0 0
        %3100 = vmatmul.mubr.bf16.gmra.mrb[0].mxu0 %v3062
        %v3101 = vpop.f32.mrb[0].mxu0
        %v3102 = vadd.f32 0.0, %v3101
        %v3103 = vpop.f32.mrb[0].mxu0
        %v3104 = vpop.f32.mrb[0].mxu0
        %v3105 = vadd.f32 0.0, %v3104
        %v3106 = vpop.f32.mrb[0].mxu0
        %3107 = vdwg.mxu0
        %v3108 = vmul.f32 %v3102, 0.17677669
        %v3109 = vmul.f32 %v3105, 0.17677669
        %v3110 = vadd.f32 %v3108, %v2857
        %v3111 = vadd.f32 %v3109, %v2857
        %v3112 = vsel %vm2861, %v3110, -inf
        %3113 = vmax.xlane.f32.xlu0 %v3112
        %v3114 = vpop.xlane.xlu0 %3113
        %v3115 = vsel %vm2861, %v3111, -inf
        %3116 = vmax.xlane.f32.xlu0 %v3115
        %v3117 = vpop.xlane.xlu0 %3116
        %v3118 = vsub.f32 %v3110, %v3114
        %v3119 = vsub.f32 %v3111, %v3117
        %v3120 = vmul.f32 %v3118, 1.442695
        %v3121 = vpow.pop %v3120
        %v3122 = vmul.f32 %v3119, 1.442695
        %v3123 = vpow.pop %v3122
        %v3124 = vsel %vm2861, %v3121, 0.0
        %3125 = vadd.xlane.f32.xlu0 %v3124
        %v3126 = vpop.xlane.xlu0 %3125
        %v3127 = vsel %vm2861, %v3123, 0.0
        %3128 = vadd.xlane.f32.xlu0 %v3127
        %v3129 = vpop.xlane.xlu0 %3128
        %v3130 = vrcp.pop %v3126
        %v3131 = vrcp.pop %v3129
        %v3132 = vmul.f32 %v3121, %v3130
        %v3133 = vmul.f32 %v3123, %v3131
        %v3134 = vpack.c.bf16 %v3133, %v3132
        %3135 = vrot.lane.b32.xlu0 %v2802, 64
        %v3136 = vpop.permute.xlu0 %3135
        %v3139 = vsel %vm2861, %v3134, 0
        %3141 = vmatprep.subr.bf16.mxu0 0
        %3142 = vmatpush1.bf16.msra.mxu0 %v3136
        %3143 = vmatprep.subr.bf16.mxu0 0
        %3144 = vmatpush1.bf16.msra.mxu0 0
        %3145 = vmatprep.subr.bf16.mxu0 0
        %3146 = vmatpush1.bf16.msra.mxu0 0
        %3147 = vmatprep.subr.bf16.mxu0 0
        %3148 = vmatpush1.bf16.msra.mxu0 0
        %3149 = vmatprep.subr.bf16.mxu0 0
        %3150 = vmatpush1.bf16.msra.mxu0 0
        %3151 = vmatprep.subr.bf16.mxu0 0
        %3152 = vmatpush1.bf16.msra.mxu0 0
        %3153 = vmatprep.subr.bf16.mxu0 0
        %3154 = vmatpush1.bf16.msra.mxu0 0
        %3155 = vmatprep.subr.bf16.mxu0 0
        %3156 = vmatpush1.bf16.msra.mxu0 0
        %3157 = vmatprep.subr.bf16.mxu0 0
        %3158 = vmatpush1.bf16.msra.mxu0 0
        %3159 = vmatprep.subr.bf16.mxu0 0
        %3160 = vmatpush1.bf16.msra.mxu0 0
        %3161 = vmatprep.subr.bf16.mxu0 0
        %3162 = vmatpush1.bf16.msra.mxu0 0
        %3163 = vmatprep.subr.bf16.mxu0 0
        %3164 = vmatpush1.bf16.msra.mxu0 0
        %3165 = vmatprep.subr.bf16.mxu0 0
        %3166 = vmatpush1.bf16.msra.mxu0 0
        %3167 = vmatprep.subr.bf16.mxu0 0
        %3168 = vmatpush1.bf16.msra.mxu0 0
        %3169 = vmatprep.subr.bf16.mxu0 0
        %3170 = vmatpush1.bf16.msra.mxu0 0
        %3171 = vmatprep.subr.bf16.mxu0 0
        %3172 = vmatpush1.bf16.msra.mxu0 0
        %3173 = vmatprep.mubr.bf16.mxu0 0
        %3174 = vmatmul.mubr.bf16.gmra.mrb[0].mxu0 %v3139
        %v3175 = vpop.f32.mrb[0].mxu0
        %v3176 = vadd.f32 0.0, %v3175
        %v3177 = vpop.f32.mrb[0].mxu0
        %v3178 = vpop.f32.mrb[0].mxu0
        %v3179 = vadd.f32 0.0, %v3178
        %v3180 = vpop.f32.mrb[0].mxu0
        %3181 = vdwg.mxu0
        %3182 = vrot.lane.b32.xlu0 %v2800, 32
        %v3183 = vpop.permute.xlu0 %3182
        %3184 = vrot.lane.b32.xlu0 %v2801, 32
        %v3185 = vpop.permute.xlu0 %3184
        %v3187 = vsel %vm2803, %v3183, 0
        %v3190 = vsel %vm2803, %v3185, 0
        %3192 = vmatprep.subr.bf16.mxu0 0
        %3193 = vmatpush1.bf16.xpose.msra.mxu0 %v3190
        %3194 = vmatprep.subr.bf16.mxu0 0
        %3195 = vmatpush1.bf16.xpose.msra.mxu0 0
        %3196 = vmatprep.subr.bf16.mxu0 0
        %3197 = vmatpush1.bf16.xpose.msra.mxu0 0
        %3198 = vmatprep.subr.bf16.mxu0 0
        %3199 = vmatpush1.bf16.xpose.msra.mxu0 0
        %3200 = vmatprep.subr.bf16.mxu0 0
        %3201 = vmatpush1.bf16.xpose.msra.mxu0 0
        %3202 = vmatprep.subr.bf16.mxu0 0
        %3203 = vmatpush1.bf16.xpose.msra.mxu0 0
        %3204 = vmatprep.subr.bf16.mxu0 0
        %3205 = vmatpush1.bf16.xpose.msra.mxu0 0
        %3206 = vmatprep.subr.bf16.mxu0 0
        %3207 = vmatpush1.bf16.xpose.msra.mxu0 0
        %3208 = vmatprep.subr.bf16.mxu0 0
        %3209 = vmatpush1.bf16.xpose.msra.mxu0 0
        %3210 = vmatprep.subr.bf16.mxu0 0
        %3211 = vmatpush1.bf16.xpose.msra.mxu0 0
        %3212 = vmatprep.subr.bf16.mxu0 0
        %3213 = vmatpush1.bf16.xpose.msra.mxu0 0
        %3214 = vmatprep.subr.bf16.mxu0 0
        %3215 = vmatpush1.bf16.xpose.msra.mxu0 0
        %3216 = vmatprep.subr.bf16.mxu0 0
        %3217 = vmatpush1.bf16.xpose.msra.mxu0 0
        %3218 = vmatprep.subr.bf16.mxu0 0
        %3219 = vmatpush1.bf16.xpose.msra.mxu0 0
        %3220 = vmatprep.subr.bf16.mxu0 0
        %3221 = vmatpush1.bf16.xpose.msra.mxu0 0
        %3222 = vmatprep.subr.bf16.mxu0 0
        %3223 = vmatpush1.bf16.xpose.msra.mxu0 0
        %3224 = vmatprep.mubr.bf16.mxu0 0
        %3225 = vmatmul.mubr.bf16.gmra.mrb[0].mxu0 %v3187
        %v3226 = vpop.f32.mrb[0].mxu0
        %v3227 = vadd.f32 0.0, %v3226
        %v3228 = vpop.f32.mrb[0].mxu0
        %v3229 = vpop.f32.mrb[0].mxu0
        %v3230 = vadd.f32 0.0, %v3229
        %v3231 = vpop.f32.mrb[0].mxu0
        %3232 = vdwg.mxu0
        %v3233 = vmul.f32 %v3227, 0.17677669
        %v3234 = vmul.f32 %v3230, 0.17677669
        %v3235 = vadd.f32 %v3233, %v2857
        %v3236 = vadd.f32 %v3234, %v2857
        %v3237 = vsel %vm2861, %v3235, -inf
        %3238 = vmax.xlane.f32.xlu0 %v3237
        %v3239 = vpop.xlane.xlu0 %3238
        %v3240 = vsel %vm2861, %v3236, -inf
        %3241 = vmax.xlane.f32.xlu0 %v3240
        %v3242 = vpop.xlane.xlu0 %3241
        %v3243 = vsub.f32 %v3235, %v3239
        %v3244 = vsub.f32 %v3236, %v3242
        %v3245 = vmul.f32 %v3243, 1.442695
        %v3246 = vpow.pop %v3245
        %v3247 = vmul.f32 %v3244, 1.442695
        %v3248 = vpow.pop %v3247
        %v3249 = vsel %vm2861, %v3246, 0.0
        %3250 = vadd.xlane.f32.xlu0 %v3249
        %v3251 = vpop.xlane.xlu0 %3250
        %v3252 = vsel %vm2861, %v3248, 0.0
        %3253 = vadd.xlane.f32.xlu0 %v3252
        %v3254 = vpop.xlane.xlu0 %3253
        %v3255 = vrcp.pop %v3251
        %v3256 = vrcp.pop %v3254
        %v3257 = vmul.f32 %v3246, %v3255
        %v3258 = vmul.f32 %v3248, %v3256
        %v3259 = vpack.c.bf16 %v3258, %v3257
        %3260 = vrot.lane.b32.xlu0 %v2802, 32
        %v3261 = vpop.permute.xlu0 %3260
        %v3264 = vsel %vm2861, %v3259, 0
        %3266 = vmatprep.subr.bf16.mxu0 0
        %3267 = vmatpush1.bf16.msra.mxu0 %v3261
        %3268 = vmatprep.subr.bf16.mxu0 0
        %3269 = vmatpush1.bf16.msra.mxu0 0
        %3270 = vmatprep.subr.bf16.mxu0 0
        %3271 = vmatpush1.bf16.msra.mxu0 0
        %3272 = vmatprep.subr.bf16.mxu0 0
        %3273 = vmatpush1.bf16.msra.mxu0 0
        %3274 = vmatprep.subr.bf16.mxu0 0
        %3275 = vmatpush1.bf16.msra.mxu0 0
        %3276 = vmatprep.subr.bf16.mxu0 0
        %3277 = vmatpush1.bf16.msra.mxu0 0
        %3278 = vmatprep.subr.bf16.mxu0 0
        %3279 = vmatpush1.bf16.msra.mxu0 0
        %3280 = vmatprep.subr.bf16.mxu0 0
        %3281 = vmatpush1.bf16.msra.mxu0 0
        %3282 = vmatprep.subr.bf16.mxu0 0
        %3283 = vmatpush1.bf16.msra.mxu0 0
        %3284 = vmatprep.subr.bf16.mxu0 0
        %3285 = vmatpush1.bf16.msra.mxu0 0
        %3286 = vmatprep.subr.bf16.mxu0 0
        %3287 = vmatpush1.bf16.msra.mxu0 0
        %3288 = vmatprep.subr.bf16.mxu0 0
        %3289 = vmatpush1.bf16.msra.mxu0 0
        %3290 = vmatprep.subr.bf16.mxu0 0
        %3291 = vmatpush1.bf16.msra.mxu0 0
        %3292 = vmatprep.subr.bf16.mxu0 0
        %3293 = vmatpush1.bf16.msra.mxu0 0
        %3294 = vmatprep.subr.bf16.mxu0 0
        %3295 = vmatpush1.bf16.msra.mxu0 0
        %3296 = vmatprep.subr.bf16.mxu0 0
        %3297 = vmatpush1.bf16.msra.mxu0 0
        %3298 = vmatprep.mubr.bf16.mxu0 0
        %3299 = vmatmul.mubr.bf16.gmra.mrb[0].mxu0 %v3264
        %v3300 = vpop.f32.mrb[0].mxu0
        %v3301 = vadd.f32 0.0, %v3300
        %v3302 = vpop.f32.mrb[0].mxu0
        %v3303 = vpop.f32.mrb[0].mxu0
        %v3304 = vadd.f32 0.0, %v3303
        %v3305 = vpop.f32.mrb[0].mxu0
        %3306 = vdwg.mxu0
        %3309 = vrot.lane.b32.xlu0 %v3051, 32
        %v3310 = vpop.permute.xlu0 %3309
        %3311 = vrot.lane.b32.xlu0 %v3054, 32
        %v3312 = vpop.permute.xlu0 %3311
        %3317 = vrot.lane.b32.xlu0 %v3176, 64
        %v3318 = vpop.permute.xlu0 %3317
        %3319 = vrot.lane.b32.xlu0 %v3179, 64
        %v3320 = vpop.permute.xlu0 %3319
        %3325 = vrot.lane.b32.xlu0 %v3301, 96
        %v3326 = vpop.permute.xlu0 %3325
        %3327 = vrot.lane.b32.xlu0 %v3304, 96
        %v3328 = vpop.permute.xlu0 %3327
        %v3331 = vsel %vm2803, %v2923, %v3310
        %v3332 = vsel %vm2803, %v2926, %v3312
        %vm3333 = vcmask 523264
        %v3334 = vsel %vm3333, %v3331, %v3318
        %v3335 = vsel %vm3333, %v3332, %v3320
        %vm3336 = vcmask 785408
        %v3337 = vsel %vm3336, %v3334, %v3326
        %v3338 = vsel %vm3336, %v3335, %v3328
        %v3339 = vpack.c.bf16 %v3338, %v3337
        %v3340 = vld [vmem:[%s809] sm:$0xf]
        %v3341 = vld [vmem:[%s809 + $0x4] sm:$0xf]
        %v3342 = vld [vmem:[%s809 + $0x8] sm:$0xf]
        %v3343 = vld [vmem:[%s809 + $0xc] sm:$0xf]
        %v3344 = vld [vmem:[%s809 + $0x10] sm:$0xf]
        %v3345 = vld [vmem:[%s809 + $0x14] sm:$0xf]
        %v3346 = vld [vmem:[%s809 + $0x18] sm:$0xf]
        %v3347 = vld [vmem:[%s809 + $0x1c] sm:$0xf]
        %v3348 = vld [vmem:[%s809 + $0x20] sm:$0xf]
        %v3349 = vld [vmem:[%s809 + $0x24] sm:$0xf]
        %v3350 = vld [vmem:[%s809 + $0x28] sm:$0xf]
        %v3351 = vld [vmem:[%s809 + $0x2c] sm:$0xf]
        %v3352 = vld [vmem:[%s809 + $0x30] sm:$0xf]
        %v3353 = vld [vmem:[%s809 + $0x34] sm:$0xf]
        %v3354 = vld [vmem:[%s809 + $0x38] sm:$0xf]
        %v3355 = vld [vmem:[%s809 + $0x3c] sm:$0xf]
        %v3356 = vld [vmem:[%s953] sm:$0x1]
        %v3357 = vlaneseq
        %v3358 = vshrl.u32 %v3357, 7
        %v3359 = vsub.s32 0, %v3358
        %v3360 = vrot.slane %v3356, %v3359
        %v3377 = vunpack.c.l.b16 %v3340
        %v3378 = vunpack.c.l.b16 %v3341
        %v3379 = vunpack.c.l.b16 %v3342
        %v3380 = vunpack.c.l.b16 %v3343
        %v3381 = vunpack.c.l.b16 %v3344
        %v3382 = vunpack.c.l.b16 %v3345
        %v3383 = vunpack.c.l.b16 %v3346
        %v3384 = vunpack.c.l.b16 %v3347
        %v3385 = vunpack.c.l.b16 %v3348
        %v3386 = vunpack.c.l.b16 %v3349
        %v3387 = vunpack.c.l.b16 %v3350
        %v3388 = vunpack.c.l.b16 %v3351
        %v3389 = vunpack.c.l.b16 %v3352
        %v3390 = vunpack.c.l.b16 %v3353
        %v3391 = vunpack.c.l.b16 %v3354
        %v3392 = vunpack.c.l.b16 %v3355
        %v3393 = vpack.c.b16 %v3378, %v3377
        %v3394 = vpack.c.b16 %v3380, %v3379
        %v3395 = vpack.c.b16 %v3382, %v3381
        %v3396 = vpack.c.b16 %v3384, %v3383
        %v3397 = vpack.c.b16 %v3386, %v3385
        %v3398 = vpack.c.b16 %v3388, %v3387
        %v3399 = vpack.c.b16 %v3390, %v3389
        %v3400 = vpack.c.b16 %v3392, %v3391
        %3409 = vmatprep.subr.bf16.mxu0 0
        %3410 = vmatpush1.bf16.msra.mxu0 %v3393
        %3411 = vmatprep.subr.bf16.mxu0 0
        %3412 = vmatpush1.bf16.msra.mxu0 %v3394
        %3413 = vmatprep.subr.bf16.mxu0 0
        %3414 = vmatpush1.bf16.msra.mxu0 %v3395
        %3415 = vmatprep.subr.bf16.mxu0 0
        %3416 = vmatpush1.bf16.msra.mxu0 %v3396
        %3417 = vmatprep.subr.bf16.mxu0 0
        %3418 = vmatpush1.bf16.msra.mxu0 %v3397
        %3419 = vmatprep.subr.bf16.mxu0 0
        %3420 = vmatpush1.bf16.msra.mxu0 %v3398
        %3421 = vmatprep.subr.bf16.mxu0 0
        %3422 = vmatpush1.bf16.msra.mxu0 %v3399
        %3423 = vmatprep.subr.bf16.mxu0 0
        %3424 = vmatpush1.bf16.msra.mxu0 %v3400
        %3425 = vmatprep.subr.bf16.mxu0 0
        %3426 = vmatpush1.bf16.msra.mxu0 0
        %3427 = vmatprep.subr.bf16.mxu0 0
        %3428 = vmatpush1.bf16.msra.mxu0 0
        %3429 = vmatprep.subr.bf16.mxu0 0
        %3430 = vmatpush1.bf16.msra.mxu0 0
        %3431 = vmatprep.subr.bf16.mxu0 0
        %3432 = vmatpush1.bf16.msra.mxu0 0
        %3433 = vmatprep.subr.bf16.mxu0 0
        %3434 = vmatpush1.bf16.msra.mxu0 0
        %3435 = vmatprep.subr.bf16.mxu0 0
        %3436 = vmatpush1.bf16.msra.mxu0 0
        %3437 = vmatprep.subr.bf16.mxu0 0
        %3438 = vmatpush1.bf16.msra.mxu0 0
        %3439 = vmatprep.subr.bf16.mxu0 0
        %3440 = vmatpush1.bf16.msra.mxu0 0
        %3441 = vmatprep.mubr.bf16.mxu0 0
        %3442 = vmatmul.mubr.bf16.gmra.mrb[0].mxu0 %v3339
        %v3443 = vpop.f32.mrb[0].mxu0
        %v3444 = vadd.f32 %v3360, %v3443
        %v3445 = vpop.f32.mrb[0].mxu0
        %v3446 = vpop.f32.mrb[0].mxu0
        %v3447 = vadd.f32 %v3360, %v3446
        %v3448 = vpop.f32.mrb[0].mxu0
        %3449 = vdwg.mxu0
        %v3450 = vadd.f32 %v3444, %v2533
        %v3451 = vadd.f32 %v3447, %v2534
        %v3452 = vld [vmem:[%s953 + $0x1] sm:$0x1]
        %v3453 = vld [vmem:[%s953 + $0x2] sm:$0x1]
        %3454 = vadd.xlane.f32.xlu0 %v3450
        %v3455 = vpop.xlane.xlu0 %3454
        %3456 = vadd.xlane.f32.xlu0 %v3451
        %v3457 = vpop.xlane.xlu0 %3456
        %v3458 = vrcp.pop 128.0
        %v3459 = vmul.f32 %v3455, %v3458
        %v3460 = vmul.f32 %v3457, %v3458
        %v3461 = vsub.f32 %v3450, %v3459
        %v3462 = vsub.f32 %v3451, %v3460
        %v3463 = vmul.f32 %v3461, %v3461
        %v3464 = vmul.f32 %v3462, %v3462
        %3465 = vadd.xlane.f32.xlu0 %v3463
        %v3466 = vpop.xlane.xlu0 %3465
        %3467 = vadd.xlane.f32.xlu0 %v3464
        %v3468 = vpop.xlane.xlu0 %3467
        %v3469 = vmul.f32 %v3466, %v3458
        %v3470 = vmul.f32 %v3468, %v3458
        %v3471 = vadd.f32 %v3469, 1e-12
        %v3472 = vadd.f32 %v3470, 1e-12
        %v3473 = vrsqrt.pop %v3471
        %v3474 = vrsqrt.pop %v3472
        %v3475 = vmul.f32 %v3461, %v3473
        %v3476 = vmul.f32 %v3462, %v3474
        %v3477 = vlaneseq
        %v3478 = vshrl.u32 %v3477, 7
        %v3479 = vsub.s32 0, %v3478
        %v3480 = vrot.slane %v3452, %v3479
        %v3481 = vmul.f32 %v3475, %v3480
        %v3482 = vmul.f32 %v3476, %v3480
        %v3483 = vlaneseq
        %v3484 = vshrl.u32 %v3483, 7
        %v3485 = vsub.s32 0, %v3484
        %v3486 = vrot.slane %v3453, %v3485
        %v3487 = vadd.f32 %v3481, %v3486
        %v3488 = vadd.f32 %v3482, %v3486
        %v3489 = vpack.c.bf16 %v3488, %v3487
        %v3490 = vld [vmem:[%s818] sm:$0xff]
        %v3491 = vld [vmem:[%s818 + $0x8] sm:$0xff]
        %v3492 = vld [vmem:[%s818 + $0x10] sm:$0xff]
        %v3493 = vld [vmem:[%s818 + $0x18] sm:$0xff]
        %v3494 = vld [vmem:[%s818 + $0x20] sm:$0xff]
        %v3495 = vld [vmem:[%s818 + $0x28] sm:$0xff]
        %v3496 = vld [vmem:[%s818 + $0x30] sm:$0xff]
        %v3497 = vld [vmem:[%s818 + $0x38] sm:$0xff]
        %v3498 = vld [vmem:[%s818 + $0x40] sm:$0xff]
        %v3499 = vld [vmem:[%s818 + $0x48] sm:$0xff]
        %v3500 = vld [vmem:[%s818 + $0x50] sm:$0xff]
        %v3501 = vld [vmem:[%s818 + $0x58] sm:$0xff]
        %v3502 = vld [vmem:[%s818 + $0x60] sm:$0xff]
        %v3503 = vld [vmem:[%s818 + $0x68] sm:$0xff]
        %v3504 = vld [vmem:[%s818 + $0x70] sm:$0xff]
        %v3505 = vld [vmem:[%s818 + $0x78] sm:$0xff]
        %v3506 = vld [vmem:[%s827] sm:$0x3]
        %v3508 = vlaneseq
        %v3509 = vshrl.u32 %v3508, 7
        %v3510 = vsub.s32 0, %v3509
        %v3511 = vrot.slane %v3506, %v3510
        %v3512 = vlaneseq
        %v3513 = vshrl.u32 %v3512, 7
        %v3514 = vsub.s32 1, %v3513
        %v3515 = vrot.slane %v3506, %v3514
        %v3534 = vunpack.c.l.b16 %v3490
        %v3535 = vunpack.c.h.b16 %v3490
        %v3536 = vunpack.c.l.b16 %v3491
        %v3537 = vunpack.c.h.b16 %v3491
        %v3538 = vunpack.c.l.b16 %v3492
        %v3539 = vunpack.c.h.b16 %v3492
        %v3540 = vunpack.c.l.b16 %v3493
        %v3541 = vunpack.c.h.b16 %v3493
        %v3542 = vunpack.c.l.b16 %v3494
        %v3543 = vunpack.c.h.b16 %v3494
        %v3544 = vunpack.c.l.b16 %v3495
        %v3545 = vunpack.c.h.b16 %v3495
        %v3546 = vunpack.c.l.b16 %v3496
        %v3547 = vunpack.c.h.b16 %v3496
        %v3548 = vunpack.c.l.b16 %v3497
        %v3549 = vunpack.c.h.b16 %v3497
        %v3550 = vunpack.c.l.b16 %v3498
        %v3551 = vunpack.c.h.b16 %v3498
        %v3552 = vunpack.c.l.b16 %v3499
        %v3553 = vunpack.c.h.b16 %v3499
        %v3554 = vunpack.c.l.b16 %v3500
        %v3555 = vunpack.c.h.b16 %v3500
        %v3556 = vunpack.c.l.b16 %v3501
        %v3557 = vunpack.c.h.b16 %v3501
        %v3558 = vunpack.c.l.b16 %v3502
        %v3559 = vunpack.c.h.b16 %v3502
        %v3560 = vunpack.c.l.b16 %v3503
        %v3561 = vunpack.c.h.b16 %v3503
        %v3562 = vunpack.c.l.b16 %v3504
        %v3563 = vunpack.c.h.b16 %v3504
        %v3564 = vunpack.c.l.b16 %v3505
        %v3565 = vunpack.c.h.b16 %v3505
        %v3566 = vpack.c.b16 %v3536, %v3534
        %v3567 = vpack.c.b16 %v3537, %v3535
        %v3568 = vpack.c.b16 %v3540, %v3538
        %v3569 = vpack.c.b16 %v3541, %v3539
        %v3570 = vpack.c.b16 %v3544, %v3542
        %v3571 = vpack.c.b16 %v3545, %v3543
        %v3572 = vpack.c.b16 %v3548, %v3546
        %v3573 = vpack.c.b16 %v3549, %v3547
        %v3574 = vpack.c.b16 %v3552, %v3550
        %v3575 = vpack.c.b16 %v3553, %v3551
        %v3576 = vpack.c.b16 %v3556, %v3554
        %v3577 = vpack.c.b16 %v3557, %v3555
        %v3578 = vpack.c.b16 %v3560, %v3558
        %v3579 = vpack.c.b16 %v3561, %v3559
        %v3580 = vpack.c.b16 %v3564, %v3562
        %v3581 = vpack.c.b16 %v3565, %v3563
        %3598 = vmatprep.subr.bf16.mxu0 %v3567
        %3599 = vmatpush1.bf16.msra.mxu0 %v3566
        %3600 = vmatprep.subr.bf16.mxu0 %v3569
        %3601 = vmatpush1.bf16.msra.mxu0 %v3568
        %3602 = vmatprep.subr.bf16.mxu0 %v3571
        %3603 = vmatpush1.bf16.msra.mxu0 %v3570
        %3604 = vmatprep.subr.bf16.mxu0 %v3573
        %3605 = vmatpush1.bf16.msra.mxu0 %v3572
        %3606 = vmatprep.subr.bf16.mxu0 %v3575
        %3607 = vmatpush1.bf16.msra.mxu0 %v3574
        %3608 = vmatprep.subr.bf16.mxu0 %v3577
        %3609 = vmatpush1.bf16.msra.mxu0 %v3576
        %3610 = vmatprep.subr.bf16.mxu0 %v3579
        %3611 = vmatpush1.bf16.msra.mxu0 %v3578
        %3612 = vmatprep.subr.bf16.mxu0 %v3581
        %3613 = vmatpush1.bf16.msra.mxu0 %v3580
        %3614 = vmatprep.subr.bf16.mxu0 0
        %3615 = vmatpush1.bf16.msra.mxu0 0
        %3616 = vmatprep.subr.bf16.mxu0 0
        %3617 = vmatpush1.bf16.msra.mxu0 0
        %3618 = vmatprep.subr.bf16.mxu0 0
        %3619 = vmatpush1.bf16.msra.mxu0 0
        %3620 = vmatprep.subr.bf16.mxu0 0
        %3621 = vmatpush1.bf16.msra.mxu0 0
        %3622 = vmatprep.subr.bf16.mxu0 0
        %3623 = vmatpush1.bf16.msra.mxu0 0
        %3624 = vmatprep.subr.bf16.mxu0 0
        %3625 = vmatpush1.bf16.msra.mxu0 0
        %3626 = vmatprep.subr.bf16.mxu0 0
        %3627 = vmatpush1.bf16.msra.mxu0 0
        %3628 = vmatprep.subr.bf16.mxu0 0
        %3629 = vmatpush1.bf16.msra.mxu0 0
        %3630 = vmatprep.mubr.bf16.mxu0 0
        %3631 = vmatmul.mubr.bf16.gmra.mrb[0].mxu0 %v3489
        %v3632 = vpop.f32.mrb[0].mxu0
        %v3633 = vadd.f32 %v3511, %v3632
        %v3634 = vpop.f32.mrb[0].mxu0
        %v3635 = vadd.f32 %v3515, %v3634
        %v3636 = vpop.f32.mrb[0].mxu0
        %v3637 = vadd.f32 %v3511, %v3636
        %v3638 = vpop.f32.mrb[0].mxu0
        %v3639 = vadd.f32 %v3515, %v3638
        %3640 = vdwg.mxu0
        %v3641 = vmul.f32 %v3633, %v3633
        %v3642 = vmul.f32 %v3635, %v3635
        %v3643 = vmul.f32 %v3637, %v3637
        %v3644 = vmul.f32 %v3639, %v3639
        %v3645 = vmul.f32 %v3633, %v3641
        %v3646 = vmul.f32 %v3635, %v3642
        %v3647 = vmul.f32 %v3637, %v3643
        %v3648 = vmul.f32 %v3639, %v3644
        %v3649 = vmul.f32 %v3645, 0.044715
        %v3650 = vmul.f32 %v3646, 0.044715
        %v3651 = vmul.f32 %v3647, 0.044715
        %v3652 = vmul.f32 %v3648, 0.044715
        %v3653 = vadd.f32 %v3633, %v3649
        %v3654 = vadd.f32 %v3635, %v3650
        %v3655 = vadd.f32 %v3637, %v3651
        %v3656 = vadd.f32 %v3639, %v3652
        %v3657 = vmul.f32 %v3653, 0.7978846
        %v3658 = vmul.f32 %v3654, 0.7978846
        %v3659 = vmul.f32 %v3655, 0.7978846
        %v3660 = vmul.f32 %v3656, 0.7978846
        %v3661 = vtanh.pop %v3657
        %v3662 = vtanh.pop %v3658
        %v3663 = vtanh.pop %v3659
        %v3664 = vtanh.pop %v3660
        %v3665 = vadd.f32 %v3661, 1.0
        %v3666 = vadd.f32 %v3662, 1.0
        %v3667 = vadd.f32 %v3663, 1.0
        %v3668 = vadd.f32 %v3664, 1.0
        %v3669 = vmul.f32 %v3665, 0.5
        %v3670 = vmul.f32 %v3666, 0.5
        %v3671 = vmul.f32 %v3667, 0.5
        %v3672 = vmul.f32 %v3668, 0.5
        %v3673 = vmul.f32 %v3633, %v3669
        %v3674 = vmul.f32 %v3635, %v3670
        %v3675 = vmul.f32 %v3637, %v3671
        %v3676 = vmul.f32 %v3639, %v3672
        %v3677 = vpack.c.bf16 %v3675, %v3673
        %v3678 = vpack.c.bf16 %v3676, %v3674
        %v3679 = vld [vmem:[%s836] sm:$0xf]
        %v3680 = vld [vmem:[%s836 + $0x4] sm:$0xf]
        %v3681 = vld [vmem:[%s836 + $0x8] sm:$0xf]
        %v3682 = vld [vmem:[%s836 + $0xc] sm:$0xf]
        %v3683 = vld [vmem:[%s836 + $0x10] sm:$0xf]
        %v3684 = vld [vmem:[%s836 + $0x14] sm:$0xf]
        %v3685 = vld [vmem:[%s836 + $0x18] sm:$0xf]
        %v3686 = vld [vmem:[%s836 + $0x1c] sm:$0xf]
        %v3687 = vld [vmem:[%s836 + $0x20] sm:$0xf]
        %v3688 = vld [vmem:[%s836 + $0x24] sm:$0xf]
        %v3689 = vld [vmem:[%s836 + $0x28] sm:$0xf]
        %v3690 = vld [vmem:[%s836 + $0x2c] sm:$0xf]
        %v3691 = vld [vmem:[%s836 + $0x30] sm:$0xf]
        %v3692 = vld [vmem:[%s836 + $0x34] sm:$0xf]
        %v3693 = vld [vmem:[%s836 + $0x38] sm:$0xf]
        %v3694 = vld [vmem:[%s836 + $0x3c] sm:$0xf]
        %v3695 = vld [vmem:[%s836 + $0x40] sm:$0xf]
        %v3696 = vld [vmem:[%s836 + $0x44] sm:$0xf]
        %v3697 = vld [vmem:[%s836 + $0x48] sm:$0xf]
        %v3698 = vld [vmem:[%s836 + $0x4c] sm:$0xf]
        %v3699 = vld [vmem:[%s836 + $0x50] sm:$0xf]
        %v3700 = vld [vmem:[%s836 + $0x54] sm:$0xf]
        %v3701 = vld [vmem:[%s836 + $0x58] sm:$0xf]
        %v3702 = vld [vmem:[%s836 + $0x5c] sm:$0xf]
        %v3703 = vld [vmem:[%s836 + $0x60] sm:$0xf]
        %v3704 = vld [vmem:[%s836 + $0x64] sm:$0xf]
        %v3705 = vld [vmem:[%s836 + $0x68] sm:$0xf]
        %v3706 = vld [vmem:[%s836 + $0x6c] sm:$0xf]
        %v3707 = vld [vmem:[%s836 + $0x70] sm:$0xf]
        %v3708 = vld [vmem:[%s836 + $0x74] sm:$0xf]
        %v3709 = vld [vmem:[%s836 + $0x78] sm:$0xf]
        %v3710 = vld [vmem:[%s836 + $0x7c] sm:$0xf]
        %v3711 = vld [vmem:[%s953 + $0x3] sm:$0x1]
        %v3712 = vlaneseq
        %v3713 = vshrl.u32 %v3712, 7
        %v3714 = vsub.s32 0, %v3713
        %v3715 = vrot.slane %v3711, %v3714
        %v3748 = vunpack.c.l.b16 %v3679
        %v3749 = vunpack.c.l.b16 %v3680
        %v3750 = vunpack.c.l.b16 %v3681
        %v3751 = vunpack.c.l.b16 %v3682
        %v3752 = vunpack.c.l.b16 %v3683
        %v3753 = vunpack.c.l.b16 %v3684
        %v3754 = vunpack.c.l.b16 %v3685
        %v3755 = vunpack.c.l.b16 %v3686
        %v3756 = vunpack.c.l.b16 %v3687
        %v3757 = vunpack.c.l.b16 %v3688
        %v3758 = vunpack.c.l.b16 %v3689
        %v3759 = vunpack.c.l.b16 %v3690
        %v3760 = vunpack.c.l.b16 %v3691
        %v3761 = vunpack.c.l.b16 %v3692
        %v3762 = vunpack.c.l.b16 %v3693
        %v3763 = vunpack.c.l.b16 %v3694
        %v3764 = vunpack.c.l.b16 %v3695
        %v3765 = vunpack.c.l.b16 %v3696
        %v3766 = vunpack.c.l.b16 %v3697
        %v3767 = vunpack.c.l.b16 %v3698
        %v3768 = vunpack.c.l.b16 %v3699
        %v3769 = vunpack.c.l.b16 %v3700
        %v3770 = vunpack.c.l.b16 %v3701
        %v3771 = vunpack.c.l.b16 %v3702
        %v3772 = vunpack.c.l.b16 %v3703
        %v3773 = vunpack.c.l.b16 %v3704
        %v3774 = vunpack.c.l.b16 %v3705
        %v3775 = vunpack.c.l.b16 %v3706
        %v3776 = vunpack.c.l.b16 %v3707
        %v3777 = vunpack.c.l.b16 %v3708
        %v3778 = vunpack.c.l.b16 %v3709
        %v3779 = vunpack.c.l.b16 %v3710
        %v3780 = vpack.c.b16 %v3749, %v3748
        %v3781 = vpack.c.b16 %v3751, %v3750
        %v3782 = vpack.c.b16 %v3753, %v3752
        %v3783 = vpack.c.b16 %v3755, %v3754
        %v3784 = vpack.c.b16 %v3757, %v3756
        %v3785 = vpack.c.b16 %v3759, %v3758
        %v3786 = vpack.c.b16 %v3761, %v3760
        %v3787 = vpack.c.b16 %v3763, %v3762
        %v3788 = vpack.c.b16 %v3765, %v3764
        %v3789 = vpack.c.b16 %v3767, %v3766
        %v3790 = vpack.c.b16 %v3769, %v3768
        %v3791 = vpack.c.b16 %v3771, %v3770
        %v3792 = vpack.c.b16 %v3773, %v3772
        %v3793 = vpack.c.b16 %v3775, %v3774
        %v3794 = vpack.c.b16 %v3777, %v3776
        %v3795 = vpack.c.b16 %v3779, %v3778
        %3812 = vmatprep.subr.bf16.mxu0 0
        %3813 = vmatpush1.bf16.msra.mxu0 %v3780
        %3814 = vmatprep.subr.bf16.mxu0 0
        %3815 = vmatpush1.bf16.msra.mxu0 %v3781
        %3816 = vmatprep.subr.bf16.mxu0 0
        %3817 = vmatpush1.bf16.msra.mxu0 %v3782
        %3818 = vmatprep.subr.bf16.mxu0 0
        %3819 = vmatpush1.bf16.msra.mxu0 %v3783
        %3820 = vmatprep.subr.bf16.mxu0 0
        %3821 = vmatpush1.bf16.msra.mxu0 %v3784
        %3822 = vmatprep.subr.bf16.mxu0 0
        %3823 = vmatpush1.bf16.msra.mxu0 %v3785
        %3824 = vmatprep.subr.bf16.mxu0 0
        %3825 = vmatpush1.bf16.msra.mxu0 %v3786
        %3826 = vmatprep.subr.bf16.mxu0 0
        %3827 = vmatpush1.bf16.msra.mxu0 %v3787
        %3828 = vmatprep.subr.bf16.mxu0 0
        %3829 = vmatpush1.bf16.msra.mxu0 %v3788
        %3830 = vmatprep.subr.bf16.mxu0 0
        %3831 = vmatpush1.bf16.msra.mxu0 %v3789
        %3832 = vmatprep.subr.bf16.mxu0 0
        %3833 = vmatpush1.bf16.msra.mxu0 %v3790
        %3834 = vmatprep.subr.bf16.mxu0 0
        %3835 = vmatpush1.bf16.msra.mxu0 %v3791
        %3836 = vmatprep.subr.bf16.mxu0 0
        %3837 = vmatpush1.bf16.msra.mxu0 %v3792
        %3838 = vmatprep.subr.bf16.mxu0 0
        %3839 = vmatpush1.bf16.msra.mxu0 %v3793
        %3840 = vmatprep.subr.bf16.mxu0 0
        %3841 = vmatpush1.bf16.msra.mxu0 %v3794
        %3842 = vmatprep.subr.bf16.mxu0 0
        %3843 = vmatpush1.bf16.msra.mxu0 %v3795
        %3844 = vmatprep.mubr.bf16.mxu0 %v3678
        %3845 = vmatmul.mubr.bf16.gmra.mrb[0].mxu0 %v3677
        %v3846 = vpop.f32.mrb[0].mxu0
        %v3847 = vadd.f32 %v3715, %v3846
        %v3848 = vpop.f32.mrb[0].mxu0
        %v3849 = vpop.f32.mrb[0].mxu0
        %v3850 = vadd.f32 %v3715, %v3849
        %v3851 = vpop.f32.mrb[0].mxu0
        %3852 = vdwg.mxu0
        %v3853 = vadd.f32 %v3847, %v3487
        %v3854 = vadd.f32 %v3850, %v3488
        %v3855 = vld [vmem:[%s953 + $0x4] sm:$0x1]
        %v3856 = vld [vmem:[%s953 + $0x5] sm:$0x1]
        %3857 = vadd.xlane.f32.xlu0 %v3853
        %v3858 = vpop.xlane.xlu0 %3857
        %3859 = vadd.xlane.f32.xlu0 %v3854
        %v3860 = vpop.xlane.xlu0 %3859
        %v3861 = vmul.f32 %v3858, %v3458
        %v3862 = vmul.f32 %v3860, %v3458
        %v3863 = vsub.f32 %v3853, %v3861
        %v3864 = vsub.f32 %v3854, %v3862
        %v3865 = vmul.f32 %v3863, %v3863
        %v3866 = vmul.f32 %v3864, %v3864
        %3867 = vadd.xlane.f32.xlu0 %v3865
        %v3868 = vpop.xlane.xlu0 %3867
        %3869 = vadd.xlane.f32.xlu0 %v3866
        %v3870 = vpop.xlane.xlu0 %3869
        %v3871 = vmul.f32 %v3868, %v3458
        %v3872 = vmul.f32 %v3870, %v3458
        %v3873 = vadd.f32 %v3871, 1e-12
        %v3874 = vadd.f32 %v3872, 1e-12
        %v3875 = vrsqrt.pop %v3873
        %v3876 = vrsqrt.pop %v3874
        %v3877 = vmul.f32 %v3863, %v3875
        %v3878 = vmul.f32 %v3864, %v3876
        %v3879 = vlaneseq
        %v3880 = vshrl.u32 %v3879, 7
        %v3881 = vsub.s32 0, %v3880
        %v3882 = vrot.slane %v3855, %v3881
        %v3883 = vmul.f32 %v3877, %v3882
        %v3884 = vmul.f32 %v3878, %v3882
        %v3885 = vlaneseq
        %v3886 = vshrl.u32 %v3885, 7
        %v3887 = vsub.s32 0, %v3886
        %v3888 = vrot.slane %v3856, %v3887
        %v3889 = vadd.f32 %v3883, %v3888
        %v3890 = vadd.f32 %v3884, %v3888
        %3891 = vst [vmem:[#allocation2] sm:$0xff] %v3889
        %3892 = vst [vmem:[#allocation2 + $0x8] sm:$0xff] %v3890
        %p3893 = scmp.eq.s32.totalorder %s57, 1
        // Predicated region
        $region133: #{tpu_custom_call.1} parent=87 // pred_check
          %p3894 = pneg %p3893
        $region134: #{tpu_custom_call.1} parent=87 // pred_check_branch
          %3896 = sbr.rel (%p3894) target = $region136
        $region135: #{tpu_custom_call.1} parent=87 // pred_region
          %v3897 = vpack.c.bf16 %v3889, %v3889
          %v3898 = vld [vmem:[%s14] sm:$0xf]
          %v3899 = vld [vmem:[%s14 + $0x4] sm:$0xf]
          %v3900 = vld [vmem:[%s14 + $0x8] sm:$0xf]
          %v3901 = vld [vmem:[%s14 + $0xc] sm:$0xf]
          %v3902 = vld [vmem:[%s14 + $0x10] sm:$0xf]
          %v3903 = vld [vmem:[%s14 + $0x14] sm:$0xf]
          %v3904 = vld [vmem:[%s14 + $0x18] sm:$0xf]
          %v3905 = vld [vmem:[%s14 + $0x1c] sm:$0xf]
          %v3906 = vld [vmem:[%s14 + $0x20] sm:$0xf]
          %v3907 = vld [vmem:[%s14 + $0x24] sm:$0xf]
          %v3908 = vld [vmem:[%s14 + $0x28] sm:$0xf]
          %v3909 = vld [vmem:[%s14 + $0x2c] sm:$0xf]
          %v3910 = vld [vmem:[%s14 + $0x30] sm:$0xf]
          %v3911 = vld [vmem:[%s14 + $0x34] sm:$0xf]
          %v3912 = vld [vmem:[%s14 + $0x38] sm:$0xf]
          %v3913 = vld [vmem:[%s14 + $0x3c] sm:$0xf]
          %v3914 = vld [vmem:[%s16] sm:$0x1]
          %v3931 = vunpack.c.l.b16 %v3898
          %v3932 = vunpack.c.l.b16 %v3899
          %v3933 = vunpack.c.l.b16 %v3900
          %v3934 = vunpack.c.l.b16 %v3901
          %v3935 = vunpack.c.l.b16 %v3902
          %v3936 = vunpack.c.l.b16 %v3903
          %v3937 = vunpack.c.l.b16 %v3904
          %v3938 = vunpack.c.l.b16 %v3905
          %v3939 = vunpack.c.l.b16 %v3906
          %v3940 = vunpack.c.l.b16 %v3907
          %v3941 = vunpack.c.l.b16 %v3908
          %v3942 = vunpack.c.l.b16 %v3909
          %v3943 = vunpack.c.l.b16 %v3910
          %v3944 = vunpack.c.l.b16 %v3911
          %v3945 = vunpack.c.l.b16 %v3912
          %v3946 = vunpack.c.l.b16 %v3913
          %v3947 = vpack.c.b16 %v3932, %v3931
          %v3948 = vpack.c.b16 %v3934, %v3933
          %v3949 = vpack.c.b16 %v3936, %v3935
          %v3950 = vpack.c.b16 %v3938, %v3937
          %v3951 = vpack.c.b16 %v3940, %v3939
          %v3952 = vpack.c.b16 %v3942, %v3941
          %v3953 = vpack.c.b16 %v3944, %v3943
          %v3954 = vpack.c.b16 %v3946, %v3945
          %3963 = vmatprep.subr.bf16.mxu0 0
          %3964 = vmatpush1.bf16.msra.mxu0 %v3947
          %3965 = vmatprep.subr.bf16.mxu0 0
          %3966 = vmatpush1.bf16.msra.mxu0 %v3948
          %3967 = vmatprep.subr.bf16.mxu0 0
          %3968 = vmatpush1.bf16.msra.mxu0 %v3949
          %3969 = vmatprep.subr.bf16.mxu0 0
          %3970 = vmatpush1.bf16.msra.mxu0 %v3950
          %3971 = vmatprep.subr.bf16.mxu0 0
          %3972 = vmatpush1.bf16.msra.mxu0 %v3951
          %3973 = vmatprep.subr.bf16.mxu0 0
          %3974 = vmatpush1.bf16.msra.mxu0 %v3952
          %3975 = vmatprep.subr.bf16.mxu0 0
          %3976 = vmatpush1.bf16.msra.mxu0 %v3953
          %3977 = vmatprep.subr.bf16.mxu0 0
          %3978 = vmatpush1.bf16.msra.mxu0 %v3954
          %3979 = vmatprep.subr.bf16.mxu0 0
          %3980 = vmatpush1.bf16.msra.mxu0 0
          %3981 = vmatprep.subr.bf16.mxu0 0
          %3982 = vmatpush1.bf16.msra.mxu0 0
          %3983 = vmatprep.subr.bf16.mxu0 0
          %3984 = vmatpush1.bf16.msra.mxu0 0
          %3985 = vmatprep.subr.bf16.mxu0 0
          %3986 = vmatpush1.bf16.msra.mxu0 0
          %3987 = vmatprep.subr.bf16.mxu0 0
          %3988 = vmatpush1.bf16.msra.mxu0 0
          %3989 = vmatprep.subr.bf16.mxu0 0
          %3990 = vmatpush1.bf16.msra.mxu0 0
          %3991 = vmatprep.subr.bf16.mxu0 0
          %3992 = vmatpush1.bf16.msra.mxu0 0
          %3993 = vmatprep.subr.bf16.mxu0 0
          %3994 = vmatpush1.bf16.msra.mxu0 0
          %3995 = vmatprep.mubr.bf16.mxu0 0
          %3996 = vmatmul.mubr.bf16.gmra.mrb[0].mxu0 %v3897
          %v3997 = vpop.f32.mrb[0].mxu0
          %v3998 = vadd.f32 %v3914, %v3997
          %v3999 = vpop.f32.mrb[0].mxu0
          %v4000 = vpop.f32.mrb[0].mxu0
          %v4001 = vpop.f32.mrb[0].mxu0
          %4002 = vdwg.mxu0
          %v4003 = vtanh.pop %v3998
          %v4004 = vpack.c.bf16 %v4003, %v4003
          %v4005 = vld [vmem:[#allocation18] sm:$0xf]
          %v4006 = vld [vmem:[#allocation18 + $0x4] sm:$0xf]
          %v4007 = vld [vmem:[#allocation18 + $0x8] sm:$0xf]
          %v4008 = vld [vmem:[#allocation18 + $0xc] sm:$0xf]
          %v4009 = vld [vmem:[#allocation18 + $0x10] sm:$0xf]
          %v4010 = vld [vmem:[#allocation18 + $0x14] sm:$0xf]
          %v4011 = vld [vmem:[#allocation18 + $0x18] sm:$0xf]
          %v4012 = vld [vmem:[#allocation18 + $0x1c] sm:$0xf]
          %v4013 = vld [vmem:[#allocation18 + $0x20] sm:$0xf]
          %v4014 = vld [vmem:[#allocation18 + $0x24] sm:$0xf]
          %v4015 = vld [vmem:[#allocation18 + $0x28] sm:$0xf]
          %v4016 = vld [vmem:[#allocation18 + $0x2c] sm:$0xf]
          %v4017 = vld [vmem:[#allocation18 + $0x30] sm:$0xf]
          %v4018 = vld [vmem:[#allocation18 + $0x34] sm:$0xf]
          %v4019 = vld [vmem:[#allocation18 + $0x38] sm:$0xf]
          %v4020 = vld [vmem:[#allocation18 + $0x3c] sm:$0xf]
          %v4021 = vld [vmem:[%s16 + $0x1] sm:$0x1]
          %v4038 = vunpack.c.l.b16 %v4005
          %v4039 = vunpack.c.l.b16 %v4006
          %v4040 = vunpack.c.l.b16 %v4007
          %v4041 = vunpack.c.l.b16 %v4008
          %v4042 = vunpack.c.l.b16 %v4009
          %v4043 = vunpack.c.l.b16 %v4010
          %v4044 = vunpack.c.l.b16 %v4011
          %v4045 = vunpack.c.l.b16 %v4012
          %v4046 = vunpack.c.l.b16 %v4013
          %v4047 = vunpack.c.l.b16 %v4014
          %v4048 = vunpack.c.l.b16 %v4015
          %v4049 = vunpack.c.l.b16 %v4016
          %v4050 = vunpack.c.l.b16 %v4017
          %v4051 = vunpack.c.l.b16 %v4018
          %v4052 = vunpack.c.l.b16 %v4019
          %v4053 = vunpack.c.l.b16 %v4020
          %v4054 = vpack.c.b16 %v4039, %v4038
          %v4055 = vpack.c.b16 %v4041, %v4040
          %v4056 = vpack.c.b16 %v4043, %v4042
          %v4057 = vpack.c.b16 %v4045, %v4044
          %v4058 = vpack.c.b16 %v4047, %v4046
          %v4059 = vpack.c.b16 %v4049, %v4048
          %v4060 = vpack.c.b16 %v4051, %v4050
          %v4061 = vpack.c.b16 %v4053, %v4052
          %4070 = vmatprep.subr.bf16.mxu0 0
          %4071 = vmatpush1.bf16.msra.mxu0 %v4054
          %4072 = vmatprep.subr.bf16.mxu0 0
          %4073 = vmatpush1.bf16.msra.mxu0 %v4055
          %4074 = vmatprep.subr.bf16.mxu0 0
          %4075 = vmatpush1.bf16.msra.mxu0 %v4056
          %4076 = vmatprep.subr.bf16.mxu0 0
          %4077 = vmatpush1.bf16.msra.mxu0 %v4057
          %4078 = vmatprep.subr.bf16.mxu0 0
          %4079 = vmatpush1.bf16.msra.mxu0 %v4058
          %4080 = vmatprep.subr.bf16.mxu0 0
          %4081 = vmatpush1.bf16.msra.mxu0 %v4059
          %4082 = vmatprep.subr.bf16.mxu0 0
          %4083 = vmatpush1.bf16.msra.mxu0 %v4060
          %4084 = vmatprep.subr.bf16.mxu0 0
          %4085 = vmatpush1.bf16.msra.mxu0 %v4061
          %4086 = vmatprep.subr.bf16.mxu0 0
          %4087 = vmatpush1.bf16.msra.mxu0 0
          %4088 = vmatprep.subr.bf16.mxu0 0
          %4089 = vmatpush1.bf16.msra.mxu0 0
          %4090 = vmatprep.subr.bf16.mxu0 0
          %4091 = vmatpush1.bf16.msra.mxu0 0
          %4092 = vmatprep.subr.bf16.mxu0 0
          %4093 = vmatpush1.bf16.msra.mxu0 0
          %4094 = vmatprep.subr.bf16.mxu0 0
          %4095 = vmatpush1.bf16.msra.mxu0 0
          %4096 = vmatprep.subr.bf16.mxu0 0
          %4097 = vmatpush1.bf16.msra.mxu0 0
          %4098 = vmatprep.subr.bf16.mxu0 0
          %4099 = vmatpush1.bf16.msra.mxu0 0
          %4100 = vmatprep.subr.bf16.mxu0 0
          %4101 = vmatpush1.bf16.msra.mxu0 0
          %4102 = vmatprep.mubr.bf16.mxu0 0
          %4103 = vmatmul.mubr.bf16.gmra.mrb[0].mxu0 %v4004
          %v4104 = vpop.f32.mrb[0].mxu0
          %v4105 = vadd.f32 %v4021, %v4104
          %v4106 = vpop.f32.mrb[0].mxu0
          %v4107 = vpop.f32.mrb[0].mxu0
          %v4108 = vpop.f32.mrb[0].mxu0
          %4109 = vdwg.mxu0
          %4110 = vst [vmem:[%s935] sm:$0x1] %v4003
          %4111 = vst [vmem:[%s941] sm:$0x1] %v4105
        $region136: #{tpu_custom_call.1} parent=87 // pred_fallthru
          _
        %s4112 = sand.u32 %s484, 1
        %s4113 = scalar_lea.sflag [#allocation5], %s4112
        %s4114 = sand.u32 %s484, 1
        %s4115 = scalar_lea.vmem [#allocation20], %s4114
        %s4116 = sand.u32 %s510, 1
        %s4117 = scalar_lea.sflag [#allocation22], %s4116
        %s4118 = sand.u32 %s510, 1
        %s4119 = scalar_lea.vmem [#allocation21], %s4118
        // Predicated region
        $region137: #{tpu_custom_call.1} parent=87 // pred_check
          %p4120 = pneg %p494
        $region138: #{tpu_custom_call.1} parent=87 // pred_check_branch
          %4122 = sbr.rel (%p4120) target = $region140
        $region139: #{tpu_custom_call.1} parent=87 // pred_region
          %s4124 = ssub.s32 16, 16
          %4125 = vsyncadd %s4113, %s4124
          %s4126 = smul.addr %s56, 16
          %s4127 = scalar_lea.hbm %s17, %s4126
          %s4129 = sshll.u32 %s4115, 4
          %s4130 = int_to_ptr.vmem [resolvable:$true] %s4129
          %4132 = dma.vmem_to_hbm [thread:$0]  %s4130, 16, %s4127, %s4113
        $region140: #{tpu_custom_call.1} parent=87 // pred_fallthru
          _
        // Predicated region
        $region141: #{tpu_custom_call.1} parent=87 // pred_check
          %p4133 = pneg %p520
        $region142: #{tpu_custom_call.1} parent=87 // pred_check_branch
          %4135 = sbr.rel (%p4133) target = $region144
        $region143: #{tpu_custom_call.1} parent=87 // pred_region
          %s4137 = ssub.s32 16, 16
          %4138 = vsyncadd %s4117, %s4137
          %s4139 = smul.addr %s56, 16
          %s4140 = scalar_lea.hbm %s18, %s4139
          %s4142 = sshll.u32 %s4119, 4
          %s4143 = int_to_ptr.vmem [resolvable:$true] %s4142
          %4145 = dma.vmem_to_hbm [thread:$0]  %s4143, 16, %s4140, %s4117
        $region144: #{tpu_custom_call.1} parent=87 // pred_fallthru
          _
      $region88: #{tpu_custom_call.1} parent=5 // pred_fallthru
        _
      %p4146 = scmp.le.s32.totalorder 2, %s47
      // Predicated region
      $region145: #{tpu_custom_call.1} parent=5 // pred_check
        %p4147 = pneg %p4146
      $region146: #{tpu_custom_call.1} parent=5 // pred_check_branch
        %4149 = sbr.rel (%p4147) target = $region148
      $region147: #{tpu_custom_call.1} parent=5 // pred_region
        %s4150 = ssub.s32 %s47, 2
        // Predicated region
        $region149: #{tpu_custom_call.1} parent=147 // pred_check
          %p4151 = pneg %p500
        $region150: #{tpu_custom_call.1} parent=147 // pred_check_branch
          %4153 = sbr.rel (%p4151) target = $region152
        $region151: #{tpu_custom_call.1} parent=147 // pred_region
          %s4154 = sand.u32 %s485, 1
          %s4155 = scalar_lea.sflag [#allocation5], %s4154
          %s4156 = sand.u32 %s485, 1
          %s4157 = scalar_lea.vmem [#allocation20], %s4156
          %4158 = dma.done %s4155, 16
        $region152: #{tpu_custom_call.1} parent=147 // pred_fallthru
          _
        // Predicated region
        $region153: #{tpu_custom_call.1} parent=147 // pred_check
          %p4159 = pneg %p526
        $region154: #{tpu_custom_call.1} parent=147 // pred_check_branch
          %4161 = sbr.rel (%p4159) target = $region156
        $region155: #{tpu_custom_call.1} parent=147 // pred_region
          %s4162 = sand.u32 %s511, 1
          %s4163 = scalar_lea.sflag [#allocation22], %s4162
          %s4164 = sand.u32 %s511, 1
          %s4165 = scalar_lea.vmem [#allocation21], %s4164
          %4166 = dma.done %s4163, 16
        $region156: #{tpu_custom_call.1} parent=147 // pred_fallthru
          _
      $region148: #{tpu_custom_call.1} parent=5 // pred_fallthru
        _
    $region6: #{tpu_custom_call.1} parent=1 // loop_footer
      %s51 = sadd.s32 1, %s47
    $region7: #{tpu_custom_call.1} parent=1 // loop_footer_branch
      %46 = sbr.rel target = $region3
    $region8: #{tpu_custom_call.1} parent=1 // loop_exit
      _
    %4167 = vsyncpa [#allocation4], 1
    %s4168 = scalar_lea.sflag [#allocation4], 1
    %4169 = vsyncpa %s4168, 1
    %4170 = vsyncpa [#allocation7], 1
    %s4171 = scalar_lea.sflag [#allocation7], 1
    %4172 = vsyncpa %s4171, 1
    %4173 = vsyncpa [#allocation10], 1
    %s4174 = scalar_lea.sflag [#allocation10], 1
    %4175 = vsyncpa %s4174, 1
    %4176 = vsyncpa [#allocation13], 1
    %s4177 = scalar_lea.sflag [#allocation13], 1
    %4178 = vsyncpa %s4177, 1
    %4179 = vsyncpa [#allocation16], 1
    %s4180 = scalar_lea.sflag [#allocation16], 1
    %4181 = vsyncpa %s4180, 1
    %4182 = vsyncpa [#allocation19], 1
    %4183 = vsyncpa [#allocation5], 1
    %s4184 = scalar_lea.sflag [#allocation5], 1
    %4185 = vsyncpa %s4184, 1
    %4186 = vsyncpa [#allocation22], 1
    %s4187 = scalar_lea.sflag [#allocation22], 1
    %4188 = vsyncpa %s4187, 1

</llo_original>
